<compile_context>
chip_gen: v5e
topology: v5e:2x2
jax: 0.10.0
libtpu: 0.0.40
codegen_flags: <defaults>
</compile_context>

<pallas_src>
import jax
import jax.numpy as jnp
from jax import lax
from jax.experimental import pallas as pl
from jax.experimental.pallas import tpu as pltpu

EXPANSION = 4
BN_EPS = 1e-5


def _make_kernel(H, W, Cin, planes, Cout, Hout, Wout, Hpad, Wpad, stride,
                 has_proj, conv2_accumulate):
    f32 = jnp.float32

    def kernel(*refs):
        if has_proj:
            (x_ref, w1_ref, w2_ref, w3_ref, ws_ref,
             b1_ref, b2_ref, b3_ref, bs_ref, o_ref, pad_ref) = refs
        else:
            (x_ref, w1_ref, w2_ref, w3_ref,
             b1_ref, b2_ref, b3_ref, o_ref, pad_ref) = refs

        # ---- conv1 (1x1, BN scale folded into weight) + bias + relu --------
        x3d = x_ref[...]                                   # (H, W, Cin) bf16
        x2d = x3d.reshape(H * W, Cin)
        y1 = jnp.dot(x2d, w1_ref[...], preferred_element_type=f32)
        y1 = jnp.maximum(y1 + b1_ref[...], 0.0)

        # ---- zero ONLY the 1-px halo, then overwrite the interior ----------
        zeros = lambda s: jnp.zeros(s, pad_ref.dtype)
        pad_ref[0:1, :, :] = zeros((1, Wpad, planes))
        pad_ref[H + 1:Hpad, :, :] = zeros((Hpad - H - 1, Wpad, planes))
        pad_ref[1:H + 1, 0:1, :] = zeros((H, 1, planes))
        pad_ref[1:H + 1, W + 1:Wpad, :] = zeros((H, Wpad - W - 1, planes))
        pad_ref[1:H + 1, 1:W + 1, :] = (
            y1.reshape(H, W, planes).astype(pad_ref.dtype))

        # ---- conv2 (3x3, stride, pad=1) -------------------------------------
        if stride == 1:
            def get_tap(di, dj):
                return pad_ref[di:di + Hout, dj:dj + Wout, :]
        else:
            # stride == 2: de-interleave the pad buffer ONCE into the 4
            # (row-phase, col-phase) buffers; all 9 taps become plain slices.
            full = pad_ref[...]                            # (Hpad, Wpad, planes)
            wsplit = full.reshape(Hpad, Wout + 1, 2, planes)
            phase = {}
            for wp in (0, 1):
                wph = wsplit[:, :, wp, :]                  # (Hpad, Wout+1, planes)
                rph = wph.reshape(Hout + 1, 2, Wout + 1, planes)
                for rp in (0, 1):
                    phase[(rp, wp)] = rph[:, rp, :, :]     # (Hout+1, Wout+1, planes)

            def get_tap(di, dj):
                p = phase[(di % 2, dj % 2)]
                return p[di // 2:di // 2 + Hout, dj // 2:dj // 2 + Wout, :]

        if conv2_accumulate:
            # 9 accumulating matmuls (K = planes each); no im2col patch is
            # materialized.  Functional accumulation keeps exactly one live
            # f32 (Hout*Wout, planes) value (compiler places it in VMEM).
            y2 = None
            for di in range(3):
                for dj in range(3):
                    t = di * 3 + dj
                    tap = get_tap(di, dj).reshape(Hout * Wout, planes)
                    part = jnp.dot(tap, w2_ref[t * planes:(t + 1) * planes, :],
                                   preferred_element_type=f32)
                    y2 = part if y2 is None else y2 + part
        else:
            # single wide-K im2col matmul (small planes: fills MXU depth)
            taps = [get_tap(di, dj) for di in range(3) for dj in range(3)]
            patch = jnp.concatenate(taps, axis=-1).reshape(
                Hout * Wout, 9 * planes)
            y2 = jnp.dot(patch, w2_ref[...], preferred_element_type=f32)
        y2 = jnp.maximum(y2 + b2_ref[...], 0.0).astype(jnp.bfloat16)

        # ---- shortcut written into the output accumulator first ------------
        if has_proj:
            if stride == 1:
                xs = x2d
            else:
                t = x3d
                if W < stride * Wout:   # stride does not divide W: zero-pad
                    t = jnp.concatenate(
                        [t, jnp.zeros((H, stride * Wout - W, Cin), t.dtype)], 1)
                if H < stride * Hout:
                    t = jnp.concatenate(
                        [t, jnp.zeros((stride * Hout - H, t.shape[1], Cin),
                                      t.dtype)], 0)
                xs = t.reshape(Hout, stride, Wout, stride, Cin)[:, 0, :, 0, :]
                xs = xs.reshape(Hout * Wout, Cin)
            acc = jnp.dot(xs, ws_ref[...], preferred_element_type=f32)
            acc = acc + bs_ref[...]
        else:
            # identity shortcut: no matmul, just cast
            acc = x2d.astype(f32)

        # ---- conv3 (1x1) fused into the same accumulator, then relu --------
        acc = acc + b3_ref[...]
        acc = acc + jnp.dot(y2, w3_ref[...], preferred_element_type=f32)
        out = jnp.maximum(acc, 0.0)
        o_ref[...] = out.reshape(Hout, Wout, Cout).astype(o_ref.dtype)

    return kernel


def _resident_spec(shape):
    nd = len(shape)
    return pl.BlockSpec(shape, lambda n: (0,) * nd)


def bottleneck_forward_nhwc(x_nhwc, params, stride, conv2_accumulate=None):
    """x_nhwc: (N, H, W, Cin). Returns (N, Hout, Wout, 4*planes) bfloat16."""
    N, H, W, Cin = x_nhwc.shape
    planes = params["w1"].shape[1]
    Cout = params["w3"].shape[1]
    assert stride in (1, 2), "TODO(synk): only ResNet strides 1/2 are supported"
    Hout = (H - 1) // stride + 1
    Wout = (W - 1) // stride + 1
    Hpad = stride * Hout + 2
    Wpad = stride * Wout + 2
    has_proj = "ws" in params
    if not has_proj:
        assert stride == 1 and Cin == Cout, (
            "identity shortcut requires stride==1 and in_planes == 4*planes")
    if conv2_accumulate is None:
        # wide-K im2col only pays when K=planes would badly underfill the MXU
        conv2_accumulate = planes >= 128

    x = x_nhwc.astype(jnp.bfloat16)  # halve HBM traffic; MXU wants bf16 anyway

    weight_args = [params["w1"], params["w2"], params["w3"]]
    bias_args = [params["b1"], params["b2"], params["b3"]]
    if has_proj:
        weight_args.append(params["ws"])
        bias_args.append(params["bs"])
    args = [x] + weight_args + bias_args

    in_specs = ([pl.BlockSpec((None, H, W, Cin), lambda n: (n, 0, 0, 0))]
                + [_resident_spec(a.shape) for a in weight_args + bias_args])
    out_specs = pl.BlockSpec((None, Hout, Wout, Cout), lambda n: (n, 0, 0, 0))

    kernel = _make_kernel(H, W, Cin, planes, Cout, Hout, Wout, Hpad, Wpad,
                          stride, has_proj, conv2_accumulate)

    # ---- explicit VMEM budget (blocks are double-buffered by BlockSpec) ----
    resident = sum(int(a.size) * a.dtype.itemsize
                   for a in weight_args + bias_args)
    x_block = H * W * Cin * 2
    o_block = Hout * Wout * Cout * 2
    pad_bytes = Hpad * Wpad * planes * 2
    f32_temps = Hout * Wout * (planes + Cout) * 4 * 2
    patch = 0 if conv2_accumulate else Hout * Wout * 9 * planes * 2
    est = 2 * (x_block + o_block) + resident + pad_bytes + f32_temps + patch
    vmem_limit = int(min(max(2 * est, 32 * 2 ** 20), 56 * 2 ** 20))

    return pl.pallas_call(
        kernel,
        out_shape=jax.ShapeDtypeStruct((N, Hout, Wout, Cout), jnp.bfloat16),
        grid=(N,),
        in_specs=in_specs,
        out_specs=out_specs,
        scratch_shapes=[pltpu.VMEM((Hpad, Wpad, planes), jnp.bfloat16)],
        compiler_params=pltpu.CompilerParams(
            dimension_semantics=("parallel",),
            vmem_limit_bytes=vmem_limit),
    )(*args)


def bottleneck_forward(x_nchw, params, stride, conv2_accumulate=None):
    """PyTorch-layout (NCHW) adapter. For a full network keep activations NHWC
    end-to-end and call bottleneck_forward_nhwc directly (avoids the two
    full-tensor HBM transposes below)."""
    x = jnp.transpose(x_nchw, (0, 2, 3, 1))
    out = bottleneck_forward_nhwc(x, params, stride,
                                  conv2_accumulate=conv2_accumulate)
    return jnp.transpose(out, (0, 3, 1, 2))


def _fold_bn(key, c):
    """Eval-mode BatchNorm folded to per-channel (scale, bias)."""
    k1, k2, k3, k4 = jax.random.split(key, 4)
    gamma = 1.0 + 0.1 * jax.random.normal(k1, (c,), jnp.float32)
    beta = 0.1 * jax.random.normal(k2, (c,), jnp.float32)
    mean = 0.1 * jax.random.normal(k3, (c,), jnp.float32)
    var = 1.0 + 0.5 * jax.random.uniform(k4, (c,), jnp.float32)
    scale = gamma / jnp.sqrt(var + BN_EPS)
    bias = beta - mean * scale
    return scale, bias


def init_params(key, in_planes, planes, stride):
    """Kernel-ready params: BN scales folded into bf16 conv weights, f32 (1,C)
    biases; the 3x3 conv is stored as an im2col matrix (9*planes, planes)."""
    cout = EXPANSION * planes
    ks = jax.random.split(key, 8)
    w1 = 0.1 * jax.random.normal(ks[0], (in_planes, planes), jnp.float32)
    w2 = 0.1 * jax.random.normal(ks[1], (3, 3, planes, planes), jnp.float32)
    w3 = 0.1 * jax.random.normal(ks[2], (planes, cout), jnp.float32)
    s1, b1 = _fold_bn(ks[3], planes)
    s2, b2 = _fold_bn(ks[4], planes)
    s3, b3 = _fold_bn(ks[5], cout)

    p = dict(
        w1=(w1 * s1[None, :]).astype(jnp.bfloat16),
        w2=(w2 * s2[None, None, None, :]).reshape(
            9 * planes, planes).astype(jnp.bfloat16),
        w3=(w3 * s3[None, :]).astype(jnp.bfloat16),
        b1=b1.reshape(1, planes),
        b2=b2.reshape(1, planes),
        b3=b3.reshape(1, cout),
    )
    if stride != 1 or in_planes != cout:
        ws = 0.1 * jax.random.normal(ks[6], (in_planes, cout), jnp.float32)
        ss, bs = _fold_bn(ks[7], cout)
        p["ws"] = (ws * ss[None, :]).astype(jnp.bfloat16)
        p["bs"] = bs.reshape(1, cout)
    return p


def ref_forward(x_nchw, p, stride):
    """Pure-JAX reference (lax.conv) mirroring the kernel's numerics (bf16
    matmul inputs, f32 accumulation, bf16 output)."""
    f32 = jnp.float32
    rnd = lambda a: a.astype(jnp.bfloat16).astype(f32)
    x = rnd(jnp.transpose(x_nchw, (0, 2, 3, 1)))
    dn = ("NHWC", "HWIO", "NHWC")
    hi = lax.Precision.HIGHEST

    def conv(inp, w, s, pad):
        return lax.conv_general_dilated(inp, w, (s, s), pad,
                                        dimension_numbers=dn, precision=hi)

    planes = p["b1"].shape[1]
    w1 = p["w1"].astype(f32)[None, None]
    w2 = p["w2"].astype(f32).reshape(3, 3, planes, planes)
    w3 = p["w3"].astype(f32)[None, None]

    o = jnp.maximum(conv(x, w1, 1, "VALID") + p["b1"], 0.0)
    o = rnd(o)
    o = jnp.maximum(conv(o, w2, stride, ((1, 1), (1, 1))) + p["b2"], 0.0)
    o = rnd(o)
    o = conv(o, w3, 1, "VALID") + p["b3"]
    if "ws" in p:
        sc = conv(x, p["ws"].astype(f32)[None, None], stride, "VALID") + p["bs"]
    else:
        sc = x
    o = jnp.maximum(o + sc, 0.0)
    o = o.astype(jnp.bfloat16).astype(f32)   # kernel output is bf16
    return jnp.transpose(o, (0, 3, 1, 2))


if __name__ == "__main__":
    key = jax.random.PRNGKey(0)
    N, H, W = 2, 16, 16
    # (in_planes, planes, stride, conv2_accumulate override)
    configs = [
        (32, 8, 1, None),   # identity shortcut, im2col conv2 path
        (16, 8, 1, True),   # projection shortcut, accumulating-dots conv2 path
        (16, 8, 2, None),   # stride-2 projection, phase-split taps + im2col
        (16, 8, 2, True),   # stride-2 projection, phase-split + accumulating dots
    ]
    for idx, (in_planes, planes, stride, acc_path) in enumerate(configs):
        kx, kp = jax.random.split(jax.random.fold_in(key, idx))
        x = jax.random.normal(kx, (N, in_planes, H, W), jnp.float32)  # NCHW
        params = init_params(kp, in_planes, planes, stride)

        out = jax.block_until_ready(
            bottleneck_forward(x, params, stride, conv2_accumulate=acc_path))

        Hout = (H - 1) // stride + 1
        Wout = (W - 1) // stride + 1
        assert out.shape == (N, EXPANSION * planes, Hout, Wout), out.shape
        assert out.dtype == jnp.bfloat16

        ref = ref_forward(x, params, stride)
        out_f = out.astype(jnp.float32)
        err = jnp.abs(out_f - ref)
        tol = 1e-2 + 2e-2 * jnp.abs(ref)   # bf16-output ulp + accumulation order
        assert bool(jnp.all(err <= tol)), (
            f"config {idx}: max_err={float(jnp.max(err))}")

    print("KERNEL_OK")
</pallas_src>

<mosaic_0001>
module attributes {stable_mosaic.version = 11 : i64} {
  func.func @kernel(%arg0: i32, %arg1: memref<1x16x16x32xbf16, #tpu.memory_space<vmem>>, %arg2: memref<32x8xbf16, #tpu.memory_space<vmem>>, %arg3: memref<72x8xbf16, #tpu.memory_space<vmem>>, %arg4: memref<8x32xbf16, #tpu.memory_space<vmem>>, %arg5: memref<1x8xf32, #tpu.memory_space<vmem>>, %arg6: memref<1x8xf32, #tpu.memory_space<vmem>>, %arg7: memref<1x32xf32, #tpu.memory_space<vmem>>, %arg8: memref<1x16x16x32xbf16, #tpu.memory_space<vmem>>, %arg9: memref<18x18x8xbf16, #tpu.memory_space<vmem>>) attributes {dimension_semantics = [#tpu.dimension_semantics<parallel>], iteration_bounds = array<i64: 2>, scalar_prefetch = 0 : i64, scratch_operands = 1 : i64, tpu.core_type = #tpu.core_type<tc>, window_params = [{transform_indices = @transform_0, window_bounds = array<i64: 1, 16, 16, 32>}, {pipeline_mode = #tpu.pipeline_mode<synchronous>, transform_indices = @transform_1, window_bounds = array<i64: 32, 8>}, {pipeline_mode = #tpu.pipeline_mode<synchronous>, transform_indices = @transform_2, window_bounds = array<i64: 72, 8>}, {pipeline_mode = #tpu.pipeline_mode<synchronous>, transform_indices = @transform_3, window_bounds = array<i64: 8, 32>}, {pipeline_mode = #tpu.pipeline_mode<synchronous>, transform_indices = @transform_4, window_bounds = array<i64: 1, 8>}, {pipeline_mode = #tpu.pipeline_mode<synchronous>, transform_indices = @transform_5, window_bounds = array<i64: 1, 8>}, {pipeline_mode = #tpu.pipeline_mode<synchronous>, transform_indices = @transform_6, window_bounds = array<i64: 1, 32>}, {transform_indices = @transform_7, window_bounds = array<i64: 1, 16, 16, 32>}]} {
    %c0 = arith.constant 0 : index
    %c0_0 = arith.constant 0 : index
    %c0_1 = arith.constant 0 : index
    %c0_2 = arith.constant 0 : index
    %0 = vector.load %arg1[%c0, %c0_0, %c0_1, %c0_2] : memref<1x16x16x32xbf16, #tpu.memory_space<vmem>>, vector<1x16x16x32xbf16>
    %1 = vector.shape_cast %0 : vector<1x16x16x32xbf16> to vector<16x16x32xbf16>
    %2 = vector.shape_cast %1 : vector<16x16x32xbf16> to vector<256x32xbf16>
    %c0_3 = arith.constant 0 : index
    %c0_4 = arith.constant 0 : index
    %3 = vector.load %arg2[%c0_3, %c0_4] : memref<32x8xbf16, #tpu.memory_space<vmem>>, vector<32x8xbf16>
    %cst = arith.constant dense<0.000000e+00> : vector<256x8xf32>
    %4 = tpu.matmul %2, %3, %cst {dimension_numbers = #tpu.dot_dimension_numbers<[1], [0], [0], [1], [0, 0, 1, 1], [], []>} : vector<256x32xbf16>, vector<32x8xbf16>, vector<256x8xf32> -> vector<256x8xf32>
    %c0_5 = arith.constant 0 : index
    %c0_6 = arith.constant 0 : index
    %5 = vector.load %arg5[%c0_5, %c0_6] : memref<1x8xf32, #tpu.memory_space<vmem>>, vector<1x8xf32>
    %6 = vector.broadcast %5 : vector<1x8xf32> to vector<256x8xf32>
    %7 = arith.addf %4, %6 : vector<256x8xf32>
    %cst_7 = arith.constant 0.000000e+00 : f32
    %8 = vector.broadcast %cst_7 : f32 to vector<256x8xf32>
    %9 = arith.maximumf %7, %8 : vector<256x8xf32>
    %cst_8 = arith.constant 0.000000e+00 : bf16
    %10 = vector.broadcast %cst_8 : bf16 to vector<1x18x8xbf16>
    %c0_9 = arith.constant 0 : index
    %c0_10 = arith.constant 0 : index
    %c0_11 = arith.constant 0 : index
    %11 = vector.load %arg9[%c0_9, %c0_10, %c0_11] : memref<18x18x8xbf16, #tpu.memory_space<vmem>>, vector<1x18x8xbf16>
    tpu.vector_store %arg9[%c0_9, %c0_10, %c0_11], %10 {strides = array<i32>} : memref<18x18x8xbf16, #tpu.memory_space<vmem>>, vector<1x18x8xbf16>,
    %cst_12 = arith.constant 0.000000e+00 : bf16
    %12 = vector.broadcast %cst_12 : bf16 to vector<1x18x8xbf16>
    %c17 = arith.constant 17 : index
    %c0_13 = arith.constant 0 : index
    %c0_14 = arith.constant 0 : index
    %13 = vector.load %arg9[%c17, %c0_13, %c0_14] : memref<18x18x8xbf16, #tpu.memory_space<vmem>>, vector<1x18x8xbf16>
    tpu.vector_store %arg9[%c17, %c0_13, %c0_14], %12 {strides = array<i32>} : memref<18x18x8xbf16, #tpu.memory_space<vmem>>, vector<1x18x8xbf16>,
    %cst_15 = arith.constant 0.000000e+00 : bf16
    %14 = vector.broadcast %cst_15 : bf16 to vector<16x1x8xbf16>
    %c1 = arith.constant 1 : index
    %c0_16 = arith.constant 0 : index
    %c0_17 = arith.constant 0 : index
    %15 = vector.load %arg9[%c1, %c0_16, %c0_17] : memref<18x18x8xbf16, #tpu.memory_space<vmem>>, vector<16x1x8xbf16>
    tpu.vector_store %arg9[%c1, %c0_16, %c0_17], %14 {strides = array<i32>} : memref<18x18x8xbf16, #tpu.memory_space<vmem>>, vector<16x1x8xbf16>,
    %cst_18 = arith.constant 0.000000e+00 : bf16
    %16 = vector.broadcast %cst_18 : bf16 to vector<16x1x8xbf16>
    %c1_19 = arith.constant 1 : index
    %c17_20 = arith.constant 17 : index
    %c0_21 = arith.constant 0 : index
    %17 = vector.load %arg9[%c1_19, %c17_20, %c0_21] : memref<18x18x8xbf16, #tpu.memory_space<vmem>>, vector<16x1x8xbf16>
    tpu.vector_store %arg9[%c1_19, %c17_20, %c0_21], %16 {strides = array<i32>} : memref<18x18x8xbf16, #tpu.memory_space<vmem>>, vector<16x1x8xbf16>,
    %18 = vector.shape_cast %9 : vector<256x8xf32> to vector<16x16x8xf32>
    %19 = arith.truncf %18 : vector<16x16x8xf32> to vector<16x16x8xbf16>
    %c1_22 = arith.constant 1 : index
    %c1_23 = arith.constant 1 : index
    %c0_24 = arith.constant 0 : index
    %20 = vector.load %arg9[%c1_22, %c1_23, %c0_24] : memref<18x18x8xbf16, #tpu.memory_space<vmem>>, vector<16x16x8xbf16>
    tpu.vector_store %arg9[%c1_22, %c1_23, %c0_24], %19 {strides = array<i32>} : memref<18x18x8xbf16, #tpu.memory_space<vmem>>, vector<16x16x8xbf16>,
    %c0_25 = arith.constant 0 : index
    %c0_26 = arith.constant 0 : index
    %c0_27 = arith.constant 0 : index
    %21 = vector.load %arg9[%c0_25, %c0_26, %c0_27] : memref<18x18x8xbf16, #tpu.memory_space<vmem>>, vector<16x16x8xbf16>
    %c0_28 = arith.constant 0 : index
    %c1_29 = arith.constant 1 : index
    %c0_30 = arith.constant 0 : index
    %22 = vector.load %arg9[%c0_28, %c1_29, %c0_30] : memref<18x18x8xbf16, #tpu.memory_space<vmem>>, vector<16x16x8xbf16>
    %c0_31 = arith.constant 0 : index
    %c2 = arith.constant 2 : index
    %c0_32 = arith.constant 0 : index
    %23 = vector.load %arg9[%c0_31, %c2, %c0_32] : memref<18x18x8xbf16, #tpu.memory_space<vmem>>, vector<16x16x8xbf16>
    %c1_33 = arith.constant 1 : index
    %c0_34 = arith.constant 0 : index
    %c0_35 = arith.constant 0 : index
    %24 = vector.load %arg9[%c1_33, %c0_34, %c0_35] : memref<18x18x8xbf16, #tpu.memory_space<vmem>>, vector<16x16x8xbf16>
    %c1_36 = arith.constant 1 : index
    %c1_37 = arith.constant 1 : index
    %c0_38 = arith.constant 0 : index
    %25 = vector.load %arg9[%c1_36, %c1_37, %c0_38] : memref<18x18x8xbf16, #tpu.memory_space<vmem>>, vector<16x16x8xbf16>
    %c1_39 = arith.constant 1 : index
    %c2_40 = arith.constant 2 : index
    %c0_41 = arith.constant 0 : index
    %26 = vector.load %arg9[%c1_39, %c2_40, %c0_41] : memref<18x18x8xbf16, #tpu.memory_space<vmem>>, vector<16x16x8xbf16>
    %c2_42 = arith.constant 2 : index
    %c0_43 = arith.constant 0 : index
    %c0_44 = arith.constant 0 : index
    %27 = vector.load %arg9[%c2_42, %c0_43, %c0_44] : memref<18x18x8xbf16, #tpu.memory_space<vmem>>, vector<16x16x8xbf16>
    %c2_45 = arith.constant 2 : index
    %c1_46 = arith.constant 1 : index
    %c0_47 = arith.constant 0 : index
    %28 = vector.load %arg9[%c2_45, %c1_46, %c0_47] : memref<18x18x8xbf16, #tpu.memory_space<vmem>>, vector<16x16x8xbf16>
    %c2_48 = arith.constant 2 : index
    %c2_49 = arith.constant 2 : index
    %c0_50 = arith.constant 0 : index
    %29 = vector.load %arg9[%c2_48, %c2_49, %c0_50] : memref<18x18x8xbf16, #tpu.memory_space<vmem>>, vector<16x16x8xbf16>
    %30 = tpu.concatenate %21, %22, %23, %24, %25, %26, %27, %28, %29 in 2 : vector<16x16x8xbf16>, vector<16x16x8xbf16>, vector<16x16x8xbf16>, vector<16x16x8xbf16>, vector<16x16x8xbf16>, vector<16x16x8xbf16>, vector<16x16x8xbf16>, vector<16x16x8xbf16>, vector<16x16x8xbf16> -> vector<16x16x72xbf16>
    %31 = vector.shape_cast %30 : vector<16x16x72xbf16> to vector<256x72xbf16>
    %c0_51 = arith.constant 0 : index
    %c0_52 = arith.constant 0 : index
    %32 = vector.load %arg3[%c0_51, %c0_52] : memref<72x8xbf16, #tpu.memory_space<vmem>>, vector<72x8xbf16>
    %cst_53 = arith.constant dense<0.000000e+00> : vector<256x8xf32>
    %33 = tpu.matmul %31, %32, %cst_53 {dimension_numbers = #tpu.dot_dimension_numbers<[1], [0], [0], [1], [0, 0, 1, 1], [], []>} : vector<256x72xbf16>, vector<72x8xbf16>, vector<256x8xf32> -> vector<256x8xf32>
    %c0_54 = arith.constant 0 : index
    %c0_55 = arith.constant 0 : index
    %34 = vector.load %arg6[%c0_54, %c0_55] : memref<1x8xf32, #tpu.memory_space<vmem>>, vector<1x8xf32>
    %35 = vector.broadcast %34 : vector<1x8xf32> to vector<256x8xf32>
    %36 = arith.addf %33, %35 : vector<256x8xf32>
    %cst_56 = arith.constant 0.000000e+00 : f32
    %37 = vector.broadcast %cst_56 : f32 to vector<256x8xf32>
    %38 = arith.maximumf %36, %37 : vector<256x8xf32>
    %39 = arith.truncf %38 : vector<256x8xf32> to vector<256x8xbf16>
    %40 = arith.extf %2 : vector<256x32xbf16> to vector<256x32xf32>
    %c0_57 = arith.constant 0 : index
    %c0_58 = arith.constant 0 : index
    %41 = vector.load %arg7[%c0_57, %c0_58] : memref<1x32xf32, #tpu.memory_space<vmem>>, vector<1x32xf32>
    %42 = vector.broadcast %41 : vector<1x32xf32> to vector<256x32xf32>
    %43 = arith.addf %40, %42 : vector<256x32xf32>
    %c0_59 = arith.constant 0 : index
    %c0_60 = arith.constant 0 : index
    %44 = vector.load %arg4[%c0_59, %c0_60] : memref<8x32xbf16, #tpu.memory_space<vmem>>, vector<8x32xbf16>
    %cst_61 = arith.constant dense<0.000000e+00> : vector<256x32xf32>
    %45 = tpu.matmul %39, %44, %cst_61 {dimension_numbers = #tpu.dot_dimension_numbers<[1], [0], [0], [1], [0, 0, 1, 1], [], []>} : vector<256x8xbf16>, vector<8x32xbf16>, vector<256x32xf32> -> vector<256x32xf32>
    %46 = arith.addf %43, %45 : vector<256x32xf32>
    %cst_62 = arith.constant 0.000000e+00 : f32
    %47 = vector.broadcast %cst_62 : f32 to vector<256x32xf32>
    %48 = arith.maximumf %46, %47 : vector<256x32xf32>
    %49 = vector.shape_cast %48 : vector<256x32xf32> to vector<16x16x32xf32>
    %50 = arith.truncf %49 : vector<16x16x32xf32> to vector<16x16x32xbf16>
    %c0_63 = arith.constant 0 : index
    %c0_64 = arith.constant 0 : index
    %c0_65 = arith.constant 0 : index
    %c0_66 = arith.constant 0 : index
    %51 = vector.load %arg8[%c0_63, %c0_64, %c0_65, %c0_66] : memref<1x16x16x32xbf16, #tpu.memory_space<vmem>>, vector<1x16x16x32xbf16>
    %52 = vector.shape_cast %51 : vector<1x16x16x32xbf16> to vector<16x16x32xbf16>
    %53 = vector.shape_cast %50 : vector<16x16x32xbf16> to vector<1x16x16x32xbf16>
    tpu.vector_store %arg8[%c0_63, %c0_64, %c0_65, %c0_66], %53 {strides = array<i32>} : memref<1x16x16x32xbf16, #tpu.memory_space<vmem>>, vector<1x16x16x32xbf16>,
    return
  }
  func.func @transform_0(%arg0: i32) -> (i32, i32, i32, i32) {
    %c0_i32 = arith.constant 0 : i32
    %c0_i32_0 = arith.constant 0 : i32
    %c0_i32_1 = arith.constant 0 : i32
    %c0_i32_2 = arith.constant 0 : i32
    return %arg0, %c0_i32, %c0_i32_0, %c0_i32_1 : i32, i32, i32, i32
  }
  func.func @transform_1(%arg0: i32) -> (i32, i32) {
    %c0_i32 = arith.constant 0 : i32
    %c0_i32_0 = arith.constant 0 : i32
    %c0_i32_1 = arith.constant 0 : i32
    return %c0_i32, %c0_i32_0 : i32, i32
  }
  func.func @transform_2(%arg0: i32) -> (i32, i32) {
    %c0_i32 = arith.constant 0 : i32
    %c0_i32_0 = arith.constant 0 : i32
    %c0_i32_1 = arith.constant 0 : i32
    return %c0_i32, %c0_i32_0 : i32, i32
  }
  func.func @transform_3(%arg0: i32) -> (i32, i32) {
    %c0_i32 = arith.constant 0 : i32
    %c0_i32_0 = arith.constant 0 : i32
    %c0_i32_1 = arith.constant 0 : i32
    return %c0_i32, %c0_i32_0 : i32, i32
  }
  func.func @transform_4(%arg0: i32) -> (i32, i32) {
    %c0_i32 = arith.constant 0 : i32
    %c0_i32_0 = arith.constant 0 : i32
    %c0_i32_1 = arith.constant 0 : i32
    return %c0_i32, %c0_i32_0 : i32, i32
  }
  func.func @transform_5(%arg0: i32) -> (i32, i32) {
    %c0_i32 = arith.constant 0 : i32
    %c0_i32_0 = arith.constant 0 : i32
    %c0_i32_1 = arith.constant 0 : i32
    return %c0_i32, %c0_i32_0 : i32, i32
  }
  func.func @transform_6(%arg0: i32) -> (i32, i32) {
    %c0_i32 = arith.constant 0 : i32
    %c0_i32_0 = arith.constant 0 : i32
    %c0_i32_1 = arith.constant 0 : i32
    return %c0_i32, %c0_i32_0 : i32, i32
  }
  func.func @transform_7(%arg0: i32) -> (i32, i32, i32, i32) {
    %c0_i32 = arith.constant 0 : i32
    %c0_i32_0 = arith.constant 0 : i32
    %c0_i32_1 = arith.constant 0 : i32
    %c0_i32_2 = arith.constant 0 : i32
    return %arg0, %c0_i32, %c0_i32_0, %c0_i32_1 : i32, i32, i32, i32
  }
}

</mosaic_0001>

<llo_original>
// kernel: tpu_custom_call.1
$region0: #{tpu_custom_call.1}
  #allocation0 [shape = 'u32[]', space=smem, size = 0x4, offset = 0x4, fixed_abs, tag = 'smem constant byte address 0x4 - core index']
  #allocation1 [shape = 'u32[72,128]{1,0:T(1,128)}', space=vmem, size = 0x9000, scoped, tag = 'internal scratch']
  #allocation2 [shape = 'bf16[18,18,8]{2,1,0:T(8,128)(2,1)}', space=vmem, size = 0x1b000, scoped, tag = 'scratch operand']
  %s0 = inlined_call_operand.hbm [shape: bf16[2,16,16,32], index: 0, kind: input, shape index: {}]
  %s1 = inlined_call_operand.vmem [shape: bf16[32,8], index: 1, kind: input, shape index: {}]
  %s2 = inlined_call_operand.vmem [shape: bf16[72,8], index: 2, kind: input, shape index: {}]
  %s3 = inlined_call_operand.vmem [shape: bf16[8,32], index: 3, kind: input, shape index: {}]
  %s4 = inlined_call_operand.vmem [shape: f32[1,8], index: 4, kind: input, shape index: {}]
  %s5 = inlined_call_operand.vmem [shape: f32[1,8], index: 5, kind: input, shape index: {}]
  %s6 = inlined_call_operand.vmem [shape: f32[1,32], index: 6, kind: input, shape index: {}]
  %s7 = inlined_call_operand.hbm [shape: bf16[2,16,16,32], index: 7, kind: output, shape index: {}]
  %s8 = sld [smem:[#allocation0]]
  $region65: #{tpu_custom_call.1} parent=0
    _
  %s10 = ssub.s32 1, %s8
  %s11 = scalar_select 0, %s10, %s8
  $region1: #{tpu_custom_call.1} parent=0
    #allocation3 [shape = 'u8[131072]{0}', space=vmem, size = 0x20000, scoped, tag = 'input window, operand 0']
    #allocation4 [shape = 's32[2]{0}', space=sflag, size = 0x8, scoped, tag = 'scoped memory for tpu_custom_call.1']
    #allocation5 [shape = 's32[2]{0}', space=sflag, size = 0x8, scoped, tag = 'scoped memory for tpu_custom_call.1']
    #allocation6 [shape = 'u8[131072]{0}', space=vmem, size = 0x20000, scoped, tag = 'output window, operand 0']
    %12 = vsyncpa [#allocation4], 0
    %s13 = scalar_lea.sflag [#allocation4], 1
    %14 = vsyncpa %s13, 0
    %15 = vsyncpa [#allocation5], 0
    %s16 = scalar_lea.sflag [#allocation5], 1
    %17 = vsyncpa %s16, 0
    loop: start=0, step=1, limit=4
    $region2: #{tpu_custom_call.1} parent=1 // loop_pre_header
      _
    $region3: #{tpu_custom_call.1} parent=1 // loop_header
      %s19 = sphi 0, %s23
      %p20 = scmp.ge.s32.totalorder %s19, 4
      %s29 = sphi 0, %s31
      %s32 = sphi 0, %s29
      %s33 = sphi 0, %s32
      %s49 = sphi 0, %s33
      %s53 = sphi 0, %s53
      %s55 = sphi 0, %s53
      %s56 = sphi 0, %s55
      %s70 = sphi 0, %s56
      %s74 = sphi 0, %s74
      %s76 = sphi 0, %s74
      %s77 = sphi 0, %s76
      %s91 = sphi 0, %s77
      %s95 = sphi 0, %s95
      %s97 = sphi 0, %s95
      %s98 = sphi 0, %s97
      %s112 = sphi 0, %s98
      %s116 = sphi 0, %s116
      %s118 = sphi 0, %s116
      %s119 = sphi 0, %s118
      %s133 = sphi 0, %s119
      %s137 = sphi 0, %s137
      %s139 = sphi 0, %s137
      %s140 = sphi 0, %s139
      %s154 = sphi 0, %s140
      %s158 = sphi 0, %s158
      %s160 = sphi 0, %s158
      %s161 = sphi 0, %s160
      %s175 = sphi 0, %s161
      %s181 = sphi 0, %s183
      %s184 = sphi 0, %s181
      %s185 = sphi 0, %s184
      %s201 = sphi 0, %s185
    $region4: #{tpu_custom_call.1} parent=1 // loop_header_branch
      %22 = sbr.rel (%p20) target = $region8
    $region5: #{tpu_custom_call.1} parent=1 // loop_body
      %s24 = ssub.s32 %s19, 1
      %s25 = ssub.s32 %s19, 2
      %s26 = sadd.s32 %s19, 1
      %s27 = ssub.s32 %s19, %s26
      %p28 = scmp.eq.s32.totalorder %s27, 0
      %s30 = sadd.s32 %s29, 1
      %s31 = scalar_select %p28, %s29, %s30
      %p34 = pneg %p28
      %p35 = scmp.eq.s32.totalorder %s19, 1
      %p36 = por %p34, %p35
      %p37 = scmp.ne.s32.totalorder %s29, %s32
      %p38 = scmp.eq.s32.totalorder %s19, 0
      %p39 = por %p37, %p38
      %p40 = scmp.ne.s32.totalorder %s29, %s32
      %p41 = scmp.eq.s32.totalorder %s24, 1
      %p42 = por %p40, %p41
      %p43 = scmp.ne.s32.totalorder %s32, %s33
      %p44 = scmp.eq.s32.totalorder %s24, 0
      %p45 = por %p43, %p44
      %p46 = scmp.ne.s32.totalorder %s32, %s33
      %p47 = scmp.eq.s32.totalorder %s25, 1
      %p48 = por %p46, %p47
      %p50 = scmp.ne.s32.totalorder %s33, %s49
      %p51 = scmp.eq.s32.totalorder %s25, 0
      %p52 = por %p50, %p51
      %s54 = sadd.s32 %s53, 1
      %p57 = scmp.eq.s32.totalorder %s19, 1
      %p58 = scmp.ne.s32.totalorder %s53, %s55
      %p59 = scmp.eq.s32.totalorder %s19, 0
      %p60 = por %p58, %p59
      %p61 = scmp.ne.s32.totalorder %s53, %s55
      %p62 = scmp.eq.s32.totalorder %s24, 1
      %p63 = por %p61, %p62
      %p64 = scmp.ne.s32.totalorder %s55, %s56
      %p65 = scmp.eq.s32.totalorder %s24, 0
      %p66 = por %p64, %p65
      %p67 = scmp.ne.s32.totalorder %s55, %s56
      %p68 = scmp.eq.s32.totalorder %s25, 1
      %p69 = por %p67, %p68
      %p71 = scmp.ne.s32.totalorder %s56, %s70
      %p72 = scmp.eq.s32.totalorder %s25, 0
      %p73 = por %p71, %p72
      %s75 = sadd.s32 %s74, 1
      %p78 = scmp.eq.s32.totalorder %s19, 1
      %p79 = scmp.ne.s32.totalorder %s74, %s76
      %p80 = scmp.eq.s32.totalorder %s19, 0
      %p81 = por %p79, %p80
      %p82 = scmp.ne.s32.totalorder %s74, %s76
      %p83 = scmp.eq.s32.totalorder %s24, 1
      %p84 = por %p82, %p83
      %p85 = scmp.ne.s32.totalorder %s76, %s77
      %p86 = scmp.eq.s32.totalorder %s24, 0
      %p87 = por %p85, %p86
      %p88 = scmp.ne.s32.totalorder %s76, %s77
      %p89 = scmp.eq.s32.totalorder %s25, 1
      %p90 = por %p88, %p89
      %p92 = scmp.ne.s32.totalorder %s77, %s91
      %p93 = scmp.eq.s32.totalorder %s25, 0
      %p94 = por %p92, %p93
      %s96 = sadd.s32 %s95, 1
      %p99 = scmp.eq.s32.totalorder %s19, 1
      %p100 = scmp.ne.s32.totalorder %s95, %s97
      %p101 = scmp.eq.s32.totalorder %s19, 0
      %p102 = por %p100, %p101
      %p103 = scmp.ne.s32.totalorder %s95, %s97
      %p104 = scmp.eq.s32.totalorder %s24, 1
      %p105 = por %p103, %p104
      %p106 = scmp.ne.s32.totalorder %s97, %s98
      %p107 = scmp.eq.s32.totalorder %s24, 0
      %p108 = por %p106, %p107
      %p109 = scmp.ne.s32.totalorder %s97, %s98
      %p110 = scmp.eq.s32.totalorder %s25, 1
      %p111 = por %p109, %p110
      %p113 = scmp.ne.s32.totalorder %s98, %s112
      %p114 = scmp.eq.s32.totalorder %s25, 0
      %p115 = por %p113, %p114
      %s117 = sadd.s32 %s116, 1
      %p120 = scmp.eq.s32.totalorder %s19, 1
      %p121 = scmp.ne.s32.totalorder %s116, %s118
      %p122 = scmp.eq.s32.totalorder %s19, 0
      %p123 = por %p121, %p122
      %p124 = scmp.ne.s32.totalorder %s116, %s118
      %p125 = scmp.eq.s32.totalorder %s24, 1
      %p126 = por %p124, %p125
      %p127 = scmp.ne.s32.totalorder %s118, %s119
      %p128 = scmp.eq.s32.totalorder %s24, 0
      %p129 = por %p127, %p128
      %p130 = scmp.ne.s32.totalorder %s118, %s119
      %p131 = scmp.eq.s32.totalorder %s25, 1
      %p132 = por %p130, %p131
      %p134 = scmp.ne.s32.totalorder %s119, %s133
      %p135 = scmp.eq.s32.totalorder %s25, 0
      %p136 = por %p134, %p135
      %s138 = sadd.s32 %s137, 1
      %p141 = scmp.eq.s32.totalorder %s19, 1
      %p142 = scmp.ne.s32.totalorder %s137, %s139
      %p143 = scmp.eq.s32.totalorder %s19, 0
      %p144 = por %p142, %p143
      %p145 = scmp.ne.s32.totalorder %s137, %s139
      %p146 = scmp.eq.s32.totalorder %s24, 1
      %p147 = por %p145, %p146
      %p148 = scmp.ne.s32.totalorder %s139, %s140
      %p149 = scmp.eq.s32.totalorder %s24, 0
      %p150 = por %p148, %p149
      %p151 = scmp.ne.s32.totalorder %s139, %s140
      %p152 = scmp.eq.s32.totalorder %s25, 1
      %p153 = por %p151, %p152
      %p155 = scmp.ne.s32.totalorder %s140, %s154
      %p156 = scmp.eq.s32.totalorder %s25, 0
      %p157 = por %p155, %p156
      %s159 = sadd.s32 %s158, 1
      %p162 = scmp.eq.s32.totalorder %s19, 1
      %p163 = scmp.ne.s32.totalorder %s158, %s160
      %p164 = scmp.eq.s32.totalorder %s19, 0
      %p165 = por %p163, %p164
      %p166 = scmp.ne.s32.totalorder %s158, %s160
      %p167 = scmp.eq.s32.totalorder %s24, 1
      %p168 = por %p166, %p167
      %p169 = scmp.ne.s32.totalorder %s160, %s161
      %p170 = scmp.eq.s32.totalorder %s24, 0
      %p171 = por %p169, %p170
      %p172 = scmp.ne.s32.totalorder %s160, %s161
      %p173 = scmp.eq.s32.totalorder %s25, 1
      %p174 = por %p172, %p173
      %p176 = scmp.ne.s32.totalorder %s161, %s175
      %p177 = scmp.eq.s32.totalorder %s25, 0
      %p178 = por %p176, %p177
      %s179 = ssub.s32 %s19, %s26
      %p180 = scmp.eq.s32.totalorder %s179, 0
      %s182 = sadd.s32 %s181, 1
      %s183 = scalar_select %p180, %s181, %s182
      %p186 = pneg %p180
      %p187 = scmp.eq.s32.totalorder %s19, 1
      %p188 = por %p186, %p187
      %p189 = scmp.ne.s32.totalorder %s181, %s184
      %p190 = scmp.eq.s32.totalorder %s19, 0
      %p191 = por %p189, %p190
      %p192 = scmp.ne.s32.totalorder %s181, %s184
      %p193 = scmp.eq.s32.totalorder %s24, 1
      %p194 = por %p192, %p193
      %p195 = scmp.ne.s32.totalorder %s184, %s185
      %p196 = scmp.eq.s32.totalorder %s24, 0
      %p197 = por %p195, %p196
      %p198 = scmp.ne.s32.totalorder %s184, %s185
      %p199 = scmp.eq.s32.totalorder %s25, 1
      %p200 = por %p198, %p199
      %p202 = scmp.ne.s32.totalorder %s185, %s201
      %p203 = scmp.eq.s32.totalorder %s25, 0
      %p204 = por %p202, %p203
      %p205 = scmp.le.s32.totalorder 1, %s19
      %p206 = scmp.lt.s32.totalorder %s19, 3
      %p207 = pnand %p205, %p206
      %p208 = pneg %p207
      // Predicated region
      $region9: #{tpu_custom_call.1} parent=5 // pred_check
        _
      $region10: #{tpu_custom_call.1} parent=5 // pred_check_branch
        %210 = sbr.rel (%p207) target = $region12
      $region11: #{tpu_custom_call.1} parent=5 // pred_region
        %s211 = ssub.s32 %s19, 1
        // Predicated region
        $region13: #{tpu_custom_call.1} parent=11 // pred_check
          %p212 = pneg %p66
        $region14: #{tpu_custom_call.1} parent=11 // pred_check_branch
          %214 = sbr.rel (%p212) target = $region16
        $region15: #{tpu_custom_call.1} parent=11 // pred_region
          _
        $region16: #{tpu_custom_call.1} parent=11 // pred_fallthru
          _
        // Predicated region
        $region17: #{tpu_custom_call.1} parent=11 // pred_check
          %p215 = pneg %p87
        $region18: #{tpu_custom_call.1} parent=11 // pred_check_branch
          %217 = sbr.rel (%p215) target = $region20
        $region19: #{tpu_custom_call.1} parent=11 // pred_region
          _
        $region20: #{tpu_custom_call.1} parent=11 // pred_fallthru
          _
        // Predicated region
        $region21: #{tpu_custom_call.1} parent=11 // pred_check
          %p218 = pneg %p108
        $region22: #{tpu_custom_call.1} parent=11 // pred_check_branch
          %220 = sbr.rel (%p218) target = $region24
        $region23: #{tpu_custom_call.1} parent=11 // pred_region
          _
        $region24: #{tpu_custom_call.1} parent=11 // pred_fallthru
          _
        // Predicated region
        $region25: #{tpu_custom_call.1} parent=11 // pred_check
          %p221 = pneg %p129
        $region26: #{tpu_custom_call.1} parent=11 // pred_check_branch
          %223 = sbr.rel (%p221) target = $region28
        $region27: #{tpu_custom_call.1} parent=11 // pred_region
          _
        $region28: #{tpu_custom_call.1} parent=11 // pred_fallthru
          _
        // Predicated region
        $region29: #{tpu_custom_call.1} parent=11 // pred_check
          %p224 = pneg %p150
        $region30: #{tpu_custom_call.1} parent=11 // pred_check_branch
          %226 = sbr.rel (%p224) target = $region32
        $region31: #{tpu_custom_call.1} parent=11 // pred_region
          _
        $region32: #{tpu_custom_call.1} parent=11 // pred_fallthru
          _
        // Predicated region
        $region33: #{tpu_custom_call.1} parent=11 // pred_check
          %p227 = pneg %p171
        $region34: #{tpu_custom_call.1} parent=11 // pred_check_branch
          %229 = sbr.rel (%p227) target = $region36
        $region35: #{tpu_custom_call.1} parent=11 // pred_region
          _
        $region36: #{tpu_custom_call.1} parent=11 // pred_fallthru
          _
      $region12: #{tpu_custom_call.1} parent=5 // pred_fallthru
        _
      %p230 = scmp.lt.s32.totalorder %s19, 2
      // Predicated region
      $region37: #{tpu_custom_call.1} parent=5 // pred_check
        %p231 = pneg %p230
      $region38: #{tpu_custom_call.1} parent=5 // pred_check_branch
        %233 = sbr.rel (%p231) target = $region40
      $region39: #{tpu_custom_call.1} parent=5 // pred_region
        // Predicated region
        $region41: #{tpu_custom_call.1} parent=39 // pred_check
          %p234 = pneg %p39
        $region42: #{tpu_custom_call.1} parent=39 // pred_check_branch
          %236 = sbr.rel (%p234) target = $region44
        $region43: #{tpu_custom_call.1} parent=39 // pred_region
          %s237 = sand.u32 %s29, 1
          %s238 = scalar_lea.sflag [#allocation4], %s237
          %s239 = sand.u32 %s29, 1
          %s240 = smul.addr %s239, 128
          %s241 = scalar_lea.vmem [#allocation3], %s240
          %243 = vsyncadd %s238, 0
          %s244 = smul.addr %s19, 32
          %s245 = smul.addr %s244, 4
          %s246 = scalar_lea.hbm %s0, %s245
          %s247 = sshll.u32 %s246, 4
          %s248 = int_to_ptr.hbm [resolvable:$true] %s247
          %s249 = sshll.u32 %s241, 4
          %s250 = int_to_ptr.vmem [resolvable:$true] %s249
          %255 = dma.hbm_to_vmem [thread:$0]  %s248, 2048, %s250, %s238, 64, 64, 4
        $region44: #{tpu_custom_call.1} parent=39 // pred_fallthru
          _
      $region40: #{tpu_custom_call.1} parent=5 // pred_fallthru
        _
      %p256 = scmp.le.s32.totalorder 1, %s19
      %p257 = scmp.lt.s32.totalorder %s19, 3
      %p258 = pnand %p256, %p257
      %p259 = pneg %p258
      // Predicated region
      $region45: #{tpu_custom_call.1} parent=5 // pred_check
        _
      $region46: #{tpu_custom_call.1} parent=5 // pred_check_branch
        %261 = sbr.rel (%p258) target = $region48
      $region47: #{tpu_custom_call.1} parent=5 // pred_region
        %s262 = ssub.s32 %s19, 1
        %s263 = sand.u32 %s32, 1
        %s264 = scalar_lea.sflag [#allocation4], %s263
        %s265 = sand.u32 %s32, 1
        %s266 = smul.addr %s265, 128
        %s267 = scalar_lea.vmem [#allocation3], %s266
        // Predicated region
        $region49: #{tpu_custom_call.1} parent=47 // pred_check
          %p268 = pneg %p45
        $region50: #{tpu_custom_call.1} parent=47 // pred_check_branch
          %270 = sbr.rel (%p268) target = $region52
        $region51: #{tpu_custom_call.1} parent=47 // pred_region
          %272 = dma.done %s264, 2048
        $region52: #{tpu_custom_call.1} parent=47 // pred_fallthru
          _
        %s273 = sand.u32 %s32, 1
        %s274 = scalar_lea.sflag [#allocation4], %s273
        %s275 = sand.u32 %s32, 1
        %s276 = smul.addr %s275, 128
        %s277 = scalar_lea.vmem [#allocation3], %s276
        %p278 = pneg %p45
        %p279 = pneg %p42
        %p280 = pneg %p66
        %p281 = pneg %p63
        %p282 = pneg %p87
        %p283 = pneg %p84
        %p284 = pneg %p108
        %p285 = pneg %p105
        %p286 = pneg %p129
        %p287 = pneg %p126
        %p288 = pneg %p150
        %p289 = pneg %p147
        %p290 = pneg %p171
        %p291 = pneg %p168
        %p292 = pneg %p197
        %p293 = pneg %p194
        %s294 = sand.u32 %s184, 1
        %s295 = scalar_lea.sflag [#allocation5], %s294
        %s296 = sand.u32 %s184, 1
        %s297 = smul.addr %s296, 128
        %s298 = scalar_lea.vmem [#allocation6], %s297
        %v300 = vld [vmem:[%s267] sm:$0xf]
        %v301 = vld [vmem:[%s267 + $0x4] sm:$0xf]
        %v302 = vld [vmem:[%s267 + $0x8] sm:$0xf]
        %v303 = vld [vmem:[%s267 + $0xc] sm:$0xf]
        %v304 = vld [vmem:[%s267 + $0x10] sm:$0xf]
        %v305 = vld [vmem:[%s267 + $0x14] sm:$0xf]
        %v306 = vld [vmem:[%s267 + $0x18] sm:$0xf]
        %v307 = vld [vmem:[%s267 + $0x1c] sm:$0xf]
        %v308 = vld [vmem:[%s267 + $0x20] sm:$0xf]
        %v309 = vld [vmem:[%s267 + $0x24] sm:$0xf]
        %v310 = vld [vmem:[%s267 + $0x28] sm:$0xf]
        %v311 = vld [vmem:[%s267 + $0x2c] sm:$0xf]
        %v312 = vld [vmem:[%s267 + $0x30] sm:$0xf]
        %v313 = vld [vmem:[%s267 + $0x34] sm:$0xf]
        %v314 = vld [vmem:[%s267 + $0x38] sm:$0xf]
        %v315 = vld [vmem:[%s267 + $0x3c] sm:$0xf]
        %v316 = vld [vmem:[%s267 + $0x40] sm:$0xf]
        %v317 = vld [vmem:[%s267 + $0x44] sm:$0xf]
        %v318 = vld [vmem:[%s267 + $0x48] sm:$0xf]
        %v319 = vld [vmem:[%s267 + $0x4c] sm:$0xf]
        %v320 = vld [vmem:[%s267 + $0x50] sm:$0xf]
        %v321 = vld [vmem:[%s267 + $0x54] sm:$0xf]
        %v322 = vld [vmem:[%s267 + $0x58] sm:$0xf]
        %v323 = vld [vmem:[%s267 + $0x5c] sm:$0xf]
        %v324 = vld [vmem:[%s267 + $0x60] sm:$0xf]
        %v325 = vld [vmem:[%s267 + $0x64] sm:$0xf]
        %v326 = vld [vmem:[%s267 + $0x68] sm:$0xf]
        %v327 = vld [vmem:[%s267 + $0x6c] sm:$0xf]
        %v328 = vld [vmem:[%s267 + $0x70] sm:$0xf]
        %v329 = vld [vmem:[%s267 + $0x74] sm:$0xf]
        %v330 = vld [vmem:[%s267 + $0x78] sm:$0xf]
        %v331 = vld [vmem:[%s267 + $0x7c] sm:$0xf]
        %v332 = vld [vmem:[%s1] sm:$0xf]
        %v333 = vld [vmem:[%s1 + $0x4] sm:$0xf]
        %v334 = vld [vmem:[%s1 + $0x8] sm:$0xf]
        %v335 = vld [vmem:[%s1 + $0xc] sm:$0xf]
        %v336 = vld [vmem:[%s4] sm:$0x1]
        %v338 = vperm.slane %v336, 0
        %v372 = vunpack.c.l.b16 %v300
        %v373 = vunpack.c.l.b16 %v301
        %v374 = vunpack.c.l.b16 %v302
        %v375 = vunpack.c.l.b16 %v303
        %v376 = vunpack.c.l.b16 %v304
        %v377 = vunpack.c.l.b16 %v305
        %v378 = vunpack.c.l.b16 %v306
        %v379 = vunpack.c.l.b16 %v307
        %v380 = vunpack.c.l.b16 %v308
        %v381 = vunpack.c.l.b16 %v309
        %v382 = vunpack.c.l.b16 %v310
        %v383 = vunpack.c.l.b16 %v311
        %v384 = vunpack.c.l.b16 %v312
        %v385 = vunpack.c.l.b16 %v313
        %v386 = vunpack.c.l.b16 %v314
        %v387 = vunpack.c.l.b16 %v315
        %v388 = vunpack.c.l.b16 %v316
        %v389 = vunpack.c.l.b16 %v317
        %v390 = vunpack.c.l.b16 %v318
        %v391 = vunpack.c.l.b16 %v319
        %v392 = vunpack.c.l.b16 %v320
        %v393 = vunpack.c.l.b16 %v321
        %v394 = vunpack.c.l.b16 %v322
        %v395 = vunpack.c.l.b16 %v323
        %v396 = vunpack.c.l.b16 %v324
        %v397 = vunpack.c.l.b16 %v325
        %v398 = vunpack.c.l.b16 %v326
        %v399 = vunpack.c.l.b16 %v327
        %v400 = vunpack.c.l.b16 %v328
        %v401 = vunpack.c.l.b16 %v329
        %v402 = vunpack.c.l.b16 %v330
        %v403 = vunpack.c.l.b16 %v331
        %v404 = vpack.c.b16 %v373, %v372
        %v405 = vpack.c.b16 %v375, %v374
        %v406 = vpack.c.b16 %v377, %v376
        %v407 = vpack.c.b16 %v379, %v378
        %v408 = vpack.c.b16 %v381, %v380
        %v409 = vpack.c.b16 %v383, %v382
        %v410 = vpack.c.b16 %v385, %v384
        %v411 = vpack.c.b16 %v387, %v386
        %v412 = vpack.c.b16 %v389, %v388
        %v413 = vpack.c.b16 %v391, %v390
        %v414 = vpack.c.b16 %v393, %v392
        %v415 = vpack.c.b16 %v395, %v394
        %v416 = vpack.c.b16 %v397, %v396
        %v417 = vpack.c.b16 %v399, %v398
        %v418 = vpack.c.b16 %v401, %v400
        %v419 = vpack.c.b16 %v403, %v402
        %v424 = vunpack.c.l.b16 %v332
        %v425 = vunpack.c.l.b16 %v333
        %v426 = vunpack.c.l.b16 %v334
        %v427 = vunpack.c.l.b16 %v335
        %v428 = vpack.c.b16 %v425, %v424
        %v429 = vpack.c.b16 %v427, %v426
        %vm432 = vcmask 261120
        %v434 = vsel %vm432, %v404, 0
        %v437 = vsel %vm432, %v405, 0
        %v440 = vsel %vm432, %v406, 0
        %v443 = vsel %vm432, %v407, 0
        %v446 = vsel %vm432, %v408, 0
        %v449 = vsel %vm432, %v409, 0
        %v452 = vsel %vm432, %v410, 0
        %v455 = vsel %vm432, %v411, 0
        %v458 = vsel %vm432, %v412, 0
        %v461 = vsel %vm432, %v413, 0
        %v464 = vsel %vm432, %v414, 0
        %v467 = vsel %vm432, %v415, 0
        %v470 = vsel %vm432, %v416, 0
        %v473 = vsel %vm432, %v417, 0
        %v476 = vsel %vm432, %v418, 0
        %v479 = vsel %vm432, %v419, 0
        %481 = vmatpush.bf16.msra.mxu0 0
        %482 = vmatpush.bf16.msra.mxu0 0
        %483 = vmatpush.bf16.msra.mxu0 0
        %484 = vmatpush.bf16.msra.mxu0 0
        %485 = vmatpush.bf16.msra.mxu0 0
        %486 = vmatpush.bf16.msra.mxu0 0
        %487 = vmatpush.bf16.msra.mxu0 %v429
        %488 = vmatpush.bf16.msra.mxu0 %v428
        %489 = vmatmul.bf16.gmra.mxu0 %v434
        %v490 = vpop.f32.mrf.mxu0
        %v491 = vadd.f32 %v338, %v490
        %v492 = vpop.f32.mrf.mxu0
        %v493 = vadd.f32 %v338, %v492
        %494 = vmatmul.bf16.gmra.mxu0 %v437
        %v495 = vpop.f32.mrf.mxu0
        %v496 = vadd.f32 %v338, %v495
        %v497 = vpop.f32.mrf.mxu0
        %v498 = vadd.f32 %v338, %v497
        %499 = vmatmul.bf16.gmra.mxu0 %v440
        %v500 = vpop.f32.mrf.mxu0
        %v501 = vadd.f32 %v338, %v500
        %v502 = vpop.f32.mrf.mxu0
        %v503 = vadd.f32 %v338, %v502
        %504 = vmatmul.bf16.gmra.mxu0 %v443
        %v505 = vpop.f32.mrf.mxu0
        %v506 = vadd.f32 %v338, %v505
        %v507 = vpop.f32.mrf.mxu0
        %v508 = vadd.f32 %v338, %v507
        %509 = vmatmul.bf16.gmra.mxu0 %v446
        %v510 = vpop.f32.mrf.mxu0
        %v511 = vadd.f32 %v338, %v510
        %v512 = vpop.f32.mrf.mxu0
        %v513 = vadd.f32 %v338, %v512
        %514 = vmatmul.bf16.gmra.mxu0 %v449
        %v515 = vpop.f32.mrf.mxu0
        %v516 = vadd.f32 %v338, %v515
        %v517 = vpop.f32.mrf.mxu0
        %v518 = vadd.f32 %v338, %v517
        %519 = vmatmul.bf16.gmra.mxu0 %v452
        %v520 = vpop.f32.mrf.mxu0
        %v521 = vadd.f32 %v338, %v520
        %v522 = vpop.f32.mrf.mxu0
        %v523 = vadd.f32 %v338, %v522
        %524 = vmatmul.bf16.gmra.mxu0 %v455
        %v525 = vpop.f32.mrf.mxu0
        %v526 = vadd.f32 %v338, %v525
        %v527 = vpop.f32.mrf.mxu0
        %v528 = vadd.f32 %v338, %v527
        %529 = vmatmul.bf16.gmra.mxu0 %v458
        %v530 = vpop.f32.mrf.mxu0
        %v531 = vadd.f32 %v338, %v530
        %v532 = vpop.f32.mrf.mxu0
        %v533 = vadd.f32 %v338, %v532
        %534 = vmatmul.bf16.gmra.mxu0 %v461
        %v535 = vpop.f32.mrf.mxu0
        %v536 = vadd.f32 %v338, %v535
        %v537 = vpop.f32.mrf.mxu0
        %v538 = vadd.f32 %v338, %v537
        %539 = vmatmul.bf16.gmra.mxu0 %v464
        %v540 = vpop.f32.mrf.mxu0
        %v541 = vadd.f32 %v338, %v540
        %v542 = vpop.f32.mrf.mxu0
        %v543 = vadd.f32 %v338, %v542
        %544 = vmatmul.bf16.gmra.mxu0 %v467
        %v545 = vpop.f32.mrf.mxu0
        %v546 = vadd.f32 %v338, %v545
        %v547 = vpop.f32.mrf.mxu0
        %v548 = vadd.f32 %v338, %v547
        %549 = vmatmul.bf16.gmra.mxu0 %v470
        %v550 = vpop.f32.mrf.mxu0
        %v551 = vadd.f32 %v338, %v550
        %v552 = vpop.f32.mrf.mxu0
        %v553 = vadd.f32 %v338, %v552
        %554 = vmatmul.bf16.gmra.mxu0 %v473
        %v555 = vpop.f32.mrf.mxu0
        %v556 = vadd.f32 %v338, %v555
        %v557 = vpop.f32.mrf.mxu0
        %v558 = vadd.f32 %v338, %v557
        %559 = vmatmul.bf16.gmra.mxu0 %v476
        %v560 = vpop.f32.mrf.mxu0
        %v561 = vadd.f32 %v338, %v560
        %v562 = vpop.f32.mrf.mxu0
        %v563 = vadd.f32 %v338, %v562
        %564 = vmatmul.bf16.gmra.mxu0 %v479
        %v565 = vpop.f32.mrf.mxu0
        %v566 = vadd.f32 %v338, %v565
        %v567 = vpop.f32.mrf.mxu0
        %v568 = vadd.f32 %v338, %v567
        %569 = vdwg.mxu0
        %v570 = vmax.f32 %v491, 0.0
        %v571 = vmax.f32 %v493, 0.0
        %v572 = vmax.f32 %v496, 0.0
        %v573 = vmax.f32 %v498, 0.0
        %v574 = vmax.f32 %v501, 0.0
        %v575 = vmax.f32 %v503, 0.0
        %v576 = vmax.f32 %v506, 0.0
        %v577 = vmax.f32 %v508, 0.0
        %v578 = vmax.f32 %v511, 0.0
        %v579 = vmax.f32 %v513, 0.0
        %v580 = vmax.f32 %v516, 0.0
        %v581 = vmax.f32 %v518, 0.0
        %v582 = vmax.f32 %v521, 0.0
        %v583 = vmax.f32 %v523, 0.0
        %v584 = vmax.f32 %v526, 0.0
        %v585 = vmax.f32 %v528, 0.0
        %v586 = vmax.f32 %v531, 0.0
        %v587 = vmax.f32 %v533, 0.0
        %v588 = vmax.f32 %v536, 0.0
        %v589 = vmax.f32 %v538, 0.0
        %v590 = vmax.f32 %v541, 0.0
        %v591 = vmax.f32 %v543, 0.0
        %v592 = vmax.f32 %v546, 0.0
        %v593 = vmax.f32 %v548, 0.0
        %v594 = vmax.f32 %v551, 0.0
        %v595 = vmax.f32 %v553, 0.0
        %v596 = vmax.f32 %v556, 0.0
        %v597 = vmax.f32 %v558, 0.0
        %v598 = vmax.f32 %v561, 0.0
        %v599 = vmax.f32 %v563, 0.0
        %v600 = vmax.f32 %v566, 0.0
        %v601 = vmax.f32 %v568, 0.0
        %vm602 = vcmask 60416
        %603 = vst.msk [vmem:[#allocation2] sm:$0xf] %vm602, 0
        %604 = vst.msk [vmem:[#allocation2 + $0x4] sm:$0xf] %vm602, 0
        %vm605 = vcmask 57344
        %606 = vst.msk [vmem:[#allocation2 + $0x8] sm:$0x1] %vm605, 0
        %s607 = scalar_lea.vmem [#allocation2], 204
        %608 = vst.msk [vmem:[%s607] sm:$0xf] %vm602, 0
        %609 = vst.msk [vmem:[%s607 + $0x4] sm:$0xf] %vm602, 0
        %610 = vst.msk [vmem:[%s607 + $0x8] sm:$0x1] %vm605, 0
        %s611 = scalar_lea.vmem [#allocation2], 12
        %vm612 = vcmask 57344
        %vm613 = vsmask.f32 256
        %vm614 = vmand %vm612, %vm613
        %v615 = vld [vmem:[%s611] sm:$0x1]
        %v616 = vsel %vm614, 0, %v615
        %617 = vst [vmem:[%s611] sm:$0x1] %v616
        %v618 = vld [vmem:[%s611 + $0xc] sm:$0x1]
        %v619 = vsel %vm614, 0, %v618
        %620 = vst [vmem:[%s611 + $0xc] sm:$0x1] %v619
        %v621 = vld [vmem:[%s611 + $0x18] sm:$0x1]
        %v622 = vsel %vm614, 0, %v621
        %623 = vst [vmem:[%s611 + $0x18] sm:$0x1] %v622
        %v624 = vld [vmem:[%s611 + $0x24] sm:$0x1]
        %v625 = vsel %vm614, 0, %v624
        %626 = vst [vmem:[%s611 + $0x24] sm:$0x1] %v625
        %v627 = vld [vmem:[%s611 + $0x30] sm:$0x1]
        %v628 = vsel %vm614, 0, %v627
        %629 = vst [vmem:[%s611 + $0x30] sm:$0x1] %v628
        %v630 = vld [vmem:[%s611 + $0x3c] sm:$0x1]
        %v631 = vsel %vm614, 0, %v630
        %632 = vst [vmem:[%s611 + $0x3c] sm:$0x1] %v631
        %v633 = vld [vmem:[%s611 + $0x48] sm:$0x1]
        %v634 = vsel %vm614, 0, %v633
        %635 = vst [vmem:[%s611 + $0x48] sm:$0x1] %v634
        %v636 = vld [vmem:[%s611 + $0x54] sm:$0x1]
        %v637 = vsel %vm614, 0, %v636
        %638 = vst [vmem:[%s611 + $0x54] sm:$0x1] %v637
        %v639 = vld [vmem:[%s611 + $0x60] sm:$0x1]
        %v640 = vsel %vm614, 0, %v639
        %641 = vst [vmem:[%s611 + $0x60] sm:$0x1] %v640
        %v642 = vld [vmem:[%s611 + $0x6c] sm:$0x1]
        %v643 = vsel %vm614, 0, %v642
        %644 = vst [vmem:[%s611 + $0x6c] sm:$0x1] %v643
        %v645 = vld [vmem:[%s611 + $0x78] sm:$0x1]
        %v646 = vsel %vm614, 0, %v645
        %647 = vst [vmem:[%s611 + $0x78] sm:$0x1] %v646
        %v648 = vld [vmem:[%s611 + $0x84] sm:$0x1]
        %v649 = vsel %vm614, 0, %v648
        %650 = vst [vmem:[%s611 + $0x84] sm:$0x1] %v649
        %v651 = vld [vmem:[%s611 + $0x90] sm:$0x1]
        %v652 = vsel %vm614, 0, %v651
        %653 = vst [vmem:[%s611 + $0x90] sm:$0x1] %v652
        %v654 = vld [vmem:[%s611 + $0x9c] sm:$0x1]
        %v655 = vsel %vm614, 0, %v654
        %656 = vst [vmem:[%s611 + $0x9c] sm:$0x1] %v655
        %v657 = vld [vmem:[%s611 + $0xa8] sm:$0x1]
        %v658 = vsel %vm614, 0, %v657
        %659 = vst [vmem:[%s611 + $0xa8] sm:$0x1] %v658
        %v660 = vld [vmem:[%s611 + $0xb4] sm:$0x1]
        %v661 = vsel %vm614, 0, %v660
        %662 = vst [vmem:[%s611 + $0xb4] sm:$0x1] %v661
        %vm663 = vsmask.f32 7938
        %vm664 = vmand %vm612, %vm663
        %v665 = vld [vmem:[%s611 + $0x8] sm:$0x1]
        %v666 = vsel %vm664, 0, %v665
        %667 = vst [vmem:[%s611 + $0x8] sm:$0x1] %v666
        %v668 = vld [vmem:[%s611 + $0x14] sm:$0x1]
        %v669 = vsel %vm664, 0, %v668
        %670 = vst [vmem:[%s611 + $0x14] sm:$0x1] %v669
        %v671 = vld [vmem:[%s611 + $0x20] sm:$0x1]
        %v672 = vsel %vm664, 0, %v671
        %673 = vst [vmem:[%s611 + $0x20] sm:$0x1] %v672
        %v674 = vld [vmem:[%s611 + $0x2c] sm:$0x1]
        %v675 = vsel %vm664, 0, %v674
        %676 = vst [vmem:[%s611 + $0x2c] sm:$0x1] %v675
        %v677 = vld [vmem:[%s611 + $0x38] sm:$0x1]
        %v678 = vsel %vm664, 0, %v677
        %679 = vst [vmem:[%s611 + $0x38] sm:$0x1] %v678
        %v680 = vld [vmem:[%s611 + $0x44] sm:$0x1]
        %v681 = vsel %vm664, 0, %v680
        %682 = vst [vmem:[%s611 + $0x44] sm:$0x1] %v681
        %v683 = vld [vmem:[%s611 + $0x50] sm:$0x1]
        %v684 = vsel %vm664, 0, %v683
        %685 = vst [vmem:[%s611 + $0x50] sm:$0x1] %v684
        %v686 = vld [vmem:[%s611 + $0x5c] sm:$0x1]
        %v687 = vsel %vm664, 0, %v686
        %688 = vst [vmem:[%s611 + $0x5c] sm:$0x1] %v687
        %v689 = vld [vmem:[%s611 + $0x68] sm:$0x1]
        %v690 = vsel %vm664, 0, %v689
        %691 = vst [vmem:[%s611 + $0x68] sm:$0x1] %v690
        %v692 = vld [vmem:[%s611 + $0x74] sm:$0x1]
        %v693 = vsel %vm664, 0, %v692
        %694 = vst [vmem:[%s611 + $0x74] sm:$0x1] %v693
        %v695 = vld [vmem:[%s611 + $0x80] sm:$0x1]
        %v696 = vsel %vm664, 0, %v695
        %697 = vst [vmem:[%s611 + $0x80] sm:$0x1] %v696
        %v698 = vld [vmem:[%s611 + $0x8c] sm:$0x1]
        %v699 = vsel %vm664, 0, %v698
        %700 = vst [vmem:[%s611 + $0x8c] sm:$0x1] %v699
        %v701 = vld [vmem:[%s611 + $0x98] sm:$0x1]
        %v702 = vsel %vm664, 0, %v701
        %703 = vst [vmem:[%s611 + $0x98] sm:$0x1] %v702
        %v704 = vld [vmem:[%s611 + $0xa4] sm:$0x1]
        %v705 = vsel %vm664, 0, %v704
        %706 = vst [vmem:[%s611 + $0xa4] sm:$0x1] %v705
        %v707 = vld [vmem:[%s611 + $0xb0] sm:$0x1]
        %v708 = vsel %vm664, 0, %v707
        %709 = vst [vmem:[%s611 + $0xb0] sm:$0x1] %v708
        %v710 = vld [vmem:[%s611 + $0xbc] sm:$0x1]
        %v711 = vsel %vm664, 0, %v710
        %712 = vst [vmem:[%s611 + $0xbc] sm:$0x1] %v711
        %v713 = vpack.c.bf16 %v570, %v570
        %v714 = vpack.c.bf16 %v571, %v571
        %v715 = vpack.c.bf16 %v572, %v572
        %v716 = vpack.c.bf16 %v573, %v573
        %v717 = vpack.c.bf16 %v574, %v574
        %v718 = vpack.c.bf16 %v575, %v575
        %v719 = vpack.c.bf16 %v576, %v576
        %v720 = vpack.c.bf16 %v577, %v577
        %v721 = vpack.c.bf16 %v578, %v578
        %v722 = vpack.c.bf16 %v579, %v579
        %v723 = vpack.c.bf16 %v580, %v580
        %v724 = vpack.c.bf16 %v581, %v581
        %v725 = vpack.c.bf16 %v582, %v582
        %v726 = vpack.c.bf16 %v583, %v583
        %v727 = vpack.c.bf16 %v584, %v584
        %v728 = vpack.c.bf16 %v585, %v585
        %v729 = vpack.c.bf16 %v586, %v586
        %v730 = vpack.c.bf16 %v587, %v587
        %v731 = vpack.c.bf16 %v588, %v588
        %v732 = vpack.c.bf16 %v589, %v589
        %v733 = vpack.c.bf16 %v590, %v590
        %v734 = vpack.c.bf16 %v591, %v591
        %v735 = vpack.c.bf16 %v592, %v592
        %v736 = vpack.c.bf16 %v593, %v593
        %v737 = vpack.c.bf16 %v594, %v594
        %v738 = vpack.c.bf16 %v595, %v595
        %v739 = vpack.c.bf16 %v596, %v596
        %v740 = vpack.c.bf16 %v597, %v597
        %v741 = vpack.c.bf16 %v598, %v598
        %v742 = vpack.c.bf16 %v599, %v599
        %v743 = vpack.c.bf16 %v600, %v600
        %v744 = vpack.c.bf16 %v601, %v601
        %vm745 = vsmask.f32 4368
        %vm746 = vmor %vm613, %vm745
        %v748 = vshrl.u32 %v713, 16
        %v750 = vrot.slane %v748, 7
        %v751 = vshll.u32 %v713, 16
        %v753 = vor.u32 %v750, %v751
        %v754 = vrot.slane %v750, 4
        %v756 = vshrl.u32 %v714, 16
        %v758 = vrot.slane %v756, 7
        %v759 = vshll.u32 %v714, 16
        %v761 = vor.u32 %v758, %v759
        %v762 = vsel %vm746, %v754, %v761
        %v763 = vrot.slane %v758, 4
        %v765 = vshrl.u32 %v715, 16
        %v767 = vrot.slane %v765, 7
        %v768 = vshll.u32 %v715, 16
        %v770 = vor.u32 %v767, %v768
        %v771 = vrot.slane %v767, 4
        %v773 = vshrl.u32 %v716, 16
        %v775 = vrot.slane %v773, 7
        %v776 = vshll.u32 %v716, 16
        %v778 = vor.u32 %v775, %v776
        %v779 = vsel %vm746, %v771, %v778
        %v780 = vrot.slane %v775, 4
        %v782 = vshrl.u32 %v717, 16
        %v784 = vrot.slane %v782, 7
        %v785 = vshll.u32 %v717, 16
        %v787 = vor.u32 %v784, %v785
        %v788 = vrot.slane %v784, 4
        %v790 = vshrl.u32 %v718, 16
        %v792 = vrot.slane %v790, 7
        %v793 = vshll.u32 %v718, 16
        %v795 = vor.u32 %v792, %v793
        %v796 = vsel %vm746, %v788, %v795
        %v797 = vrot.slane %v792, 4
        %v799 = vshrl.u32 %v719, 16
        %v801 = vrot.slane %v799, 7
        %v802 = vshll.u32 %v719, 16
        %v804 = vor.u32 %v801, %v802
        %v805 = vrot.slane %v801, 4
        %v807 = vshrl.u32 %v720, 16
        %v809 = vrot.slane %v807, 7
        %v810 = vshll.u32 %v720, 16
        %v812 = vor.u32 %v809, %v810
        %v813 = vsel %vm746, %v805, %v812
        %v814 = vrot.slane %v809, 4
        %v816 = vshrl.u32 %v721, 16
        %v818 = vrot.slane %v816, 7
        %v819 = vshll.u32 %v721, 16
        %v821 = vor.u32 %v818, %v819
        %v822 = vrot.slane %v818, 4
        %v824 = vshrl.u32 %v722, 16
        %v826 = vrot.slane %v824, 7
        %v827 = vshll.u32 %v722, 16
        %v829 = vor.u32 %v826, %v827
        %v830 = vsel %vm746, %v822, %v829
        %v831 = vrot.slane %v826, 4
        %v833 = vshrl.u32 %v723, 16
        %v835 = vrot.slane %v833, 7
        %v836 = vshll.u32 %v723, 16
        %v838 = vor.u32 %v835, %v836
        %v839 = vrot.slane %v835, 4
        %v841 = vshrl.u32 %v724, 16
        %v843 = vrot.slane %v841, 7
        %v844 = vshll.u32 %v724, 16
        %v846 = vor.u32 %v843, %v844
        %v847 = vsel %vm746, %v839, %v846
        %v848 = vrot.slane %v843, 4
        %v850 = vshrl.u32 %v725, 16
        %v852 = vrot.slane %v850, 7
        %v853 = vshll.u32 %v725, 16
        %v855 = vor.u32 %v852, %v853
        %v856 = vrot.slane %v852, 4
        %v858 = vshrl.u32 %v726, 16
        %v860 = vrot.slane %v858, 7
        %v861 = vshll.u32 %v726, 16
        %v863 = vor.u32 %v860, %v861
        %v864 = vsel %vm746, %v856, %v863
        %v865 = vrot.slane %v860, 4
        %v867 = vshrl.u32 %v727, 16
        %v869 = vrot.slane %v867, 7
        %v870 = vshll.u32 %v727, 16
        %v872 = vor.u32 %v869, %v870
        %v873 = vrot.slane %v869, 4
        %v875 = vshrl.u32 %v728, 16
        %v877 = vrot.slane %v875, 7
        %v878 = vshll.u32 %v728, 16
        %v880 = vor.u32 %v877, %v878
        %v881 = vsel %vm746, %v873, %v880
        %v882 = vrot.slane %v877, 4
        %v884 = vshrl.u32 %v729, 16
        %v886 = vrot.slane %v884, 7
        %v887 = vshll.u32 %v729, 16
        %v889 = vor.u32 %v886, %v887
        %v890 = vrot.slane %v886, 4
        %v892 = vshrl.u32 %v730, 16
        %v894 = vrot.slane %v892, 7
        %v895 = vshll.u32 %v730, 16
        %v897 = vor.u32 %v894, %v895
        %v898 = vsel %vm746, %v890, %v897
        %v899 = vrot.slane %v894, 4
        %v901 = vshrl.u32 %v731, 16
        %v903 = vrot.slane %v901, 7
        %v904 = vshll.u32 %v731, 16
        %v906 = vor.u32 %v903, %v904
        %v907 = vrot.slane %v903, 4
        %v909 = vshrl.u32 %v732, 16
        %v911 = vrot.slane %v909, 7
        %v912 = vshll.u32 %v732, 16
        %v914 = vor.u32 %v911, %v912
        %v915 = vsel %vm746, %v907, %v914
        %v916 = vrot.slane %v911, 4
        %v918 = vshrl.u32 %v733, 16
        %v920 = vrot.slane %v918, 7
        %v921 = vshll.u32 %v733, 16
        %v923 = vor.u32 %v920, %v921
        %v924 = vrot.slane %v920, 4
        %v926 = vshrl.u32 %v734, 16
        %v928 = vrot.slane %v926, 7
        %v929 = vshll.u32 %v734, 16
        %v931 = vor.u32 %v928, %v929
        %v932 = vsel %vm746, %v924, %v931
        %v933 = vrot.slane %v928, 4
        %v935 = vshrl.u32 %v735, 16
        %v937 = vrot.slane %v935, 7
        %v938 = vshll.u32 %v735, 16
        %v940 = vor.u32 %v937, %v938
        %v941 = vrot.slane %v937, 4
        %v943 = vshrl.u32 %v736, 16
        %v945 = vrot.slane %v943, 7
        %v946 = vshll.u32 %v736, 16
        %v948 = vor.u32 %v945, %v946
        %v949 = vsel %vm746, %v941, %v948
        %v950 = vrot.slane %v945, 4
        %v952 = vshrl.u32 %v737, 16
        %v954 = vrot.slane %v952, 7
        %v955 = vshll.u32 %v737, 16
        %v957 = vor.u32 %v954, %v955
        %v958 = vrot.slane %v954, 4
        %v960 = vshrl.u32 %v738, 16
        %v962 = vrot.slane %v960, 7
        %v963 = vshll.u32 %v738, 16
        %v965 = vor.u32 %v962, %v963
        %v966 = vsel %vm746, %v958, %v965
        %v967 = vrot.slane %v962, 4
        %v969 = vshrl.u32 %v739, 16
        %v971 = vrot.slane %v969, 7
        %v972 = vshll.u32 %v739, 16
        %v974 = vor.u32 %v971, %v972
        %v975 = vrot.slane %v971, 4
        %v977 = vshrl.u32 %v740, 16
        %v979 = vrot.slane %v977, 7
        %v980 = vshll.u32 %v740, 16
        %v982 = vor.u32 %v979, %v980
        %v983 = vsel %vm746, %v975, %v982
        %v984 = vrot.slane %v979, 4
        %v986 = vshrl.u32 %v741, 16
        %v988 = vrot.slane %v986, 7
        %v989 = vshll.u32 %v741, 16
        %v991 = vor.u32 %v988, %v989
        %v992 = vrot.slane %v988, 4
        %v994 = vshrl.u32 %v742, 16
        %v996 = vrot.slane %v994, 7
        %v997 = vshll.u32 %v742, 16
        %v999 = vor.u32 %v996, %v997
        %v1000 = vsel %vm746, %v992, %v999
        %v1001 = vrot.slane %v996, 4
        %v1003 = vshrl.u32 %v743, 16
        %v1005 = vrot.slane %v1003, 7
        %v1006 = vshll.u32 %v743, 16
        %v1008 = vor.u32 %v1005, %v1006
        %v1009 = vrot.slane %v1005, 4
        %v1011 = vshrl.u32 %v744, 16
        %v1013 = vrot.slane %v1011, 7
        %v1014 = vshll.u32 %v744, 16
        %v1016 = vor.u32 %v1013, %v1014
        %v1017 = vsel %vm746, %v1009, %v1016
        %v1018 = vrot.slane %v1013, 4
        %vm1067 = vcmask 60416
        %vm1068 = vmand %vm1067, %vm663
        %v1069 = vld [vmem:[%s611] sm:$0xf]
        %v1070 = vsel %vm1068, %v753, %v1069
        %1071 = vst [vmem:[%s611] sm:$0xf] %v1070
        %1072 = vst.msk [vmem:[%s611 + $0x4] sm:$0xf] %vm602, %v762
        %v1073 = vld [vmem:[%s611 + $0x8] sm:$0x1]
        %v1074 = vsel %vm614, %v763, %v1073
        %1075 = vst [vmem:[%s611 + $0x8] sm:$0x1] %v1074
        %v1076 = vld [vmem:[%s611 + $0xc] sm:$0xf]
        %v1077 = vsel %vm1068, %v770, %v1076
        %1078 = vst [vmem:[%s611 + $0xc] sm:$0xf] %v1077
        %1079 = vst.msk [vmem:[%s611 + $0x10] sm:$0xf] %vm602, %v779
        %v1080 = vld [vmem:[%s611 + $0x14] sm:$0x1]
        %v1081 = vsel %vm614, %v780, %v1080
        %1082 = vst [vmem:[%s611 + $0x14] sm:$0x1] %v1081
        %v1083 = vld [vmem:[%s611 + $0x18] sm:$0xf]
        %v1084 = vsel %vm1068, %v787, %v1083
        %1085 = vst [vmem:[%s611 + $0x18] sm:$0xf] %v1084
        %1086 = vst.msk [vmem:[%s611 + $0x1c] sm:$0xf] %vm602, %v796
        %v1087 = vld [vmem:[%s611 + $0x20] sm:$0x1]
        %v1088 = vsel %vm614, %v797, %v1087
        %1089 = vst [vmem:[%s611 + $0x20] sm:$0x1] %v1088
        %v1090 = vld [vmem:[%s611 + $0x24] sm:$0xf]
        %v1091 = vsel %vm1068, %v804, %v1090
        %1092 = vst [vmem:[%s611 + $0x24] sm:$0xf] %v1091
        %1093 = vst.msk [vmem:[%s611 + $0x28] sm:$0xf] %vm602, %v813
        %v1094 = vld [vmem:[%s611 + $0x2c] sm:$0x1]
        %v1095 = vsel %vm614, %v814, %v1094
        %1096 = vst [vmem:[%s611 + $0x2c] sm:$0x1] %v1095
        %v1097 = vld [vmem:[%s611 + $0x30] sm:$0xf]
        %v1098 = vsel %vm1068, %v821, %v1097
        %1099 = vst [vmem:[%s611 + $0x30] sm:$0xf] %v1098
        %1100 = vst.msk [vmem:[%s611 + $0x34] sm:$0xf] %vm602, %v830
        %v1101 = vld [vmem:[%s611 + $0x38] sm:$0x1]
        %v1102 = vsel %vm614, %v831, %v1101
        %1103 = vst [vmem:[%s611 + $0x38] sm:$0x1] %v1102
        %v1104 = vld [vmem:[%s611 + $0x3c] sm:$0xf]
        %v1105 = vsel %vm1068, %v838, %v1104
        %1106 = vst [vmem:[%s611 + $0x3c] sm:$0xf] %v1105
        %1107 = vst.msk [vmem:[%s611 + $0x40] sm:$0xf] %vm602, %v847
        %v1108 = vld [vmem:[%s611 + $0x44] sm:$0x1]
        %v1109 = vsel %vm614, %v848, %v1108
        %1110 = vst [vmem:[%s611 + $0x44] sm:$0x1] %v1109
        %v1111 = vld [vmem:[%s611 + $0x48] sm:$0xf]
        %v1112 = vsel %vm1068, %v855, %v1111
        %1113 = vst [vmem:[%s611 + $0x48] sm:$0xf] %v1112
        %1114 = vst.msk [vmem:[%s611 + $0x4c] sm:$0xf] %vm602, %v864
        %v1115 = vld [vmem:[%s611 + $0x50] sm:$0x1]
        %v1116 = vsel %vm614, %v865, %v1115
        %1117 = vst [vmem:[%s611 + $0x50] sm:$0x1] %v1116
        %v1118 = vld [vmem:[%s611 + $0x54] sm:$0xf]
        %v1119 = vsel %vm1068, %v872, %v1118
        %1120 = vst [vmem:[%s611 + $0x54] sm:$0xf] %v1119
        %1121 = vst.msk [vmem:[%s611 + $0x58] sm:$0xf] %vm602, %v881
        %v1122 = vld [vmem:[%s611 + $0x5c] sm:$0x1]
        %v1123 = vsel %vm614, %v882, %v1122
        %1124 = vst [vmem:[%s611 + $0x5c] sm:$0x1] %v1123
        %v1125 = vld [vmem:[%s611 + $0x60] sm:$0xf]
        %v1126 = vsel %vm1068, %v889, %v1125
        %1127 = vst [vmem:[%s611 + $0x60] sm:$0xf] %v1126
        %1128 = vst.msk [vmem:[%s611 + $0x64] sm:$0xf] %vm602, %v898
        %v1129 = vld [vmem:[%s611 + $0x68] sm:$0x1]
        %v1130 = vsel %vm614, %v899, %v1129
        %1131 = vst [vmem:[%s611 + $0x68] sm:$0x1] %v1130
        %v1132 = vld [vmem:[%s611 + $0x6c] sm:$0xf]
        %v1133 = vsel %vm1068, %v906, %v1132
        %1134 = vst [vmem:[%s611 + $0x6c] sm:$0xf] %v1133
        %1135 = vst.msk [vmem:[%s611 + $0x70] sm:$0xf] %vm602, %v915
        %v1136 = vld [vmem:[%s611 + $0x74] sm:$0x1]
        %v1137 = vsel %vm614, %v916, %v1136
        %1138 = vst [vmem:[%s611 + $0x74] sm:$0x1] %v1137
        %v1139 = vld [vmem:[%s611 + $0x78] sm:$0xf]
        %v1140 = vsel %vm1068, %v923, %v1139
        %1141 = vst [vmem:[%s611 + $0x78] sm:$0xf] %v1140
        %1142 = vst.msk [vmem:[%s611 + $0x7c] sm:$0xf] %vm602, %v932
        %v1143 = vld [vmem:[%s611 + $0x80] sm:$0x1]
        %v1144 = vsel %vm614, %v933, %v1143
        %1145 = vst [vmem:[%s611 + $0x80] sm:$0x1] %v1144
        %v1146 = vld [vmem:[%s611 + $0x84] sm:$0xf]
        %v1147 = vsel %vm1068, %v940, %v1146
        %1148 = vst [vmem:[%s611 + $0x84] sm:$0xf] %v1147
        %1149 = vst.msk [vmem:[%s611 + $0x88] sm:$0xf] %vm602, %v949
        %v1150 = vld [vmem:[%s611 + $0x8c] sm:$0x1]
        %v1151 = vsel %vm614, %v950, %v1150
        %1152 = vst [vmem:[%s611 + $0x8c] sm:$0x1] %v1151
        %v1153 = vld [vmem:[%s611 + $0x90] sm:$0xf]
        %v1154 = vsel %vm1068, %v957, %v1153
        %1155 = vst [vmem:[%s611 + $0x90] sm:$0xf] %v1154
        %1156 = vst.msk [vmem:[%s611 + $0x94] sm:$0xf] %vm602, %v966
        %v1157 = vld [vmem:[%s611 + $0x98] sm:$0x1]
        %v1158 = vsel %vm614, %v967, %v1157
        %1159 = vst [vmem:[%s611 + $0x98] sm:$0x1] %v1158
        %v1160 = vld [vmem:[%s611 + $0x9c] sm:$0xf]
        %v1161 = vsel %vm1068, %v974, %v1160
        %1162 = vst [vmem:[%s611 + $0x9c] sm:$0xf] %v1161
        %1163 = vst.msk [vmem:[%s611 + $0xa0] sm:$0xf] %vm602, %v983
        %v1164 = vld [vmem:[%s611 + $0xa4] sm:$0x1]
        %v1165 = vsel %vm614, %v984, %v1164
        %1166 = vst [vmem:[%s611 + $0xa4] sm:$0x1] %v1165
        %v1167 = vld [vmem:[%s611 + $0xa8] sm:$0xf]
        %v1168 = vsel %vm1068, %v991, %v1167
        %1169 = vst [vmem:[%s611 + $0xa8] sm:$0xf] %v1168
        %1170 = vst.msk [vmem:[%s611 + $0xac] sm:$0xf] %vm602, %v1000
        %v1171 = vld [vmem:[%s611 + $0xb0] sm:$0x1]
        %v1172 = vsel %vm614, %v1001, %v1171
        %1173 = vst [vmem:[%s611 + $0xb0] sm:$0x1] %v1172
        %v1174 = vld [vmem:[%s611 + $0xb4] sm:$0xf]
        %v1175 = vsel %vm1068, %v1008, %v1174
        %1176 = vst [vmem:[%s611 + $0xb4] sm:$0xf] %v1175
        %1177 = vst.msk [vmem:[%s611 + $0xb8] sm:$0xf] %vm602, %v1017
        %v1178 = vld [vmem:[%s611 + $0xbc] sm:$0x1]
        %v1179 = vsel %vm614, %v1018, %v1178
        %1180 = vst [vmem:[%s611 + $0xbc] sm:$0x1] %v1179
        %v1181 = vld [vmem:[#allocation2] sm:$0xf]
        %v1182 = vld [vmem:[#allocation2 + $0x4] sm:$0xf]
        %v1183 = vld [vmem:[#allocation2 + $0xc] sm:$0xf]
        %v1184 = vld [vmem:[#allocation2 + $0x10] sm:$0xf]
        %v1185 = vld [vmem:[#allocation2 + $0x18] sm:$0xf]
        %v1186 = vld [vmem:[#allocation2 + $0x1c] sm:$0xf]
        %v1187 = vld [vmem:[#allocation2 + $0x24] sm:$0xf]
        %v1188 = vld [vmem:[#allocation2 + $0x28] sm:$0xf]
        %v1189 = vld [vmem:[#allocation2 + $0x30] sm:$0xf]
        %v1190 = vld [vmem:[#allocation2 + $0x34] sm:$0xf]
        %v1191 = vld [vmem:[#allocation2 + $0x3c] sm:$0xf]
        %v1192 = vld [vmem:[#allocation2 + $0x40] sm:$0xf]
        %v1193 = vld [vmem:[#allocation2 + $0x48] sm:$0xf]
        %v1194 = vld [vmem:[#allocation2 + $0x4c] sm:$0xf]
        %v1195 = vld [vmem:[#allocation2 + $0x54] sm:$0xf]
        %v1196 = vld [vmem:[#allocation2 + $0x58] sm:$0xf]
        %v1197 = vld [vmem:[#allocation2 + $0x60] sm:$0xf]
        %v1198 = vld [vmem:[#allocation2 + $0x64] sm:$0xf]
        %v1199 = vld [vmem:[#allocation2 + $0x6c] sm:$0xf]
        %v1200 = vld [vmem:[#allocation2 + $0x70] sm:$0xf]
        %v1201 = vld [vmem:[#allocation2 + $0x78] sm:$0xf]
        %v1202 = vld [vmem:[#allocation2 + $0x7c] sm:$0xf]
        %v1203 = vld [vmem:[#allocation2 + $0x84] sm:$0xf]
        %v1204 = vld [vmem:[#allocation2 + $0x88] sm:$0xf]
        %v1205 = vld [vmem:[#allocation2 + $0x90] sm:$0xf]
        %v1206 = vld [vmem:[#allocation2 + $0x94] sm:$0xf]
        %v1207 = vld [vmem:[#allocation2 + $0x9c] sm:$0xf]
        %v1208 = vld [vmem:[#allocation2 + $0xa0] sm:$0xf]
        %v1209 = vld [vmem:[#allocation2 + $0xa8] sm:$0xf]
        %v1210 = vld [vmem:[#allocation2 + $0xac] sm:$0xf]
        %v1211 = vld [vmem:[#allocation2 + $0xb4] sm:$0xf]
        %v1212 = vld [vmem:[#allocation2 + $0xb8] sm:$0xf]
        %v1213 = vld [vmem:[#allocation2 + $0x8] sm:$0x1]
        %v1214 = vld [vmem:[#allocation2 + $0x14] sm:$0x1]
        %v1215 = vld [vmem:[#allocation2 + $0x20] sm:$0x1]
        %v1216 = vld [vmem:[#allocation2 + $0x2c] sm:$0x1]
        %v1217 = vld [vmem:[#allocation2 + $0x38] sm:$0x1]
        %v1218 = vld [vmem:[#allocation2 + $0x44] sm:$0x1]
        %v1219 = vld [vmem:[#allocation2 + $0x50] sm:$0x1]
        %v1220 = vld [vmem:[#allocation2 + $0x5c] sm:$0x1]
        %v1221 = vld [vmem:[#allocation2 + $0x68] sm:$0x1]
        %v1222 = vld [vmem:[#allocation2 + $0x74] sm:$0x1]
        %v1223 = vld [vmem:[#allocation2 + $0x80] sm:$0x1]
        %v1224 = vld [vmem:[#allocation2 + $0x8c] sm:$0x1]
        %v1225 = vld [vmem:[#allocation2 + $0x98] sm:$0x1]
        %v1226 = vld [vmem:[#allocation2 + $0xa4] sm:$0x1]
        %v1227 = vld [vmem:[#allocation2 + $0xb0] sm:$0x1]
        %v1228 = vld [vmem:[#allocation2 + $0xbc] sm:$0x1]
        %v1229 = vld [vmem:[#allocation2] sm:$0xe]
        %v1230 = vld [vmem:[#allocation2 + $0xc] sm:$0xe]
        %v1231 = vld [vmem:[#allocation2 + $0x18] sm:$0xe]
        %v1232 = vld [vmem:[#allocation2 + $0x24] sm:$0xe]
        %v1233 = vld [vmem:[#allocation2 + $0x30] sm:$0xe]
        %v1234 = vld [vmem:[#allocation2 + $0x3c] sm:$0xe]
        %v1235 = vld [vmem:[#allocation2 + $0x48] sm:$0xe]
        %v1236 = vld [vmem:[#allocation2 + $0x54] sm:$0xe]
        %v1237 = vld [vmem:[#allocation2 + $0x60] sm:$0xe]
        %v1238 = vld [vmem:[#allocation2 + $0x6c] sm:$0xe]
        %v1239 = vld [vmem:[#allocation2 + $0x78] sm:$0xe]
        %v1240 = vld [vmem:[#allocation2 + $0x84] sm:$0xe]
        %v1241 = vld [vmem:[#allocation2 + $0x90] sm:$0xe]
        %v1242 = vld [vmem:[#allocation2 + $0x9c] sm:$0xe]
        %v1243 = vld [vmem:[#allocation2 + $0xa8] sm:$0xe]
        %v1244 = vld [vmem:[#allocation2 + $0xb4] sm:$0xe]
        %v1245 = vld [vmem:[%s611] sm:$0xf]
        %v1246 = vld [vmem:[%s611 + $0x4] sm:$0xf]
        %v1247 = vld [vmem:[%s611 + $0xc] sm:$0xf]
        %v1248 = vld [vmem:[%s611 + $0x10] sm:$0xf]
        %v1249 = vld [vmem:[%s611 + $0x18] sm:$0xf]
        %v1250 = vld [vmem:[%s611 + $0x1c] sm:$0xf]
        %v1251 = vld [vmem:[%s611 + $0x24] sm:$0xf]
        %v1252 = vld [vmem:[%s611 + $0x28] sm:$0xf]
        %v1253 = vld [vmem:[%s611 + $0x30] sm:$0xf]
        %v1254 = vld [vmem:[%s611 + $0x34] sm:$0xf]
        %v1255 = vld [vmem:[%s611 + $0x3c] sm:$0xf]
        %v1256 = vld [vmem:[%s611 + $0x40] sm:$0xf]
        %v1257 = vld [vmem:[%s611 + $0x48] sm:$0xf]
        %v1258 = vld [vmem:[%s611 + $0x4c] sm:$0xf]
        %v1259 = vld [vmem:[%s611 + $0x54] sm:$0xf]
        %v1260 = vld [vmem:[%s611 + $0x58] sm:$0xf]
        %v1261 = vld [vmem:[%s611 + $0x60] sm:$0xf]
        %v1262 = vld [vmem:[%s611 + $0x64] sm:$0xf]
        %v1263 = vld [vmem:[%s611 + $0x6c] sm:$0xf]
        %v1264 = vld [vmem:[%s611 + $0x70] sm:$0xf]
        %v1265 = vld [vmem:[%s611 + $0x78] sm:$0xf]
        %v1266 = vld [vmem:[%s611 + $0x7c] sm:$0xf]
        %v1267 = vld [vmem:[%s611 + $0x84] sm:$0xf]
        %v1268 = vld [vmem:[%s611 + $0x88] sm:$0xf]
        %v1269 = vld [vmem:[%s611 + $0x90] sm:$0xf]
        %v1270 = vld [vmem:[%s611 + $0x94] sm:$0xf]
        %v1271 = vld [vmem:[%s611 + $0x9c] sm:$0xf]
        %v1272 = vld [vmem:[%s611 + $0xa0] sm:$0xf]
        %v1273 = vld [vmem:[%s611 + $0xa8] sm:$0xf]
        %v1274 = vld [vmem:[%s611 + $0xac] sm:$0xf]
        %v1275 = vld [vmem:[%s611 + $0xb4] sm:$0xf]
        %v1276 = vld [vmem:[%s611 + $0xb8] sm:$0xf]
        %v1277 = vld [vmem:[%s611 + $0x8] sm:$0x1]
        %v1278 = vld [vmem:[%s611 + $0x14] sm:$0x1]
        %v1279 = vld [vmem:[%s611 + $0x20] sm:$0x1]
        %v1280 = vld [vmem:[%s611 + $0x2c] sm:$0x1]
        %v1281 = vld [vmem:[%s611 + $0x38] sm:$0x1]
        %v1282 = vld [vmem:[%s611 + $0x44] sm:$0x1]
        %v1283 = vld [vmem:[%s611 + $0x50] sm:$0x1]
        %v1284 = vld [vmem:[%s611 + $0x5c] sm:$0x1]
        %v1285 = vld [vmem:[%s611 + $0x68] sm:$0x1]
        %v1286 = vld [vmem:[%s611 + $0x74] sm:$0x1]
        %v1287 = vld [vmem:[%s611 + $0x80] sm:$0x1]
        %v1288 = vld [vmem:[%s611 + $0x8c] sm:$0x1]
        %v1289 = vld [vmem:[%s611 + $0x98] sm:$0x1]
        %v1290 = vld [vmem:[%s611 + $0xa4] sm:$0x1]
        %v1291 = vld [vmem:[%s611 + $0xb0] sm:$0x1]
        %v1292 = vld [vmem:[%s611 + $0xbc] sm:$0x1]
        %v1293 = vld [vmem:[%s611] sm:$0xe]
        %v1294 = vld [vmem:[%s611 + $0xc] sm:$0xe]
        %v1295 = vld [vmem:[%s611 + $0x18] sm:$0xe]
        %v1296 = vld [vmem:[%s611 + $0x24] sm:$0xe]
        %v1297 = vld [vmem:[%s611 + $0x30] sm:$0xe]
        %v1298 = vld [vmem:[%s611 + $0x3c] sm:$0xe]
        %v1299 = vld [vmem:[%s611 + $0x48] sm:$0xe]
        %v1300 = vld [vmem:[%s611 + $0x54] sm:$0xe]
        %v1301 = vld [vmem:[%s611 + $0x60] sm:$0xe]
        %v1302 = vld [vmem:[%s611 + $0x6c] sm:$0xe]
        %v1303 = vld [vmem:[%s611 + $0x78] sm:$0xe]
        %v1304 = vld [vmem:[%s611 + $0x84] sm:$0xe]
        %v1305 = vld [vmem:[%s611 + $0x90] sm:$0xe]
        %v1306 = vld [vmem:[%s611 + $0x9c] sm:$0xe]
        %v1307 = vld [vmem:[%s611 + $0xa8] sm:$0xe]
        %v1308 = vld [vmem:[%s611 + $0xb4] sm:$0xe]
        %s1309 = scalar_lea.vmem [#allocation2], 24
        %v1310 = vld [vmem:[%s1309] sm:$0xf]
        %v1311 = vld [vmem:[%s1309 + $0x4] sm:$0xf]
        %v1312 = vld [vmem:[%s1309 + $0xc] sm:$0xf]
        %v1313 = vld [vmem:[%s1309 + $0x10] sm:$0xf]
        %v1314 = vld [vmem:[%s1309 + $0x18] sm:$0xf]
        %v1315 = vld [vmem:[%s1309 + $0x1c] sm:$0xf]
        %v1316 = vld [vmem:[%s1309 + $0x24] sm:$0xf]
        %v1317 = vld [vmem:[%s1309 + $0x28] sm:$0xf]
        %v1318 = vld [vmem:[%s1309 + $0x30] sm:$0xf]
        %v1319 = vld [vmem:[%s1309 + $0x34] sm:$0xf]
        %v1320 = vld [vmem:[%s1309 + $0x3c] sm:$0xf]
        %v1321 = vld [vmem:[%s1309 + $0x40] sm:$0xf]
        %v1322 = vld [vmem:[%s1309 + $0x48] sm:$0xf]
        %v1323 = vld [vmem:[%s1309 + $0x4c] sm:$0xf]
        %v1324 = vld [vmem:[%s1309 + $0x54] sm:$0xf]
        %v1325 = vld [vmem:[%s1309 + $0x58] sm:$0xf]
        %v1326 = vld [vmem:[%s1309 + $0x60] sm:$0xf]
        %v1327 = vld [vmem:[%s1309 + $0x64] sm:$0xf]
        %v1328 = vld [vmem:[%s1309 + $0x6c] sm:$0xf]
        %v1329 = vld [vmem:[%s1309 + $0x70] sm:$0xf]
        %v1330 = vld [vmem:[%s1309 + $0x78] sm:$0xf]
        %v1331 = vld [vmem:[%s1309 + $0x7c] sm:$0xf]
        %v1332 = vld [vmem:[%s1309 + $0x84] sm:$0xf]
        %v1333 = vld [vmem:[%s1309 + $0x88] sm:$0xf]
        %v1334 = vld [vmem:[%s1309 + $0x90] sm:$0xf]
        %v1335 = vld [vmem:[%s1309 + $0x94] sm:$0xf]
        %v1336 = vld [vmem:[%s1309 + $0x9c] sm:$0xf]
        %v1337 = vld [vmem:[%s1309 + $0xa0] sm:$0xf]
        %v1338 = vld [vmem:[%s1309 + $0xa8] sm:$0xf]
        %v1339 = vld [vmem:[%s1309 + $0xac] sm:$0xf]
        %v1340 = vld [vmem:[%s1309 + $0xb4] sm:$0xf]
        %v1341 = vld [vmem:[%s1309 + $0xb8] sm:$0xf]
        %v1342 = vld [vmem:[%s1309 + $0x8] sm:$0x1]
        %v1343 = vld [vmem:[%s1309 + $0x14] sm:$0x1]
        %v1344 = vld [vmem:[%s1309 + $0x20] sm:$0x1]
        %v1345 = vld [vmem:[%s1309 + $0x2c] sm:$0x1]
        %v1346 = vld [vmem:[%s1309 + $0x38] sm:$0x1]
        %v1347 = vld [vmem:[%s1309 + $0x44] sm:$0x1]
        %v1348 = vld [vmem:[%s1309 + $0x50] sm:$0x1]
        %v1349 = vld [vmem:[%s1309 + $0x5c] sm:$0x1]
        %v1350 = vld [vmem:[%s1309 + $0x68] sm:$0x1]
        %v1351 = vld [vmem:[%s1309 + $0x74] sm:$0x1]
        %v1352 = vld [vmem:[%s1309 + $0x80] sm:$0x1]
        %v1353 = vld [vmem:[%s1309 + $0x8c] sm:$0x1]
        %v1354 = vld [vmem:[%s1309 + $0x98] sm:$0x1]
        %v1355 = vld [vmem:[%s1309 + $0xa4] sm:$0x1]
        %v1356 = vld [vmem:[%s1309 + $0xb0] sm:$0x1]
        %v1357 = vld [vmem:[%s1309 + $0xbc] sm:$0x1]
        %v1358 = vld [vmem:[%s1309] sm:$0xe]
        %v1359 = vld [vmem:[%s1309 + $0xc] sm:$0xe]
        %v1360 = vld [vmem:[%s1309 + $0x18] sm:$0xe]
        %v1361 = vld [vmem:[%s1309 + $0x24] sm:$0xe]
        %v1362 = vld [vmem:[%s1309 + $0x30] sm:$0xe]
        %v1363 = vld [vmem:[%s1309 + $0x3c] sm:$0xe]
        %v1364 = vld [vmem:[%s1309 + $0x48] sm:$0xe]
        %v1365 = vld [vmem:[%s1309 + $0x54] sm:$0xe]
        %v1366 = vld [vmem:[%s1309 + $0x60] sm:$0xe]
        %v1367 = vld [vmem:[%s1309 + $0x6c] sm:$0xe]
        %v1368 = vld [vmem:[%s1309 + $0x78] sm:$0xe]
        %v1369 = vld [vmem:[%s1309 + $0x84] sm:$0xe]
        %v1370 = vld [vmem:[%s1309 + $0x90] sm:$0xe]
        %v1371 = vld [vmem:[%s1309 + $0x9c] sm:$0xe]
        %v1372 = vld [vmem:[%s1309 + $0xa8] sm:$0xe]
        %v1373 = vld [vmem:[%s1309 + $0xb4] sm:$0xe]
        %v1406 = vunpack.c.l.b16 %v1181
        %v1407 = vunpack.c.l.b16 %v1182
        %v1408 = vunpack.c.l.b16 %v1183
        %v1409 = vunpack.c.l.b16 %v1184
        %v1410 = vunpack.c.l.b16 %v1185
        %v1411 = vunpack.c.l.b16 %v1186
        %v1412 = vunpack.c.l.b16 %v1187
        %v1413 = vunpack.c.l.b16 %v1188
        %v1414 = vunpack.c.l.b16 %v1189
        %v1415 = vunpack.c.l.b16 %v1190
        %v1416 = vunpack.c.l.b16 %v1191
        %v1417 = vunpack.c.l.b16 %v1192
        %v1418 = vunpack.c.l.b16 %v1193
        %v1419 = vunpack.c.l.b16 %v1194
        %v1420 = vunpack.c.l.b16 %v1195
        %v1421 = vunpack.c.l.b16 %v1196
        %v1422 = vunpack.c.l.b16 %v1197
        %v1423 = vunpack.c.l.b16 %v1198
        %v1424 = vunpack.c.l.b16 %v1199
        %v1425 = vunpack.c.l.b16 %v1200
        %v1426 = vunpack.c.l.b16 %v1201
        %v1427 = vunpack.c.l.b16 %v1202
        %v1428 = vunpack.c.l.b16 %v1203
        %v1429 = vunpack.c.l.b16 %v1204
        %v1430 = vunpack.c.l.b16 %v1205
        %v1431 = vunpack.c.l.b16 %v1206
        %v1432 = vunpack.c.l.b16 %v1207
        %v1433 = vunpack.c.l.b16 %v1208
        %v1434 = vunpack.c.l.b16 %v1209
        %v1435 = vunpack.c.l.b16 %v1210
        %v1436 = vunpack.c.l.b16 %v1211
        %v1437 = vunpack.c.l.b16 %v1212
        %v1438 = vpack.c.b16 %v1407, %v1406
        %v1439 = vpack.c.b16 %v1409, %v1408
        %v1440 = vpack.c.b16 %v1411, %v1410
        %v1441 = vpack.c.b16 %v1413, %v1412
        %v1442 = vpack.c.b16 %v1415, %v1414
        %v1443 = vpack.c.b16 %v1417, %v1416
        %v1444 = vpack.c.b16 %v1419, %v1418
        %v1445 = vpack.c.b16 %v1421, %v1420
        %v1446 = vpack.c.b16 %v1423, %v1422
        %v1447 = vpack.c.b16 %v1425, %v1424
        %v1448 = vpack.c.b16 %v1427, %v1426
        %v1449 = vpack.c.b16 %v1429, %v1428
        %v1450 = vpack.c.b16 %v1431, %v1430
        %v1451 = vpack.c.b16 %v1433, %v1432
        %v1452 = vpack.c.b16 %v1435, %v1434
        %v1453 = vpack.c.b16 %v1437, %v1436
        %v1470 = vunpack.c.l.b16 %v1213
        %v1471 = vunpack.c.l.b16 %v1214
        %v1472 = vunpack.c.l.b16 %v1215
        %v1473 = vunpack.c.l.b16 %v1216
        %v1474 = vunpack.c.l.b16 %v1217
        %v1475 = vunpack.c.l.b16 %v1218
        %v1476 = vunpack.c.l.b16 %v1219
        %v1477 = vunpack.c.l.b16 %v1220
        %v1478 = vunpack.c.l.b16 %v1221
        %v1479 = vunpack.c.l.b16 %v1222
        %v1480 = vunpack.c.l.b16 %v1223
        %v1481 = vunpack.c.l.b16 %v1224
        %v1482 = vunpack.c.l.b16 %v1225
        %v1483 = vunpack.c.l.b16 %v1226
        %v1484 = vunpack.c.l.b16 %v1227
        %v1485 = vunpack.c.l.b16 %v1228
        %v1486 = vpack.c.b16 %v1470, %v1470
        %v1487 = vpack.c.b16 %v1471, %v1471
        %v1488 = vpack.c.b16 %v1472, %v1472
        %v1489 = vpack.c.b16 %v1473, %v1473
        %v1490 = vpack.c.b16 %v1474, %v1474
        %v1491 = vpack.c.b16 %v1475, %v1475
        %v1492 = vpack.c.b16 %v1476, %v1476
        %v1493 = vpack.c.b16 %v1477, %v1477
        %v1494 = vpack.c.b16 %v1478, %v1478
        %v1495 = vpack.c.b16 %v1479, %v1479
        %v1496 = vpack.c.b16 %v1480, %v1480
        %v1497 = vpack.c.b16 %v1481, %v1481
        %v1498 = vpack.c.b16 %v1482, %v1482
        %v1499 = vpack.c.b16 %v1483, %v1483
        %v1500 = vpack.c.b16 %v1484, %v1484
        %v1501 = vpack.c.b16 %v1485, %v1485
        %vm1502 = vsmask.f32 7424
        %v1504 = vshrl.u32 %v1438, 16
        %v1506 = vshll.u32 %v1438, 16
        %v1508 = vrot.slane %v1506, 1
        %v1509 = vor.u32 %v1504, %v1508
        %v1511 = vshll.u32 %v1486, 16
        %v1513 = vrot.slane %v1511, 1
        %v1514 = vsel %vm1502, %v1509, %v1513
        %v1516 = vshrl.u32 %v1439, 16
        %v1518 = vshll.u32 %v1439, 16
        %v1520 = vrot.slane %v1518, 1
        %v1521 = vor.u32 %v1516, %v1520
        %v1523 = vshll.u32 %v1487, 16
        %v1525 = vrot.slane %v1523, 1
        %v1526 = vsel %vm1502, %v1521, %v1525
        %v1528 = vshrl.u32 %v1440, 16
        %v1530 = vshll.u32 %v1440, 16
        %v1532 = vrot.slane %v1530, 1
        %v1533 = vor.u32 %v1528, %v1532
        %v1535 = vshll.u32 %v1488, 16
        %v1537 = vrot.slane %v1535, 1
        %v1538 = vsel %vm1502, %v1533, %v1537
        %v1540 = vshrl.u32 %v1441, 16
        %v1542 = vshll.u32 %v1441, 16
        %v1544 = vrot.slane %v1542, 1
        %v1545 = vor.u32 %v1540, %v1544
        %v1547 = vshll.u32 %v1489, 16
        %v1549 = vrot.slane %v1547, 1
        %v1550 = vsel %vm1502, %v1545, %v1549
        %v1552 = vshrl.u32 %v1442, 16
        %v1554 = vshll.u32 %v1442, 16
        %v1556 = vrot.slane %v1554, 1
        %v1557 = vor.u32 %v1552, %v1556
        %v1559 = vshll.u32 %v1490, 16
        %v1561 = vrot.slane %v1559, 1
        %v1562 = vsel %vm1502, %v1557, %v1561
        %v1564 = vshrl.u32 %v1443, 16
        %v1566 = vshll.u32 %v1443, 16
        %v1568 = vrot.slane %v1566, 1
        %v1569 = vor.u32 %v1564, %v1568
        %v1571 = vshll.u32 %v1491, 16
        %v1573 = vrot.slane %v1571, 1
        %v1574 = vsel %vm1502, %v1569, %v1573
        %v1576 = vshrl.u32 %v1444, 16
        %v1578 = vshll.u32 %v1444, 16
        %v1580 = vrot.slane %v1578, 1
        %v1581 = vor.u32 %v1576, %v1580
        %v1583 = vshll.u32 %v1492, 16
        %v1585 = vrot.slane %v1583, 1
        %v1586 = vsel %vm1502, %v1581, %v1585
        %v1588 = vshrl.u32 %v1445, 16
        %v1590 = vshll.u32 %v1445, 16
        %v1592 = vrot.slane %v1590, 1
        %v1593 = vor.u32 %v1588, %v1592
        %v1595 = vshll.u32 %v1493, 16
        %v1597 = vrot.slane %v1595, 1
        %v1598 = vsel %vm1502, %v1593, %v1597
        %v1600 = vshrl.u32 %v1446, 16
        %v1602 = vshll.u32 %v1446, 16
        %v1604 = vrot.slane %v1602, 1
        %v1605 = vor.u32 %v1600, %v1604
        %v1607 = vshll.u32 %v1494, 16
        %v1609 = vrot.slane %v1607, 1
        %v1610 = vsel %vm1502, %v1605, %v1609
        %v1612 = vshrl.u32 %v1447, 16
        %v1614 = vshll.u32 %v1447, 16
        %v1616 = vrot.slane %v1614, 1
        %v1617 = vor.u32 %v1612, %v1616
        %v1619 = vshll.u32 %v1495, 16
        %v1621 = vrot.slane %v1619, 1
        %v1622 = vsel %vm1502, %v1617, %v1621
        %v1624 = vshrl.u32 %v1448, 16
        %v1626 = vshll.u32 %v1448, 16
        %v1628 = vrot.slane %v1626, 1
        %v1629 = vor.u32 %v1624, %v1628
        %v1631 = vshll.u32 %v1496, 16
        %v1633 = vrot.slane %v1631, 1
        %v1634 = vsel %vm1502, %v1629, %v1633
        %v1636 = vshrl.u32 %v1449, 16
        %v1638 = vshll.u32 %v1449, 16
        %v1640 = vrot.slane %v1638, 1
        %v1641 = vor.u32 %v1636, %v1640
        %v1643 = vshll.u32 %v1497, 16
        %v1645 = vrot.slane %v1643, 1
        %v1646 = vsel %vm1502, %v1641, %v1645
        %v1648 = vshrl.u32 %v1450, 16
        %v1650 = vshll.u32 %v1450, 16
        %v1652 = vrot.slane %v1650, 1
        %v1653 = vor.u32 %v1648, %v1652
        %v1655 = vshll.u32 %v1498, 16
        %v1657 = vrot.slane %v1655, 1
        %v1658 = vsel %vm1502, %v1653, %v1657
        %v1660 = vshrl.u32 %v1451, 16
        %v1662 = vshll.u32 %v1451, 16
        %v1664 = vrot.slane %v1662, 1
        %v1665 = vor.u32 %v1660, %v1664
        %v1667 = vshll.u32 %v1499, 16
        %v1669 = vrot.slane %v1667, 1
        %v1670 = vsel %vm1502, %v1665, %v1669
        %v1672 = vshrl.u32 %v1452, 16
        %v1674 = vshll.u32 %v1452, 16
        %v1676 = vrot.slane %v1674, 1
        %v1677 = vor.u32 %v1672, %v1676
        %v1679 = vshll.u32 %v1500, 16
        %v1681 = vrot.slane %v1679, 1
        %v1682 = vsel %vm1502, %v1677, %v1681
        %v1684 = vshrl.u32 %v1453, 16
        %v1686 = vshll.u32 %v1453, 16
        %v1688 = vrot.slane %v1686, 1
        %v1689 = vor.u32 %v1684, %v1688
        %v1691 = vshll.u32 %v1501, 16
        %v1693 = vrot.slane %v1691, 1
        %v1694 = vsel %vm1502, %v1689, %v1693
        %1695 = vrot.lane.b32.xlu0 %v1514, 8
        %v1696 = vpop.permute.xlu0 %1695
        %1697 = vrot.lane.b32.xlu0 %v1526, 8
        %v1698 = vpop.permute.xlu0 %1697
        %1699 = vrot.lane.b32.xlu0 %v1538, 8
        %v1700 = vpop.permute.xlu0 %1699
        %1701 = vrot.lane.b32.xlu0 %v1550, 8
        %v1702 = vpop.permute.xlu0 %1701
        %1703 = vrot.lane.b32.xlu0 %v1562, 8
        %v1704 = vpop.permute.xlu0 %1703
        %1705 = vrot.lane.b32.xlu0 %v1574, 8
        %v1706 = vpop.permute.xlu0 %1705
        %1707 = vrot.lane.b32.xlu0 %v1586, 8
        %v1708 = vpop.permute.xlu0 %1707
        %1709 = vrot.lane.b32.xlu0 %v1598, 8
        %v1710 = vpop.permute.xlu0 %1709
        %1711 = vrot.lane.b32.xlu0 %v1610, 8
        %v1712 = vpop.permute.xlu0 %1711
        %1713 = vrot.lane.b32.xlu0 %v1622, 8
        %v1714 = vpop.permute.xlu0 %1713
        %1715 = vrot.lane.b32.xlu0 %v1634, 8
        %v1716 = vpop.permute.xlu0 %1715
        %1717 = vrot.lane.b32.xlu0 %v1646, 8
        %v1718 = vpop.permute.xlu0 %1717
        %1719 = vrot.lane.b32.xlu0 %v1658, 8
        %v1720 = vpop.permute.xlu0 %1719
        %1721 = vrot.lane.b32.xlu0 %v1670, 8
        %v1722 = vpop.permute.xlu0 %1721
        %1723 = vrot.lane.b32.xlu0 %v1682, 8
        %v1724 = vpop.permute.xlu0 %1723
        %1725 = vrot.lane.b32.xlu0 %v1694, 8
        %v1726 = vpop.permute.xlu0 %1725
        %v1743 = vunpack.c.l.b16 %v1229
        %v1744 = vunpack.c.l.b16 %v1230
        %v1745 = vunpack.c.l.b16 %v1231
        %v1746 = vunpack.c.l.b16 %v1232
        %v1747 = vunpack.c.l.b16 %v1233
        %v1748 = vunpack.c.l.b16 %v1234
        %v1749 = vunpack.c.l.b16 %v1235
        %v1750 = vunpack.c.l.b16 %v1236
        %v1751 = vunpack.c.l.b16 %v1237
        %v1752 = vunpack.c.l.b16 %v1238
        %v1753 = vunpack.c.l.b16 %v1239
        %v1754 = vunpack.c.l.b16 %v1240
        %v1755 = vunpack.c.l.b16 %v1241
        %v1756 = vunpack.c.l.b16 %v1242
        %v1757 = vunpack.c.l.b16 %v1243
        %v1758 = vunpack.c.l.b16 %v1244
        %v1759 = vpack.c.b16 %v1407, %v1743
        %v1760 = vpack.c.b16 %v1409, %v1744
        %v1761 = vpack.c.b16 %v1411, %v1745
        %v1762 = vpack.c.b16 %v1413, %v1746
        %v1763 = vpack.c.b16 %v1415, %v1747
        %v1764 = vpack.c.b16 %v1417, %v1748
        %v1765 = vpack.c.b16 %v1419, %v1749
        %v1766 = vpack.c.b16 %v1421, %v1750
        %v1767 = vpack.c.b16 %v1423, %v1751
        %v1768 = vpack.c.b16 %v1425, %v1752
        %v1769 = vpack.c.b16 %v1427, %v1753
        %v1770 = vpack.c.b16 %v1429, %v1754
        %v1771 = vpack.c.b16 %v1431, %v1755
        %v1772 = vpack.c.b16 %v1433, %v1756
        %v1773 = vpack.c.b16 %v1435, %v1757
        %v1774 = vpack.c.b16 %v1437, %v1758
        %vm1775 = vcmask 1046528
        %v1776 = vrot.slane %v1759, 1
        %v1777 = vrot.slane %v1486, 1
        %v1778 = vsel %vm1775, %v1776, %v1777
        %v1779 = vrot.slane %v1760, 1
        %v1780 = vrot.slane %v1487, 1
        %v1781 = vsel %vm1775, %v1779, %v1780
        %v1782 = vrot.slane %v1761, 1
        %v1783 = vrot.slane %v1488, 1
        %v1784 = vsel %vm1775, %v1782, %v1783
        %v1785 = vrot.slane %v1762, 1
        %v1786 = vrot.slane %v1489, 1
        %v1787 = vsel %vm1775, %v1785, %v1786
        %v1788 = vrot.slane %v1763, 1
        %v1789 = vrot.slane %v1490, 1
        %v1790 = vsel %vm1775, %v1788, %v1789
        %v1791 = vrot.slane %v1764, 1
        %v1792 = vrot.slane %v1491, 1
        %v1793 = vsel %vm1775, %v1791, %v1792
        %v1794 = vrot.slane %v1765, 1
        %v1795 = vrot.slane %v1492, 1
        %v1796 = vsel %vm1775, %v1794, %v1795
        %v1797 = vrot.slane %v1766, 1
        %v1798 = vrot.slane %v1493, 1
        %v1799 = vsel %vm1775, %v1797, %v1798
        %v1800 = vrot.slane %v1767, 1
        %v1801 = vrot.slane %v1494, 1
        %v1802 = vsel %vm1775, %v1800, %v1801
        %v1803 = vrot.slane %v1768, 1
        %v1804 = vrot.slane %v1495, 1
        %v1805 = vsel %vm1775, %v1803, %v1804
        %v1806 = vrot.slane %v1769, 1
        %v1807 = vrot.slane %v1496, 1
        %v1808 = vsel %vm1775, %v1806, %v1807
        %v1809 = vrot.slane %v1770, 1
        %v1810 = vrot.slane %v1497, 1
        %v1811 = vsel %vm1775, %v1809, %v1810
        %v1812 = vrot.slane %v1771, 1
        %v1813 = vrot.slane %v1498, 1
        %v1814 = vsel %vm1775, %v1812, %v1813
        %v1815 = vrot.slane %v1772, 1
        %v1816 = vrot.slane %v1499, 1
        %v1817 = vsel %vm1775, %v1815, %v1816
        %v1818 = vrot.slane %v1773, 1
        %v1819 = vrot.slane %v1500, 1
        %v1820 = vsel %vm1775, %v1818, %v1819
        %v1821 = vrot.slane %v1774, 1
        %v1822 = vrot.slane %v1501, 1
        %v1823 = vsel %vm1775, %v1821, %v1822
        %1824 = vrot.lane.b32.xlu0 %v1778, 16
        %v1825 = vpop.permute.xlu0 %1824
        %1826 = vrot.lane.b32.xlu0 %v1781, 16
        %v1827 = vpop.permute.xlu0 %1826
        %1828 = vrot.lane.b32.xlu0 %v1784, 16
        %v1829 = vpop.permute.xlu0 %1828
        %1830 = vrot.lane.b32.xlu0 %v1787, 16
        %v1831 = vpop.permute.xlu0 %1830
        %1832 = vrot.lane.b32.xlu0 %v1790, 16
        %v1833 = vpop.permute.xlu0 %1832
        %1834 = vrot.lane.b32.xlu0 %v1793, 16
        %v1835 = vpop.permute.xlu0 %1834
        %1836 = vrot.lane.b32.xlu0 %v1796, 16
        %v1837 = vpop.permute.xlu0 %1836
        %1838 = vrot.lane.b32.xlu0 %v1799, 16
        %v1839 = vpop.permute.xlu0 %1838
        %1840 = vrot.lane.b32.xlu0 %v1802, 16
        %v1841 = vpop.permute.xlu0 %1840
        %1842 = vrot.lane.b32.xlu0 %v1805, 16
        %v1843 = vpop.permute.xlu0 %1842
        %1844 = vrot.lane.b32.xlu0 %v1808, 16
        %v1845 = vpop.permute.xlu0 %1844
        %1846 = vrot.lane.b32.xlu0 %v1811, 16
        %v1847 = vpop.permute.xlu0 %1846
        %1848 = vrot.lane.b32.xlu0 %v1814, 16
        %v1849 = vpop.permute.xlu0 %1848
        %1850 = vrot.lane.b32.xlu0 %v1817, 16
        %v1851 = vpop.permute.xlu0 %1850
        %1852 = vrot.lane.b32.xlu0 %v1820, 16
        %v1853 = vpop.permute.xlu0 %1852
        %1854 = vrot.lane.b32.xlu0 %v1823, 16
        %v1855 = vpop.permute.xlu0 %1854
        %v1888 = vunpack.c.l.b16 %v1245
        %v1889 = vunpack.c.l.b16 %v1246
        %v1890 = vunpack.c.l.b16 %v1247
        %v1891 = vunpack.c.l.b16 %v1248
        %v1892 = vunpack.c.l.b16 %v1249
        %v1893 = vunpack.c.l.b16 %v1250
        %v1894 = vunpack.c.l.b16 %v1251
        %v1895 = vunpack.c.l.b16 %v1252
        %v1896 = vunpack.c.l.b16 %v1253
        %v1897 = vunpack.c.l.b16 %v1254
        %v1898 = vunpack.c.l.b16 %v1255
        %v1899 = vunpack.c.l.b16 %v1256
        %v1900 = vunpack.c.l.b16 %v1257
        %v1901 = vunpack.c.l.b16 %v1258
        %v1902 = vunpack.c.l.b16 %v1259
        %v1903 = vunpack.c.l.b16 %v1260
        %v1904 = vunpack.c.l.b16 %v1261
        %v1905 = vunpack.c.l.b16 %v1262
        %v1906 = vunpack.c.l.b16 %v1263
        %v1907 = vunpack.c.l.b16 %v1264
        %v1908 = vunpack.c.l.b16 %v1265
        %v1909 = vunpack.c.l.b16 %v1266
        %v1910 = vunpack.c.l.b16 %v1267
        %v1911 = vunpack.c.l.b16 %v1268
        %v1912 = vunpack.c.l.b16 %v1269
        %v1913 = vunpack.c.l.b16 %v1270
        %v1914 = vunpack.c.l.b16 %v1271
        %v1915 = vunpack.c.l.b16 %v1272
        %v1916 = vunpack.c.l.b16 %v1273
        %v1917 = vunpack.c.l.b16 %v1274
        %v1918 = vunpack.c.l.b16 %v1275
        %v1919 = vunpack.c.l.b16 %v1276
        %v1920 = vpack.c.b16 %v1889, %v1888
        %v1921 = vpack.c.b16 %v1891, %v1890
        %v1922 = vpack.c.b16 %v1893, %v1892
        %v1923 = vpack.c.b16 %v1895, %v1894
        %v1924 = vpack.c.b16 %v1897, %v1896
        %v1925 = vpack.c.b16 %v1899, %v1898
        %v1926 = vpack.c.b16 %v1901, %v1900
        %v1927 = vpack.c.b16 %v1903, %v1902
        %v1928 = vpack.c.b16 %v1905, %v1904
        %v1929 = vpack.c.b16 %v1907, %v1906
        %v1930 = vpack.c.b16 %v1909, %v1908
        %v1931 = vpack.c.b16 %v1911, %v1910
        %v1932 = vpack.c.b16 %v1913, %v1912
        %v1933 = vpack.c.b16 %v1915, %v1914
        %v1934 = vpack.c.b16 %v1917, %v1916
        %v1935 = vpack.c.b16 %v1919, %v1918
        %1936 = vrot.lane.b32.xlu0 %v1920, 24
        %v1937 = vpop.permute.xlu0 %1936
        %1938 = vrot.lane.b32.xlu0 %v1921, 24
        %v1939 = vpop.permute.xlu0 %1938
        %1940 = vrot.lane.b32.xlu0 %v1922, 24
        %v1941 = vpop.permute.xlu0 %1940
        %1942 = vrot.lane.b32.xlu0 %v1923, 24
        %v1943 = vpop.permute.xlu0 %1942
        %1944 = vrot.lane.b32.xlu0 %v1924, 24
        %v1945 = vpop.permute.xlu0 %1944
        %1946 = vrot.lane.b32.xlu0 %v1925, 24
        %v1947 = vpop.permute.xlu0 %1946
        %1948 = vrot.lane.b32.xlu0 %v1926, 24
        %v1949 = vpop.permute.xlu0 %1948
        %1950 = vrot.lane.b32.xlu0 %v1927, 24
        %v1951 = vpop.permute.xlu0 %1950
        %1952 = vrot.lane.b32.xlu0 %v1928, 24
        %v1953 = vpop.permute.xlu0 %1952
        %1954 = vrot.lane.b32.xlu0 %v1929, 24
        %v1955 = vpop.permute.xlu0 %1954
        %1956 = vrot.lane.b32.xlu0 %v1930, 24
        %v1957 = vpop.permute.xlu0 %1956
        %1958 = vrot.lane.b32.xlu0 %v1931, 24
        %v1959 = vpop.permute.xlu0 %1958
        %1960 = vrot.lane.b32.xlu0 %v1932, 24
        %v1961 = vpop.permute.xlu0 %1960
        %1962 = vrot.lane.b32.xlu0 %v1933, 24
        %v1963 = vpop.permute.xlu0 %1962
        %1964 = vrot.lane.b32.xlu0 %v1934, 24
        %v1965 = vpop.permute.xlu0 %1964
        %1966 = vrot.lane.b32.xlu0 %v1935, 24
        %v1967 = vpop.permute.xlu0 %1966
        %v1984 = vunpack.c.l.b16 %v1277
        %v1985 = vunpack.c.l.b16 %v1278
        %v1986 = vunpack.c.l.b16 %v1279
        %v1987 = vunpack.c.l.b16 %v1280
        %v1988 = vunpack.c.l.b16 %v1281
        %v1989 = vunpack.c.l.b16 %v1282
        %v1990 = vunpack.c.l.b16 %v1283
        %v1991 = vunpack.c.l.b16 %v1284
        %v1992 = vunpack.c.l.b16 %v1285
        %v1993 = vunpack.c.l.b16 %v1286
        %v1994 = vunpack.c.l.b16 %v1287
        %v1995 = vunpack.c.l.b16 %v1288
        %v1996 = vunpack.c.l.b16 %v1289
        %v1997 = vunpack.c.l.b16 %v1290
        %v1998 = vunpack.c.l.b16 %v1291
        %v1999 = vunpack.c.l.b16 %v1292
        %v2000 = vpack.c.b16 %v1984, %v1984
        %v2001 = vpack.c.b16 %v1985, %v1985
        %v2002 = vpack.c.b16 %v1986, %v1986
        %v2003 = vpack.c.b16 %v1987, %v1987
        %v2004 = vpack.c.b16 %v1988, %v1988
        %v2005 = vpack.c.b16 %v1989, %v1989
        %v2006 = vpack.c.b16 %v1990, %v1990
        %v2007 = vpack.c.b16 %v1991, %v1991
        %v2008 = vpack.c.b16 %v1992, %v1992
        %v2009 = vpack.c.b16 %v1993, %v1993
        %v2010 = vpack.c.b16 %v1994, %v1994
        %v2011 = vpack.c.b16 %v1995, %v1995
        %v2012 = vpack.c.b16 %v1996, %v1996
        %v2013 = vpack.c.b16 %v1997, %v1997
        %v2014 = vpack.c.b16 %v1998, %v1998
        %v2015 = vpack.c.b16 %v1999, %v1999
        %v2017 = vshrl.u32 %v1920, 16
        %v2019 = vshll.u32 %v1920, 16
        %v2021 = vrot.slane %v2019, 1
        %v2022 = vor.u32 %v2017, %v2021
        %v2024 = vshll.u32 %v2000, 16
        %v2026 = vrot.slane %v2024, 1
        %v2027 = vsel %vm1502, %v2022, %v2026
        %v2029 = vshrl.u32 %v1921, 16
        %v2031 = vshll.u32 %v1921, 16
        %v2033 = vrot.slane %v2031, 1
        %v2034 = vor.u32 %v2029, %v2033
        %v2036 = vshll.u32 %v2001, 16
        %v2038 = vrot.slane %v2036, 1
        %v2039 = vsel %vm1502, %v2034, %v2038
        %v2041 = vshrl.u32 %v1922, 16
        %v2043 = vshll.u32 %v1922, 16
        %v2045 = vrot.slane %v2043, 1
        %v2046 = vor.u32 %v2041, %v2045
        %v2048 = vshll.u32 %v2002, 16
        %v2050 = vrot.slane %v2048, 1
        %v2051 = vsel %vm1502, %v2046, %v2050
        %v2053 = vshrl.u32 %v1923, 16
        %v2055 = vshll.u32 %v1923, 16
        %v2057 = vrot.slane %v2055, 1
        %v2058 = vor.u32 %v2053, %v2057
        %v2060 = vshll.u32 %v2003, 16
        %v2062 = vrot.slane %v2060, 1
        %v2063 = vsel %vm1502, %v2058, %v2062
        %v2065 = vshrl.u32 %v1924, 16
        %v2067 = vshll.u32 %v1924, 16
        %v2069 = vrot.slane %v2067, 1
        %v2070 = vor.u32 %v2065, %v2069
        %v2072 = vshll.u32 %v2004, 16
        %v2074 = vrot.slane %v2072, 1
        %v2075 = vsel %vm1502, %v2070, %v2074
        %v2077 = vshrl.u32 %v1925, 16
        %v2079 = vshll.u32 %v1925, 16
        %v2081 = vrot.slane %v2079, 1
        %v2082 = vor.u32 %v2077, %v2081
        %v2084 = vshll.u32 %v2005, 16
        %v2086 = vrot.slane %v2084, 1
        %v2087 = vsel %vm1502, %v2082, %v2086
        %v2089 = vshrl.u32 %v1926, 16
        %v2091 = vshll.u32 %v1926, 16
        %v2093 = vrot.slane %v2091, 1
        %v2094 = vor.u32 %v2089, %v2093
        %v2096 = vshll.u32 %v2006, 16
        %v2098 = vrot.slane %v2096, 1
        %v2099 = vsel %vm1502, %v2094, %v2098
        %v2101 = vshrl.u32 %v1927, 16
        %v2103 = vshll.u32 %v1927, 16
        %v2105 = vrot.slane %v2103, 1
        %v2106 = vor.u32 %v2101, %v2105
        %v2108 = vshll.u32 %v2007, 16
        %v2110 = vrot.slane %v2108, 1
        %v2111 = vsel %vm1502, %v2106, %v2110
        %v2113 = vshrl.u32 %v1928, 16
        %v2115 = vshll.u32 %v1928, 16
        %v2117 = vrot.slane %v2115, 1
        %v2118 = vor.u32 %v2113, %v2117
        %v2120 = vshll.u32 %v2008, 16
        %v2122 = vrot.slane %v2120, 1
        %v2123 = vsel %vm1502, %v2118, %v2122
        %v2125 = vshrl.u32 %v1929, 16
        %v2127 = vshll.u32 %v1929, 16
        %v2129 = vrot.slane %v2127, 1
        %v2130 = vor.u32 %v2125, %v2129
        %v2132 = vshll.u32 %v2009, 16
        %v2134 = vrot.slane %v2132, 1
        %v2135 = vsel %vm1502, %v2130, %v2134
        %v2137 = vshrl.u32 %v1930, 16
        %v2139 = vshll.u32 %v1930, 16
        %v2141 = vrot.slane %v2139, 1
        %v2142 = vor.u32 %v2137, %v2141
        %v2144 = vshll.u32 %v2010, 16
        %v2146 = vrot.slane %v2144, 1
        %v2147 = vsel %vm1502, %v2142, %v2146
        %v2149 = vshrl.u32 %v1931, 16
        %v2151 = vshll.u32 %v1931, 16
        %v2153 = vrot.slane %v2151, 1
        %v2154 = vor.u32 %v2149, %v2153
        %v2156 = vshll.u32 %v2011, 16
        %v2158 = vrot.slane %v2156, 1
        %v2159 = vsel %vm1502, %v2154, %v2158
        %v2161 = vshrl.u32 %v1932, 16
        %v2163 = vshll.u32 %v1932, 16
        %v2165 = vrot.slane %v2163, 1
        %v2166 = vor.u32 %v2161, %v2165
        %v2168 = vshll.u32 %v2012, 16
        %v2170 = vrot.slane %v2168, 1
        %v2171 = vsel %vm1502, %v2166, %v2170
        %v2173 = vshrl.u32 %v1933, 16
        %v2175 = vshll.u32 %v1933, 16
        %v2177 = vrot.slane %v2175, 1
        %v2178 = vor.u32 %v2173, %v2177
        %v2180 = vshll.u32 %v2013, 16
        %v2182 = vrot.slane %v2180, 1
        %v2183 = vsel %vm1502, %v2178, %v2182
        %v2185 = vshrl.u32 %v1934, 16
        %v2187 = vshll.u32 %v1934, 16
        %v2189 = vrot.slane %v2187, 1
        %v2190 = vor.u32 %v2185, %v2189
        %v2192 = vshll.u32 %v2014, 16
        %v2194 = vrot.slane %v2192, 1
        %v2195 = vsel %vm1502, %v2190, %v2194
        %v2197 = vshrl.u32 %v1935, 16
        %v2199 = vshll.u32 %v1935, 16
        %v2201 = vrot.slane %v2199, 1
        %v2202 = vor.u32 %v2197, %v2201
        %v2204 = vshll.u32 %v2015, 16
        %v2206 = vrot.slane %v2204, 1
        %v2207 = vsel %vm1502, %v2202, %v2206
        %2208 = vrot.lane.b32.xlu0 %v2027, 32
        %v2209 = vpop.permute.xlu0 %2208
        %2210 = vrot.lane.b32.xlu0 %v2039, 32
        %v2211 = vpop.permute.xlu0 %2210
        %2212 = vrot.lane.b32.xlu0 %v2051, 32
        %v2213 = vpop.permute.xlu0 %2212
        %2214 = vrot.lane.b32.xlu0 %v2063, 32
        %v2215 = vpop.permute.xlu0 %2214
        %2216 = vrot.lane.b32.xlu0 %v2075, 32
        %v2217 = vpop.permute.xlu0 %2216
        %2218 = vrot.lane.b32.xlu0 %v2087, 32
        %v2219 = vpop.permute.xlu0 %2218
        %2220 = vrot.lane.b32.xlu0 %v2099, 32
        %v2221 = vpop.permute.xlu0 %2220
        %2222 = vrot.lane.b32.xlu0 %v2111, 32
        %v2223 = vpop.permute.xlu0 %2222
        %2224 = vrot.lane.b32.xlu0 %v2123, 32
        %v2225 = vpop.permute.xlu0 %2224
        %2226 = vrot.lane.b32.xlu0 %v2135, 32
        %v2227 = vpop.permute.xlu0 %2226
        %2228 = vrot.lane.b32.xlu0 %v2147, 32
        %v2229 = vpop.permute.xlu0 %2228
        %2230 = vrot.lane.b32.xlu0 %v2159, 32
        %v2231 = vpop.permute.xlu0 %2230
        %2232 = vrot.lane.b32.xlu0 %v2171, 32
        %v2233 = vpop.permute.xlu0 %2232
        %2234 = vrot.lane.b32.xlu0 %v2183, 32
        %v2235 = vpop.permute.xlu0 %2234
        %2236 = vrot.lane.b32.xlu0 %v2195, 32
        %v2237 = vpop.permute.xlu0 %2236
        %2238 = vrot.lane.b32.xlu0 %v2207, 32
        %v2239 = vpop.permute.xlu0 %2238
        %v2256 = vunpack.c.l.b16 %v1293
        %v2257 = vunpack.c.l.b16 %v1294
        %v2258 = vunpack.c.l.b16 %v1295
        %v2259 = vunpack.c.l.b16 %v1296
        %v2260 = vunpack.c.l.b16 %v1297
        %v2261 = vunpack.c.l.b16 %v1298
        %v2262 = vunpack.c.l.b16 %v1299
        %v2263 = vunpack.c.l.b16 %v1300
        %v2264 = vunpack.c.l.b16 %v1301
        %v2265 = vunpack.c.l.b16 %v1302
        %v2266 = vunpack.c.l.b16 %v1303
        %v2267 = vunpack.c.l.b16 %v1304
        %v2268 = vunpack.c.l.b16 %v1305
        %v2269 = vunpack.c.l.b16 %v1306
        %v2270 = vunpack.c.l.b16 %v1307
        %v2271 = vunpack.c.l.b16 %v1308
        %v2272 = vpack.c.b16 %v1889, %v2256
        %v2273 = vpack.c.b16 %v1891, %v2257
        %v2274 = vpack.c.b16 %v1893, %v2258
        %v2275 = vpack.c.b16 %v1895, %v2259
        %v2276 = vpack.c.b16 %v1897, %v2260
        %v2277 = vpack.c.b16 %v1899, %v2261
        %v2278 = vpack.c.b16 %v1901, %v2262
        %v2279 = vpack.c.b16 %v1903, %v2263
        %v2280 = vpack.c.b16 %v1905, %v2264
        %v2281 = vpack.c.b16 %v1907, %v2265
        %v2282 = vpack.c.b16 %v1909, %v2266
        %v2283 = vpack.c.b16 %v1911, %v2267
        %v2284 = vpack.c.b16 %v1913, %v2268
        %v2285 = vpack.c.b16 %v1915, %v2269
        %v2286 = vpack.c.b16 %v1917, %v2270
        %v2287 = vpack.c.b16 %v1919, %v2271
        %v2288 = vrot.slane %v2272, 1
        %v2289 = vrot.slane %v2000, 1
        %v2290 = vsel %vm1775, %v2288, %v2289
        %v2291 = vrot.slane %v2273, 1
        %v2292 = vrot.slane %v2001, 1
        %v2293 = vsel %vm1775, %v2291, %v2292
        %v2294 = vrot.slane %v2274, 1
        %v2295 = vrot.slane %v2002, 1
        %v2296 = vsel %vm1775, %v2294, %v2295
        %v2297 = vrot.slane %v2275, 1
        %v2298 = vrot.slane %v2003, 1
        %v2299 = vsel %vm1775, %v2297, %v2298
        %v2300 = vrot.slane %v2276, 1
        %v2301 = vrot.slane %v2004, 1
        %v2302 = vsel %vm1775, %v2300, %v2301
        %v2303 = vrot.slane %v2277, 1
        %v2304 = vrot.slane %v2005, 1
        %v2305 = vsel %vm1775, %v2303, %v2304
        %v2306 = vrot.slane %v2278, 1
        %v2307 = vrot.slane %v2006, 1
        %v2308 = vsel %vm1775, %v2306, %v2307
        %v2309 = vrot.slane %v2279, 1
        %v2310 = vrot.slane %v2007, 1
        %v2311 = vsel %vm1775, %v2309, %v2310
        %v2312 = vrot.slane %v2280, 1
        %v2313 = vrot.slane %v2008, 1
        %v2314 = vsel %vm1775, %v2312, %v2313
        %v2315 = vrot.slane %v2281, 1
        %v2316 = vrot.slane %v2009, 1
        %v2317 = vsel %vm1775, %v2315, %v2316
        %v2318 = vrot.slane %v2282, 1
        %v2319 = vrot.slane %v2010, 1
        %v2320 = vsel %vm1775, %v2318, %v2319
        %v2321 = vrot.slane %v2283, 1
        %v2322 = vrot.slane %v2011, 1
        %v2323 = vsel %vm1775, %v2321, %v2322
        %v2324 = vrot.slane %v2284, 1
        %v2325 = vrot.slane %v2012, 1
        %v2326 = vsel %vm1775, %v2324, %v2325
        %v2327 = vrot.slane %v2285, 1
        %v2328 = vrot.slane %v2013, 1
        %v2329 = vsel %vm1775, %v2327, %v2328
        %v2330 = vrot.slane %v2286, 1
        %v2331 = vrot.slane %v2014, 1
        %v2332 = vsel %vm1775, %v2330, %v2331
        %v2333 = vrot.slane %v2287, 1
        %v2334 = vrot.slane %v2015, 1
        %v2335 = vsel %vm1775, %v2333, %v2334
        %2336 = vrot.lane.b32.xlu0 %v2290, 40
        %v2337 = vpop.permute.xlu0 %2336
        %2338 = vrot.lane.b32.xlu0 %v2293, 40
        %v2339 = vpop.permute.xlu0 %2338
        %2340 = vrot.lane.b32.xlu0 %v2296, 40
        %v2341 = vpop.permute.xlu0 %2340
        %2342 = vrot.lane.b32.xlu0 %v2299, 40
        %v2343 = vpop.permute.xlu0 %2342
        %2344 = vrot.lane.b32.xlu0 %v2302, 40
        %v2345 = vpop.permute.xlu0 %2344
        %2346 = vrot.lane.b32.xlu0 %v2305, 40
        %v2347 = vpop.permute.xlu0 %2346
        %2348 = vrot.lane.b32.xlu0 %v2308, 40
        %v2349 = vpop.permute.xlu0 %2348
        %2350 = vrot.lane.b32.xlu0 %v2311, 40
        %v2351 = vpop.permute.xlu0 %2350
        %2352 = vrot.lane.b32.xlu0 %v2314, 40
        %v2353 = vpop.permute.xlu0 %2352
        %2354 = vrot.lane.b32.xlu0 %v2317, 40
        %v2355 = vpop.permute.xlu0 %2354
        %2356 = vrot.lane.b32.xlu0 %v2320, 40
        %v2357 = vpop.permute.xlu0 %2356
        %2358 = vrot.lane.b32.xlu0 %v2323, 40
        %v2359 = vpop.permute.xlu0 %2358
        %2360 = vrot.lane.b32.xlu0 %v2326, 40
        %v2361 = vpop.permute.xlu0 %2360
        %2362 = vrot.lane.b32.xlu0 %v2329, 40
        %v2363 = vpop.permute.xlu0 %2362
        %2364 = vrot.lane.b32.xlu0 %v2332, 40
        %v2365 = vpop.permute.xlu0 %2364
        %2366 = vrot.lane.b32.xlu0 %v2335, 40
        %v2367 = vpop.permute.xlu0 %2366
        %v2400 = vunpack.c.l.b16 %v1310
        %v2401 = vunpack.c.l.b16 %v1311
        %v2402 = vunpack.c.l.b16 %v1312
        %v2403 = vunpack.c.l.b16 %v1313
        %v2404 = vunpack.c.l.b16 %v1314
        %v2405 = vunpack.c.l.b16 %v1315
        %v2406 = vunpack.c.l.b16 %v1316
        %v2407 = vunpack.c.l.b16 %v1317
        %v2408 = vunpack.c.l.b16 %v1318
        %v2409 = vunpack.c.l.b16 %v1319
        %v2410 = vunpack.c.l.b16 %v1320
        %v2411 = vunpack.c.l.b16 %v1321
        %v2412 = vunpack.c.l.b16 %v1322
        %v2413 = vunpack.c.l.b16 %v1323
        %v2414 = vunpack.c.l.b16 %v1324
        %v2415 = vunpack.c.l.b16 %v1325
        %v2416 = vunpack.c.l.b16 %v1326
        %v2417 = vunpack.c.l.b16 %v1327
        %v2418 = vunpack.c.l.b16 %v1328
        %v2419 = vunpack.c.l.b16 %v1329
        %v2420 = vunpack.c.l.b16 %v1330
        %v2421 = vunpack.c.l.b16 %v1331
        %v2422 = vunpack.c.l.b16 %v1332
        %v2423 = vunpack.c.l.b16 %v1333
        %v2424 = vunpack.c.l.b16 %v1334
        %v2425 = vunpack.c.l.b16 %v1335
        %v2426 = vunpack.c.l.b16 %v1336
        %v2427 = vunpack.c.l.b16 %v1337
        %v2428 = vunpack.c.l.b16 %v1338
        %v2429 = vunpack.c.l.b16 %v1339
        %v2430 = vunpack.c.l.b16 %v1340
        %v2431 = vunpack.c.l.b16 %v1341
        %v2432 = vpack.c.b16 %v2401, %v2400
        %v2433 = vpack.c.b16 %v2403, %v2402
        %v2434 = vpack.c.b16 %v2405, %v2404
        %v2435 = vpack.c.b16 %v2407, %v2406
        %v2436 = vpack.c.b16 %v2409, %v2408
        %v2437 = vpack.c.b16 %v2411, %v2410
        %v2438 = vpack.c.b16 %v2413, %v2412
        %v2439 = vpack.c.b16 %v2415, %v2414
        %v2440 = vpack.c.b16 %v2417, %v2416
        %v2441 = vpack.c.b16 %v2419, %v2418
        %v2442 = vpack.c.b16 %v2421, %v2420
        %v2443 = vpack.c.b16 %v2423, %v2422
        %v2444 = vpack.c.b16 %v2425, %v2424
        %v2445 = vpack.c.b16 %v2427, %v2426
        %v2446 = vpack.c.b16 %v2429, %v2428
        %v2447 = vpack.c.b16 %v2431, %v2430
        %2448 = vrot.lane.b32.xlu0 %v2432, 48
        %v2449 = vpop.permute.xlu0 %2448
        %2450 = vrot.lane.b32.xlu0 %v2433, 48
        %v2451 = vpop.permute.xlu0 %2450
        %2452 = vrot.lane.b32.xlu0 %v2434, 48
        %v2453 = vpop.permute.xlu0 %2452
        %2454 = vrot.lane.b32.xlu0 %v2435, 48
        %v2455 = vpop.permute.xlu0 %2454
        %2456 = vrot.lane.b32.xlu0 %v2436, 48
        %v2457 = vpop.permute.xlu0 %2456
        %2458 = vrot.lane.b32.xlu0 %v2437, 48
        %v2459 = vpop.permute.xlu0 %2458
        %2460 = vrot.lane.b32.xlu0 %v2438, 48
        %v2461 = vpop.permute.xlu0 %2460
        %2462 = vrot.lane.b32.xlu0 %v2439, 48
        %v2463 = vpop.permute.xlu0 %2462
        %2464 = vrot.lane.b32.xlu0 %v2440, 48
        %v2465 = vpop.permute.xlu0 %2464
        %2466 = vrot.lane.b32.xlu0 %v2441, 48
        %v2467 = vpop.permute.xlu0 %2466
        %2468 = vrot.lane.b32.xlu0 %v2442, 48
        %v2469 = vpop.permute.xlu0 %2468
        %2470 = vrot.lane.b32.xlu0 %v2443, 48
        %v2471 = vpop.permute.xlu0 %2470
        %2472 = vrot.lane.b32.xlu0 %v2444, 48
        %v2473 = vpop.permute.xlu0 %2472
        %2474 = vrot.lane.b32.xlu0 %v2445, 48
        %v2475 = vpop.permute.xlu0 %2474
        %2476 = vrot.lane.b32.xlu0 %v2446, 48
        %v2477 = vpop.permute.xlu0 %2476
        %2478 = vrot.lane.b32.xlu0 %v2447, 48
        %v2479 = vpop.permute.xlu0 %2478
        %v2496 = vunpack.c.l.b16 %v1342
        %v2497 = vunpack.c.l.b16 %v1343
        %v2498 = vunpack.c.l.b16 %v1344
        %v2499 = vunpack.c.l.b16 %v1345
        %v2500 = vunpack.c.l.b16 %v1346
        %v2501 = vunpack.c.l.b16 %v1347
        %v2502 = vunpack.c.l.b16 %v1348
        %v2503 = vunpack.c.l.b16 %v1349
        %v2504 = vunpack.c.l.b16 %v1350
        %v2505 = vunpack.c.l.b16 %v1351
        %v2506 = vunpack.c.l.b16 %v1352
        %v2507 = vunpack.c.l.b16 %v1353
        %v2508 = vunpack.c.l.b16 %v1354
        %v2509 = vunpack.c.l.b16 %v1355
        %v2510 = vunpack.c.l.b16 %v1356
        %v2511 = vunpack.c.l.b16 %v1357
        %v2512 = vpack.c.b16 %v2496, %v2496
        %v2513 = vpack.c.b16 %v2497, %v2497
        %v2514 = vpack.c.b16 %v2498, %v2498
        %v2515 = vpack.c.b16 %v2499, %v2499
        %v2516 = vpack.c.b16 %v2500, %v2500
        %v2517 = vpack.c.b16 %v2501, %v2501
        %v2518 = vpack.c.b16 %v2502, %v2502
        %v2519 = vpack.c.b16 %v2503, %v2503
        %v2520 = vpack.c.b16 %v2504, %v2504
        %v2521 = vpack.c.b16 %v2505, %v2505
        %v2522 = vpack.c.b16 %v2506, %v2506
        %v2523 = vpack.c.b16 %v2507, %v2507
        %v2524 = vpack.c.b16 %v2508, %v2508
        %v2525 = vpack.c.b16 %v2509, %v2509
        %v2526 = vpack.c.b16 %v2510, %v2510
        %v2527 = vpack.c.b16 %v2511, %v2511
        %v2529 = vshrl.u32 %v2432, 16
        %v2531 = vshll.u32 %v2432, 16
        %v2533 = vrot.slane %v2531, 1
        %v2534 = vor.u32 %v2529, %v2533
        %v2536 = vshll.u32 %v2512, 16
        %v2538 = vrot.slane %v2536, 1
        %v2539 = vsel %vm1502, %v2534, %v2538
        %v2541 = vshrl.u32 %v2433, 16
        %v2543 = vshll.u32 %v2433, 16
        %v2545 = vrot.slane %v2543, 1
        %v2546 = vor.u32 %v2541, %v2545
        %v2548 = vshll.u32 %v2513, 16
        %v2550 = vrot.slane %v2548, 1
        %v2551 = vsel %vm1502, %v2546, %v2550
        %v2553 = vshrl.u32 %v2434, 16
        %v2555 = vshll.u32 %v2434, 16
        %v2557 = vrot.slane %v2555, 1
        %v2558 = vor.u32 %v2553, %v2557
        %v2560 = vshll.u32 %v2514, 16
        %v2562 = vrot.slane %v2560, 1
        %v2563 = vsel %vm1502, %v2558, %v2562
        %v2565 = vshrl.u32 %v2435, 16
        %v2567 = vshll.u32 %v2435, 16
        %v2569 = vrot.slane %v2567, 1
        %v2570 = vor.u32 %v2565, %v2569
        %v2572 = vshll.u32 %v2515, 16
        %v2574 = vrot.slane %v2572, 1
        %v2575 = vsel %vm1502, %v2570, %v2574
        %v2577 = vshrl.u32 %v2436, 16
        %v2579 = vshll.u32 %v2436, 16
        %v2581 = vrot.slane %v2579, 1
        %v2582 = vor.u32 %v2577, %v2581
        %v2584 = vshll.u32 %v2516, 16
        %v2586 = vrot.slane %v2584, 1
        %v2587 = vsel %vm1502, %v2582, %v2586
        %v2589 = vshrl.u32 %v2437, 16
        %v2591 = vshll.u32 %v2437, 16
        %v2593 = vrot.slane %v2591, 1
        %v2594 = vor.u32 %v2589, %v2593
        %v2596 = vshll.u32 %v2517, 16
        %v2598 = vrot.slane %v2596, 1
        %v2599 = vsel %vm1502, %v2594, %v2598
        %v2601 = vshrl.u32 %v2438, 16
        %v2603 = vshll.u32 %v2438, 16
        %v2605 = vrot.slane %v2603, 1
        %v2606 = vor.u32 %v2601, %v2605
        %v2608 = vshll.u32 %v2518, 16
        %v2610 = vrot.slane %v2608, 1
        %v2611 = vsel %vm1502, %v2606, %v2610
        %v2613 = vshrl.u32 %v2439, 16
        %v2615 = vshll.u32 %v2439, 16
        %v2617 = vrot.slane %v2615, 1
        %v2618 = vor.u32 %v2613, %v2617
        %v2620 = vshll.u32 %v2519, 16
        %v2622 = vrot.slane %v2620, 1
        %v2623 = vsel %vm1502, %v2618, %v2622
        %v2625 = vshrl.u32 %v2440, 16
        %v2627 = vshll.u32 %v2440, 16
        %v2629 = vrot.slane %v2627, 1
        %v2630 = vor.u32 %v2625, %v2629
        %v2632 = vshll.u32 %v2520, 16
        %v2634 = vrot.slane %v2632, 1
        %v2635 = vsel %vm1502, %v2630, %v2634
        %v2637 = vshrl.u32 %v2441, 16
        %v2639 = vshll.u32 %v2441, 16
        %v2641 = vrot.slane %v2639, 1
        %v2642 = vor.u32 %v2637, %v2641
        %v2644 = vshll.u32 %v2521, 16
        %v2646 = vrot.slane %v2644, 1
        %v2647 = vsel %vm1502, %v2642, %v2646
        %v2649 = vshrl.u32 %v2442, 16
        %v2651 = vshll.u32 %v2442, 16
        %v2653 = vrot.slane %v2651, 1
        %v2654 = vor.u32 %v2649, %v2653
        %v2656 = vshll.u32 %v2522, 16
        %v2658 = vrot.slane %v2656, 1
        %v2659 = vsel %vm1502, %v2654, %v2658
        %v2661 = vshrl.u32 %v2443, 16
        %v2663 = vshll.u32 %v2443, 16
        %v2665 = vrot.slane %v2663, 1
        %v2666 = vor.u32 %v2661, %v2665
        %v2668 = vshll.u32 %v2523, 16
        %v2670 = vrot.slane %v2668, 1
        %v2671 = vsel %vm1502, %v2666, %v2670
        %v2673 = vshrl.u32 %v2444, 16
        %v2675 = vshll.u32 %v2444, 16
        %v2677 = vrot.slane %v2675, 1
        %v2678 = vor.u32 %v2673, %v2677
        %v2680 = vshll.u32 %v2524, 16
        %v2682 = vrot.slane %v2680, 1
        %v2683 = vsel %vm1502, %v2678, %v2682
        %v2685 = vshrl.u32 %v2445, 16
        %v2687 = vshll.u32 %v2445, 16
        %v2689 = vrot.slane %v2687, 1
        %v2690 = vor.u32 %v2685, %v2689
        %v2692 = vshll.u32 %v2525, 16
        %v2694 = vrot.slane %v2692, 1
        %v2695 = vsel %vm1502, %v2690, %v2694
        %v2697 = vshrl.u32 %v2446, 16
        %v2699 = vshll.u32 %v2446, 16
        %v2701 = vrot.slane %v2699, 1
        %v2702 = vor.u32 %v2697, %v2701
        %v2704 = vshll.u32 %v2526, 16
        %v2706 = vrot.slane %v2704, 1
        %v2707 = vsel %vm1502, %v2702, %v2706
        %v2709 = vshrl.u32 %v2447, 16
        %v2711 = vshll.u32 %v2447, 16
        %v2713 = vrot.slane %v2711, 1
        %v2714 = vor.u32 %v2709, %v2713
        %v2716 = vshll.u32 %v2527, 16
        %v2718 = vrot.slane %v2716, 1
        %v2719 = vsel %vm1502, %v2714, %v2718
        %2720 = vrot.lane.b32.xlu0 %v2539, 56
        %v2721 = vpop.permute.xlu0 %2720
        %2722 = vrot.lane.b32.xlu0 %v2551, 56
        %v2723 = vpop.permute.xlu0 %2722
        %2724 = vrot.lane.b32.xlu0 %v2563, 56
        %v2725 = vpop.permute.xlu0 %2724
        %2726 = vrot.lane.b32.xlu0 %v2575, 56
        %v2727 = vpop.permute.xlu0 %2726
        %2728 = vrot.lane.b32.xlu0 %v2587, 56
        %v2729 = vpop.permute.xlu0 %2728
        %2730 = vrot.lane.b32.xlu0 %v2599, 56
        %v2731 = vpop.permute.xlu0 %2730
        %2732 = vrot.lane.b32.xlu0 %v2611, 56
        %v2733 = vpop.permute.xlu0 %2732
        %2734 = vrot.lane.b32.xlu0 %v2623, 56
        %v2735 = vpop.permute.xlu0 %2734
        %2736 = vrot.lane.b32.xlu0 %v2635, 56
        %v2737 = vpop.permute.xlu0 %2736
        %2738 = vrot.lane.b32.xlu0 %v2647, 56
        %v2739 = vpop.permute.xlu0 %2738
        %2740 = vrot.lane.b32.xlu0 %v2659, 56
        %v2741 = vpop.permute.xlu0 %2740
        %2742 = vrot.lane.b32.xlu0 %v2671, 56
        %v2743 = vpop.permute.xlu0 %2742
        %2744 = vrot.lane.b32.xlu0 %v2683, 56
        %v2745 = vpop.permute.xlu0 %2744
        %2746 = vrot.lane.b32.xlu0 %v2695, 56
        %v2747 = vpop.permute.xlu0 %2746
        %2748 = vrot.lane.b32.xlu0 %v2707, 56
        %v2749 = vpop.permute.xlu0 %2748
        %2750 = vrot.lane.b32.xlu0 %v2719, 56
        %v2751 = vpop.permute.xlu0 %2750
        %v2768 = vunpack.c.l.b16 %v1358
        %v2769 = vunpack.c.l.b16 %v1359
        %v2770 = vunpack.c.l.b16 %v1360
        %v2771 = vunpack.c.l.b16 %v1361
        %v2772 = vunpack.c.l.b16 %v1362
        %v2773 = vunpack.c.l.b16 %v1363
        %v2774 = vunpack.c.l.b16 %v1364
        %v2775 = vunpack.c.l.b16 %v1365
        %v2776 = vunpack.c.l.b16 %v1366
        %v2777 = vunpack.c.l.b16 %v1367
        %v2778 = vunpack.c.l.b16 %v1368
        %v2779 = vunpack.c.l.b16 %v1369
        %v2780 = vunpack.c.l.b16 %v1370
        %v2781 = vunpack.c.l.b16 %v1371
        %v2782 = vunpack.c.l.b16 %v1372
        %v2783 = vunpack.c.l.b16 %v1373
        %v2784 = vpack.c.b16 %v2401, %v2768
        %v2785 = vpack.c.b16 %v2403, %v2769
        %v2786 = vpack.c.b16 %v2405, %v2770
        %v2787 = vpack.c.b16 %v2407, %v2771
        %v2788 = vpack.c.b16 %v2409, %v2772
        %v2789 = vpack.c.b16 %v2411, %v2773
        %v2790 = vpack.c.b16 %v2413, %v2774
        %v2791 = vpack.c.b16 %v2415, %v2775
        %v2792 = vpack.c.b16 %v2417, %v2776
        %v2793 = vpack.c.b16 %v2419, %v2777
        %v2794 = vpack.c.b16 %v2421, %v2778
        %v2795 = vpack.c.b16 %v2423, %v2779
        %v2796 = vpack.c.b16 %v2425, %v2780
        %v2797 = vpack.c.b16 %v2427, %v2781
        %v2798 = vpack.c.b16 %v2429, %v2782
        %v2799 = vpack.c.b16 %v2431, %v2783
        %v2800 = vrot.slane %v2784, 1
        %v2801 = vrot.slane %v2512, 1
        %v2802 = vsel %vm1775, %v2800, %v2801
        %v2803 = vrot.slane %v2785, 1
        %v2804 = vrot.slane %v2513, 1
        %v2805 = vsel %vm1775, %v2803, %v2804
        %v2806 = vrot.slane %v2786, 1
        %v2807 = vrot.slane %v2514, 1
        %v2808 = vsel %vm1775, %v2806, %v2807
        %v2809 = vrot.slane %v2787, 1
        %v2810 = vrot.slane %v2515, 1
        %v2811 = vsel %vm1775, %v2809, %v2810
        %v2812 = vrot.slane %v2788, 1
        %v2813 = vrot.slane %v2516, 1
        %v2814 = vsel %vm1775, %v2812, %v2813
        %v2815 = vrot.slane %v2789, 1
        %v2816 = vrot.slane %v2517, 1
        %v2817 = vsel %vm1775, %v2815, %v2816
        %v2818 = vrot.slane %v2790, 1
        %v2819 = vrot.slane %v2518, 1
        %v2820 = vsel %vm1775, %v2818, %v2819
        %v2821 = vrot.slane %v2791, 1
        %v2822 = vrot.slane %v2519, 1
        %v2823 = vsel %vm1775, %v2821, %v2822
        %v2824 = vrot.slane %v2792, 1
        %v2825 = vrot.slane %v2520, 1
        %v2826 = vsel %vm1775, %v2824, %v2825
        %v2827 = vrot.slane %v2793, 1
        %v2828 = vrot.slane %v2521, 1
        %v2829 = vsel %vm1775, %v2827, %v2828
        %v2830 = vrot.slane %v2794, 1
        %v2831 = vrot.slane %v2522, 1
        %v2832 = vsel %vm1775, %v2830, %v2831
        %v2833 = vrot.slane %v2795, 1
        %v2834 = vrot.slane %v2523, 1
        %v2835 = vsel %vm1775, %v2833, %v2834
        %v2836 = vrot.slane %v2796, 1
        %v2837 = vrot.slane %v2524, 1
        %v2838 = vsel %vm1775, %v2836, %v2837
        %v2839 = vrot.slane %v2797, 1
        %v2840 = vrot.slane %v2525, 1
        %v2841 = vsel %vm1775, %v2839, %v2840
        %v2842 = vrot.slane %v2798, 1
        %v2843 = vrot.slane %v2526, 1
        %v2844 = vsel %vm1775, %v2842, %v2843
        %v2845 = vrot.slane %v2799, 1
        %v2846 = vrot.slane %v2527, 1
        %v2847 = vsel %vm1775, %v2845, %v2846
        %2848 = vrot.lane.b32.xlu0 %v2802, 64
        %v2849 = vpop.permute.xlu0 %2848
        %2850 = vrot.lane.b32.xlu0 %v2805, 64
        %v2851 = vpop.permute.xlu0 %2850
        %2852 = vrot.lane.b32.xlu0 %v2808, 64
        %v2853 = vpop.permute.xlu0 %2852
        %2854 = vrot.lane.b32.xlu0 %v2811, 64
        %v2855 = vpop.permute.xlu0 %2854
        %2856 = vrot.lane.b32.xlu0 %v2814, 64
        %v2857 = vpop.permute.xlu0 %2856
        %2858 = vrot.lane.b32.xlu0 %v2817, 64
        %v2859 = vpop.permute.xlu0 %2858
        %2860 = vrot.lane.b32.xlu0 %v2820, 64
        %v2861 = vpop.permute.xlu0 %2860
        %2862 = vrot.lane.b32.xlu0 %v2823, 64
        %v2863 = vpop.permute.xlu0 %2862
        %2864 = vrot.lane.b32.xlu0 %v2826, 64
        %v2865 = vpop.permute.xlu0 %2864
        %2866 = vrot.lane.b32.xlu0 %v2829, 64
        %v2867 = vpop.permute.xlu0 %2866
        %2868 = vrot.lane.b32.xlu0 %v2832, 64
        %v2869 = vpop.permute.xlu0 %2868
        %2870 = vrot.lane.b32.xlu0 %v2835, 64
        %v2871 = vpop.permute.xlu0 %2870
        %2872 = vrot.lane.b32.xlu0 %v2838, 64
        %v2873 = vpop.permute.xlu0 %2872
        %2874 = vrot.lane.b32.xlu0 %v2841, 64
        %v2875 = vpop.permute.xlu0 %2874
        %2876 = vrot.lane.b32.xlu0 %v2844, 64
        %v2877 = vpop.permute.xlu0 %2876
        %2878 = vrot.lane.b32.xlu0 %v2847, 64
        %v2879 = vpop.permute.xlu0 %2878
        %vm2880 = vcmask 64512
        %v2882 = vsel %vm2880, %v1438, %v1696
        %v2884 = vsel %vm2880, %v1439, %v1698
        %v2886 = vsel %vm2880, %v1440, %v1700
        %v2888 = vsel %vm2880, %v1441, %v1702
        %v2890 = vsel %vm2880, %v1442, %v1704
        %v2892 = vsel %vm2880, %v1443, %v1706
        %v2894 = vsel %vm2880, %v1444, %v1708
        %v2896 = vsel %vm2880, %v1445, %v1710
        %v2898 = vsel %vm2880, %v1446, %v1712
        %v2900 = vsel %vm2880, %v1447, %v1714
        %v2902 = vsel %vm2880, %v1448, %v1716
        %v2904 = vsel %vm2880, %v1449, %v1718
        %v2906 = vsel %vm2880, %v1450, %v1720
        %v2908 = vsel %vm2880, %v1451, %v1722
        %v2910 = vsel %vm2880, %v1452, %v1724
        %v2912 = vsel %vm2880, %v1453, %v1726
        %vm2913 = vcmask 130048
        %v2915 = vsel %vm2913, %v2882, %v1825
        %v2917 = vsel %vm2913, %v2884, %v1827
        %v2919 = vsel %vm2913, %v2886, %v1829
        %v2921 = vsel %vm2913, %v2888, %v1831
        %v2923 = vsel %vm2913, %v2890, %v1833
        %v2925 = vsel %vm2913, %v2892, %v1835
        %v2927 = vsel %vm2913, %v2894, %v1837
        %v2929 = vsel %vm2913, %v2896, %v1839
        %v2931 = vsel %vm2913, %v2898, %v1841
        %v2933 = vsel %vm2913, %v2900, %v1843
        %v2935 = vsel %vm2913, %v2902, %v1845
        %v2937 = vsel %vm2913, %v2904, %v1847
        %v2939 = vsel %vm2913, %v2906, %v1849
        %v2941 = vsel %vm2913, %v2908, %v1851
        %v2943 = vsel %vm2913, %v2910, %v1853
        %v2945 = vsel %vm2913, %v2912, %v1855
        %vm2946 = vcmask 195584
        %v2948 = vsel %vm2946, %v2915, %v1937
        %v2950 = vsel %vm2946, %v2917, %v1939
        %v2952 = vsel %vm2946, %v2919, %v1941
        %v2954 = vsel %vm2946, %v2921, %v1943
        %v2956 = vsel %vm2946, %v2923, %v1945
        %v2958 = vsel %vm2946, %v2925, %v1947
        %v2960 = vsel %vm2946, %v2927, %v1949
        %v2962 = vsel %vm2946, %v2929, %v1951
        %v2964 = vsel %vm2946, %v2931, %v1953
        %v2966 = vsel %vm2946, %v2933, %v1955
        %v2968 = vsel %vm2946, %v2935, %v1957
        %v2970 = vsel %vm2946, %v2937, %v1959
        %v2972 = vsel %vm2946, %v2939, %v1961
        %v2974 = vsel %vm2946, %v2941, %v1963
        %v2976 = vsel %vm2946, %v2943, %v1965
        %v2978 = vsel %vm2946, %v2945, %v1967
        %v2980 = vsel %vm432, %v2948, %v2209
        %v2982 = vsel %vm432, %v2950, %v2211
        %v2984 = vsel %vm432, %v2952, %v2213
        %v2986 = vsel %vm432, %v2954, %v2215
        %v2988 = vsel %vm432, %v2956, %v2217
        %v2990 = vsel %vm432, %v2958, %v2219
        %v2992 = vsel %vm432, %v2960, %v2221
        %v2994 = vsel %vm432, %v2962, %v2223
        %v2996 = vsel %vm432, %v2964, %v2225
        %v2998 = vsel %vm432, %v2966, %v2227
        %v3000 = vsel %vm432, %v2968, %v2229
        %v3002 = vsel %vm432, %v2970, %v2231
        %v3004 = vsel %vm432, %v2972, %v2233
        %v3006 = vsel %vm432, %v2974, %v2235
        %v3008 = vsel %vm432, %v2976, %v2237
        %v3010 = vsel %vm432, %v2978, %v2239
        %vm3011 = vcmask 326656
        %v3013 = vsel %vm3011, %v2980, %v2337
        %v3015 = vsel %vm3011, %v2982, %v2339
        %v3017 = vsel %vm3011, %v2984, %v2341
        %v3019 = vsel %vm3011, %v2986, %v2343
        %v3021 = vsel %vm3011, %v2988, %v2345
        %v3023 = vsel %vm3011, %v2990, %v2347
        %v3025 = vsel %vm3011, %v2992, %v2349
        %v3027 = vsel %vm3011, %v2994, %v2351
        %v3029 = vsel %vm3011, %v2996, %v2353
        %v3031 = vsel %vm3011, %v2998, %v2355
        %v3033 = vsel %vm3011, %v3000, %v2357
        %v3035 = vsel %vm3011, %v3002, %v2359
        %v3037 = vsel %vm3011, %v3004, %v2361
        %v3039 = vsel %vm3011, %v3006, %v2363
        %v3041 = vsel %vm3011, %v3008, %v2365
        %v3043 = vsel %vm3011, %v3010, %v2367
        %vm3044 = vcmask 392192
        %v3046 = vsel %vm3044, %v3013, %v2449
        %v3048 = vsel %vm3044, %v3015, %v2451
        %v3050 = vsel %vm3044, %v3017, %v2453
        %v3052 = vsel %vm3044, %v3019, %v2455
        %v3054 = vsel %vm3044, %v3021, %v2457
        %v3056 = vsel %vm3044, %v3023, %v2459
        %v3058 = vsel %vm3044, %v3025, %v2461
        %v3060 = vsel %vm3044, %v3027, %v2463
        %v3062 = vsel %vm3044, %v3029, %v2465
        %v3064 = vsel %vm3044, %v3031, %v2467
        %v3066 = vsel %vm3044, %v3033, %v2469
        %v3068 = vsel %vm3044, %v3035, %v2471
        %v3070 = vsel %vm3044, %v3037, %v2473
        %v3072 = vsel %vm3044, %v3039, %v2475
        %v3074 = vsel %vm3044, %v3041, %v2477
        %v3076 = vsel %vm3044, %v3043, %v2479
        %vm3077 = vcmask 457728
        %v3079 = vsel %vm3077, %v3046, %v2721
        %v3081 = vsel %vm3077, %v3048, %v2723
        %v3083 = vsel %vm3077, %v3050, %v2725
        %v3085 = vsel %vm3077, %v3052, %v2727
        %v3087 = vsel %vm3077, %v3054, %v2729
        %v3089 = vsel %vm3077, %v3056, %v2731
        %v3091 = vsel %vm3077, %v3058, %v2733
        %v3093 = vsel %vm3077, %v3060, %v2735
        %v3095 = vsel %vm3077, %v3062, %v2737
        %v3097 = vsel %vm3077, %v3064, %v2739
        %v3099 = vsel %vm3077, %v3066, %v2741
        %v3101 = vsel %vm3077, %v3068, %v2743
        %v3103 = vsel %vm3077, %v3070, %v2745
        %v3105 = vsel %vm3077, %v3072, %v2747
        %v3107 = vsel %vm3077, %v3074, %v2749
        %v3109 = vsel %vm3077, %v3076, %v2751
        %vm3110 = vcmask 523264
        %v3112 = vsel %vm3110, %v3079, %v2849
        %v3114 = vsel %vm3110, %v3081, %v2851
        %v3116 = vsel %vm3110, %v3083, %v2853
        %v3118 = vsel %vm3110, %v3085, %v2855
        %v3120 = vsel %vm3110, %v3087, %v2857
        %v3122 = vsel %vm3110, %v3089, %v2859
        %v3124 = vsel %vm3110, %v3091, %v2861
        %v3126 = vsel %vm3110, %v3093, %v2863
        %v3128 = vsel %vm3110, %v3095, %v2865
        %v3130 = vsel %vm3110, %v3097, %v2867
        %v3132 = vsel %vm3110, %v3099, %v2869
        %v3134 = vsel %vm3110, %v3101, %v2871
        %v3136 = vsel %vm3110, %v3103, %v2873
        %v3138 = vsel %vm3110, %v3105, %v2875
        %v3140 = vsel %vm3110, %v3107, %v2877
        %v3142 = vsel %vm3110, %v3109, %v2879
        %v3143 = vld [vmem:[%s2] sm:$0xf]
        %v3144 = vld [vmem:[%s2 + $0x4] sm:$0xf]
        %v3145 = vld [vmem:[%s2 + $0x8] sm:$0xf]
        %v3146 = vld [vmem:[%s2 + $0xc] sm:$0xf]
        %v3147 = vld [vmem:[%s2 + $0x10] sm:$0xf]
        %v3148 = vld [vmem:[%s2 + $0x14] sm:$0xf]
        %v3149 = vld [vmem:[%s2 + $0x18] sm:$0xf]
        %v3150 = vld [vmem:[%s2 + $0x1c] sm:$0xf]
        %v3151 = vld [vmem:[%s2 + $0x20] sm:$0xf]
        %v3152 = vld [vmem:[%s5] sm:$0x1]
        %v3154 = vperm.slane %v3152, 0
        %v3165 = vunpack.c.l.b16 %v3143
        %v3166 = vunpack.c.l.b16 %v3144
        %v3167 = vunpack.c.l.b16 %v3145
        %v3168 = vunpack.c.l.b16 %v3146
        %v3169 = vunpack.c.l.b16 %v3147
        %v3170 = vunpack.c.l.b16 %v3148
        %v3171 = vunpack.c.l.b16 %v3149
        %v3172 = vunpack.c.l.b16 %v3150
        %v3173 = vunpack.c.l.b16 %v3151
        %v3174 = vpack.c.b16 %v3166, %v3165
        %v3175 = vpack.c.b16 %v3168, %v3167
        %v3176 = vpack.c.b16 %v3170, %v3169
        %v3177 = vpack.c.b16 %v3172, %v3171
        %v3178 = vpack.c.b16 %v3173, %v3173
        %vm3183 = vcmask 588800
        %v3184 = vsel %vm3183, %v3112, 0
        %v3186 = vsel %vm3183, %v3114, 0
        %v3188 = vsel %vm3183, %v3116, 0
        %v3190 = vsel %vm3183, %v3118, 0
        %v3192 = vsel %vm3183, %v3120, 0
        %v3194 = vsel %vm3183, %v3122, 0
        %v3196 = vsel %vm3183, %v3124, 0
        %v3198 = vsel %vm3183, %v3126, 0
        %v3200 = vsel %vm3183, %v3128, 0
        %v3202 = vsel %vm3183, %v3130, 0
        %v3204 = vsel %vm3183, %v3132, 0
        %v3206 = vsel %vm3183, %v3134, 0
        %v3208 = vsel %vm3183, %v3136, 0
        %v3210 = vsel %vm3183, %v3138, 0
        %v3212 = vsel %vm3183, %v3140, 0
        %v3214 = vsel %vm3183, %v3142, 0
        %vm3216 = vcmask 1043456
        %v3218 = vsel %vm3216, %v3178, 0
        %3220 = vmatpush.bf16.msra.mxu0 0
        %3221 = vmatpush.bf16.msra.mxu0 0
        %3222 = vmatpush.bf16.msra.mxu0 0
        %3223 = vmatpush.bf16.msra.mxu0 %v3218
        %3224 = vmatpush.bf16.msra.mxu0 %v3177
        %3225 = vmatpush.bf16.msra.mxu0 %v3176
        %3226 = vmatpush.bf16.msra.mxu0 %v3175
        %3227 = vmatpush.bf16.msra.mxu0 %v3174
        %3228 = vmatmul.bf16.gmra.mxu0 %v3184
        %v3229 = vpop.f32.mrf.mxu0
        %v3230 = vadd.f32 %v3154, %v3229
        %v3231 = vpop.f32.mrf.mxu0
        %v3232 = vadd.f32 %v3154, %v3231
        %3233 = vmatmul.bf16.gmra.mxu0 %v3186
        %v3234 = vpop.f32.mrf.mxu0
        %v3235 = vadd.f32 %v3154, %v3234
        %v3236 = vpop.f32.mrf.mxu0
        %v3237 = vadd.f32 %v3154, %v3236
        %3238 = vmatmul.bf16.gmra.mxu0 %v3188
        %v3239 = vpop.f32.mrf.mxu0
        %v3240 = vadd.f32 %v3154, %v3239
        %v3241 = vpop.f32.mrf.mxu0
        %v3242 = vadd.f32 %v3154, %v3241
        %3243 = vmatmul.bf16.gmra.mxu0 %v3190
        %v3244 = vpop.f32.mrf.mxu0
        %v3245 = vadd.f32 %v3154, %v3244
        %v3246 = vpop.f32.mrf.mxu0
        %v3247 = vadd.f32 %v3154, %v3246
        %3248 = vmatmul.bf16.gmra.mxu0 %v3192
        %v3249 = vpop.f32.mrf.mxu0
        %v3250 = vadd.f32 %v3154, %v3249
        %v3251 = vpop.f32.mrf.mxu0
        %v3252 = vadd.f32 %v3154, %v3251
        %3253 = vmatmul.bf16.gmra.mxu0 %v3194
        %v3254 = vpop.f32.mrf.mxu0
        %v3255 = vadd.f32 %v3154, %v3254
        %v3256 = vpop.f32.mrf.mxu0
        %v3257 = vadd.f32 %v3154, %v3256
        %3258 = vmatmul.bf16.gmra.mxu0 %v3196
        %v3259 = vpop.f32.mrf.mxu0
        %v3260 = vadd.f32 %v3154, %v3259
        %v3261 = vpop.f32.mrf.mxu0
        %v3262 = vadd.f32 %v3154, %v3261
        %3263 = vmatmul.bf16.gmra.mxu0 %v3198
        %v3264 = vpop.f32.mrf.mxu0
        %v3265 = vadd.f32 %v3154, %v3264
        %v3266 = vpop.f32.mrf.mxu0
        %v3267 = vadd.f32 %v3154, %v3266
        %3268 = vmatmul.bf16.gmra.mxu0 %v3200
        %v3269 = vpop.f32.mrf.mxu0
        %v3270 = vadd.f32 %v3154, %v3269
        %v3271 = vpop.f32.mrf.mxu0
        %v3272 = vadd.f32 %v3154, %v3271
        %3273 = vmatmul.bf16.gmra.mxu0 %v3202
        %v3274 = vpop.f32.mrf.mxu0
        %v3275 = vadd.f32 %v3154, %v3274
        %v3276 = vpop.f32.mrf.mxu0
        %v3277 = vadd.f32 %v3154, %v3276
        %3278 = vmatmul.bf16.gmra.mxu0 %v3204
        %v3279 = vpop.f32.mrf.mxu0
        %v3280 = vadd.f32 %v3154, %v3279
        %v3281 = vpop.f32.mrf.mxu0
        %v3282 = vadd.f32 %v3154, %v3281
        %3283 = vmatmul.bf16.gmra.mxu0 %v3206
        %v3284 = vpop.f32.mrf.mxu0
        %v3285 = vadd.f32 %v3154, %v3284
        %v3286 = vpop.f32.mrf.mxu0
        %v3287 = vadd.f32 %v3154, %v3286
        %3288 = vmatmul.bf16.gmra.mxu0 %v3208
        %v3289 = vpop.f32.mrf.mxu0
        %v3290 = vadd.f32 %v3154, %v3289
        %v3291 = vpop.f32.mrf.mxu0
        %v3292 = vadd.f32 %v3154, %v3291
        %3293 = vmatmul.bf16.gmra.mxu0 %v3210
        %v3294 = vpop.f32.mrf.mxu0
        %v3295 = vadd.f32 %v3154, %v3294
        %v3296 = vpop.f32.mrf.mxu0
        %v3297 = vadd.f32 %v3154, %v3296
        %3298 = vmatmul.bf16.gmra.mxu0 %v3212
        %v3299 = vpop.f32.mrf.mxu0
        %v3300 = vadd.f32 %v3154, %v3299
        %v3301 = vpop.f32.mrf.mxu0
        %v3302 = vadd.f32 %v3154, %v3301
        %3303 = vmatmul.bf16.gmra.mxu0 %v3214
        %v3304 = vpop.f32.mrf.mxu0
        %v3305 = vadd.f32 %v3154, %v3304
        %v3306 = vpop.f32.mrf.mxu0
        %v3307 = vadd.f32 %v3154, %v3306
        %3308 = vdwg.mxu0
        %v3309 = vmax.f32 %v3230, 0.0
        %v3310 = vmax.f32 %v3232, 0.0
        %v3311 = vmax.f32 %v3235, 0.0
        %v3312 = vmax.f32 %v3237, 0.0
        %v3313 = vmax.f32 %v3240, 0.0
        %v3314 = vmax.f32 %v3242, 0.0
        %v3315 = vmax.f32 %v3245, 0.0
        %v3316 = vmax.f32 %v3247, 0.0
        %v3317 = vmax.f32 %v3250, 0.0
        %v3318 = vmax.f32 %v3252, 0.0
        %v3319 = vmax.f32 %v3255, 0.0
        %v3320 = vmax.f32 %v3257, 0.0
        %v3321 = vmax.f32 %v3260, 0.0
        %v3322 = vmax.f32 %v3262, 0.0
        %v3323 = vmax.f32 %v3265, 0.0
        %v3324 = vmax.f32 %v3267, 0.0
        %v3325 = vmax.f32 %v3270, 0.0
        %v3326 = vmax.f32 %v3272, 0.0
        %v3327 = vmax.f32 %v3275, 0.0
        %v3328 = vmax.f32 %v3277, 0.0
        %v3329 = vmax.f32 %v3280, 0.0
        %v3330 = vmax.f32 %v3282, 0.0
        %v3331 = vmax.f32 %v3285, 0.0
        %v3332 = vmax.f32 %v3287, 0.0
        %v3333 = vmax.f32 %v3290, 0.0
        %v3334 = vmax.f32 %v3292, 0.0
        %v3335 = vmax.f32 %v3295, 0.0
        %v3336 = vmax.f32 %v3297, 0.0
        %v3337 = vmax.f32 %v3300, 0.0
        %v3338 = vmax.f32 %v3302, 0.0
        %v3339 = vmax.f32 %v3305, 0.0
        %v3340 = vmax.f32 %v3307, 0.0
        %v3341 = vpack.c.bf16 %v3310, %v3309
        %v3342 = vpack.c.bf16 %v3312, %v3311
        %v3343 = vpack.c.bf16 %v3314, %v3313
        %v3344 = vpack.c.bf16 %v3316, %v3315
        %v3345 = vpack.c.bf16 %v3318, %v3317
        %v3346 = vpack.c.bf16 %v3320, %v3319
        %v3347 = vpack.c.bf16 %v3322, %v3321
        %v3348 = vpack.c.bf16 %v3324, %v3323
        %v3349 = vpack.c.bf16 %v3326, %v3325
        %v3350 = vpack.c.bf16 %v3328, %v3327
        %v3351 = vpack.c.bf16 %v3330, %v3329
        %v3352 = vpack.c.bf16 %v3332, %v3331
        %v3353 = vpack.c.bf16 %v3334, %v3333
        %v3354 = vpack.c.bf16 %v3336, %v3335
        %v3355 = vpack.c.bf16 %v3338, %v3337
        %v3356 = vpack.c.bf16 %v3340, %v3339
        %v3357 = vunpack.c.l.bf16 %v300
        %v3358 = vunpack.c.l.bf16 %v301
        %v3359 = vunpack.c.l.bf16 %v302
        %v3360 = vunpack.c.l.bf16 %v303
        %v3361 = vunpack.c.l.bf16 %v304
        %v3362 = vunpack.c.l.bf16 %v305
        %v3363 = vunpack.c.l.bf16 %v306
        %v3364 = vunpack.c.l.bf16 %v307
        %v3365 = vunpack.c.l.bf16 %v308
        %v3366 = vunpack.c.l.bf16 %v309
        %v3367 = vunpack.c.l.bf16 %v310
        %v3368 = vunpack.c.l.bf16 %v311
        %v3369 = vunpack.c.l.bf16 %v312
        %v3370 = vunpack.c.l.bf16 %v313
        %v3371 = vunpack.c.l.bf16 %v314
        %v3372 = vunpack.c.l.bf16 %v315
        %v3373 = vunpack.c.l.bf16 %v316
        %v3374 = vunpack.c.l.bf16 %v317
        %v3375 = vunpack.c.l.bf16 %v318
        %v3376 = vunpack.c.l.bf16 %v319
        %v3377 = vunpack.c.l.bf16 %v320
        %v3378 = vunpack.c.l.bf16 %v321
        %v3379 = vunpack.c.l.bf16 %v322
        %v3380 = vunpack.c.l.bf16 %v323
        %v3381 = vunpack.c.l.bf16 %v324
        %v3382 = vunpack.c.l.bf16 %v325
        %v3383 = vunpack.c.l.bf16 %v326
        %v3384 = vunpack.c.l.bf16 %v327
        %v3385 = vunpack.c.l.bf16 %v328
        %v3386 = vunpack.c.l.bf16 %v329
        %v3387 = vunpack.c.l.bf16 %v330
        %v3388 = vunpack.c.l.bf16 %v331
        %v3389 = vld [vmem:[%s6] sm:$0x1]
        %v3391 = vperm.slane %v3389, 0
        %v3393 = vadd.f32 %v3357, %v3391
        %v3394 = vadd.f32 %v3358, %v3391
        %v3395 = vadd.f32 %v3359, %v3391
        %v3396 = vadd.f32 %v3360, %v3391
        %v3397 = vadd.f32 %v3361, %v3391
        %v3398 = vadd.f32 %v3362, %v3391
        %v3399 = vadd.f32 %v3363, %v3391
        %v3400 = vadd.f32 %v3364, %v3391
        %v3401 = vadd.f32 %v3365, %v3391
        %v3402 = vadd.f32 %v3366, %v3391
        %v3403 = vadd.f32 %v3367, %v3391
        %v3404 = vadd.f32 %v3368, %v3391
        %v3405 = vadd.f32 %v3369, %v3391
        %v3406 = vadd.f32 %v3370, %v3391
        %v3407 = vadd.f32 %v3371, %v3391
        %v3408 = vadd.f32 %v3372, %v3391
        %v3409 = vadd.f32 %v3373, %v3391
        %v3410 = vadd.f32 %v3374, %v3391
        %v3411 = vadd.f32 %v3375, %v3391
        %v3412 = vadd.f32 %v3376, %v3391
        %v3413 = vadd.f32 %v3377, %v3391
        %v3414 = vadd.f32 %v3378, %v3391
        %v3415 = vadd.f32 %v3379, %v3391
        %v3416 = vadd.f32 %v3380, %v3391
        %v3417 = vadd.f32 %v3381, %v3391
        %v3418 = vadd.f32 %v3382, %v3391
        %v3419 = vadd.f32 %v3383, %v3391
        %v3420 = vadd.f32 %v3384, %v3391
        %v3421 = vadd.f32 %v3385, %v3391
        %v3422 = vadd.f32 %v3386, %v3391
        %v3423 = vadd.f32 %v3387, %v3391
        %v3424 = vadd.f32 %v3388, %v3391
        %v3425 = vld [vmem:[%s3] sm:$0xf]
        %v3427 = vsel %vm2880, %v3341, 0
        %v3430 = vsel %vm2880, %v3342, 0
        %v3433 = vsel %vm2880, %v3343, 0
        %v3436 = vsel %vm2880, %v3344, 0
        %v3439 = vsel %vm2880, %v3345, 0
        %v3442 = vsel %vm2880, %v3346, 0
        %v3445 = vsel %vm2880, %v3347, 0
        %v3448 = vsel %vm2880, %v3348, 0
        %v3451 = vsel %vm2880, %v3349, 0
        %v3454 = vsel %vm2880, %v3350, 0
        %v3457 = vsel %vm2880, %v3351, 0
        %v3460 = vsel %vm2880, %v3352, 0
        %v3463 = vsel %vm2880, %v3353, 0
        %v3466 = vsel %vm2880, %v3354, 0
        %v3469 = vsel %vm2880, %v3355, 0
        %v3472 = vsel %vm2880, %v3356, 0
        %v3475 = vsel %vm3216, %v3425, 0
        %3477 = vmatpush.bf16.msra.mxu0 0
        %3478 = vmatpush.bf16.msra.mxu0 0
        %3479 = vmatpush.bf16.msra.mxu0 0
        %3480 = vmatpush.bf16.msra.mxu0 0
        %3481 = vmatpush.bf16.msra.mxu0 0
        %3482 = vmatpush.bf16.msra.mxu0 0
        %3483 = vmatpush.bf16.msra.mxu0 0
        %3484 = vmatpush.bf16.msra.mxu0 %v3475
        %3485 = vmatmul.bf16.gmra.mxu0 %v3427
        %v3486 = vpop.f32.mrf.mxu0
        %v3487 = vadd.f32 0.0, %v3486
        %v3488 = vpop.f32.mrf.mxu0
        %v3489 = vadd.f32 0.0, %v3488
        %3490 = vmatmul.bf16.gmra.mxu0 %v3430
        %v3491 = vpop.f32.mrf.mxu0
        %v3492 = vadd.f32 0.0, %v3491
        %v3493 = vpop.f32.mrf.mxu0
        %v3494 = vadd.f32 0.0, %v3493
        %3495 = vmatmul.bf16.gmra.mxu0 %v3433
        %v3496 = vpop.f32.mrf.mxu0
        %v3497 = vadd.f32 0.0, %v3496
        %v3498 = vpop.f32.mrf.mxu0
        %v3499 = vadd.f32 0.0, %v3498
        %3500 = vmatmul.bf16.gmra.mxu0 %v3436
        %v3501 = vpop.f32.mrf.mxu0
        %v3502 = vadd.f32 0.0, %v3501
        %v3503 = vpop.f32.mrf.mxu0
        %v3504 = vadd.f32 0.0, %v3503
        %3505 = vmatmul.bf16.gmra.mxu0 %v3439
        %v3506 = vpop.f32.mrf.mxu0
        %v3507 = vadd.f32 0.0, %v3506
        %v3508 = vpop.f32.mrf.mxu0
        %v3509 = vadd.f32 0.0, %v3508
        %3510 = vmatmul.bf16.gmra.mxu0 %v3442
        %v3511 = vpop.f32.mrf.mxu0
        %v3512 = vadd.f32 0.0, %v3511
        %v3513 = vpop.f32.mrf.mxu0
        %v3514 = vadd.f32 0.0, %v3513
        %3515 = vmatmul.bf16.gmra.mxu0 %v3445
        %v3516 = vpop.f32.mrf.mxu0
        %v3517 = vadd.f32 0.0, %v3516
        %v3518 = vpop.f32.mrf.mxu0
        %v3519 = vadd.f32 0.0, %v3518
        %3520 = vmatmul.bf16.gmra.mxu0 %v3448
        %v3521 = vpop.f32.mrf.mxu0
        %v3522 = vadd.f32 0.0, %v3521
        %v3523 = vpop.f32.mrf.mxu0
        %v3524 = vadd.f32 0.0, %v3523
        %3525 = vmatmul.bf16.gmra.mxu0 %v3451
        %v3526 = vpop.f32.mrf.mxu0
        %v3527 = vadd.f32 0.0, %v3526
        %v3528 = vpop.f32.mrf.mxu0
        %v3529 = vadd.f32 0.0, %v3528
        %3530 = vmatmul.bf16.gmra.mxu0 %v3454
        %v3531 = vpop.f32.mrf.mxu0
        %v3532 = vadd.f32 0.0, %v3531
        %v3533 = vpop.f32.mrf.mxu0
        %v3534 = vadd.f32 0.0, %v3533
        %3535 = vmatmul.bf16.gmra.mxu0 %v3457
        %v3536 = vpop.f32.mrf.mxu0
        %v3537 = vadd.f32 0.0, %v3536
        %v3538 = vpop.f32.mrf.mxu0
        %v3539 = vadd.f32 0.0, %v3538
        %3540 = vmatmul.bf16.gmra.mxu0 %v3460
        %v3541 = vpop.f32.mrf.mxu0
        %v3542 = vadd.f32 0.0, %v3541
        %v3543 = vpop.f32.mrf.mxu0
        %v3544 = vadd.f32 0.0, %v3543
        %3545 = vmatmul.bf16.gmra.mxu0 %v3463
        %v3546 = vpop.f32.mrf.mxu0
        %v3547 = vadd.f32 0.0, %v3546
        %v3548 = vpop.f32.mrf.mxu0
        %v3549 = vadd.f32 0.0, %v3548
        %3550 = vmatmul.bf16.gmra.mxu0 %v3466
        %v3551 = vpop.f32.mrf.mxu0
        %v3552 = vadd.f32 0.0, %v3551
        %v3553 = vpop.f32.mrf.mxu0
        %v3554 = vadd.f32 0.0, %v3553
        %3555 = vmatmul.bf16.gmra.mxu0 %v3469
        %v3556 = vpop.f32.mrf.mxu0
        %v3557 = vadd.f32 0.0, %v3556
        %v3558 = vpop.f32.mrf.mxu0
        %v3559 = vadd.f32 0.0, %v3558
        %3560 = vmatmul.bf16.gmra.mxu0 %v3472
        %v3561 = vpop.f32.mrf.mxu0
        %v3562 = vadd.f32 0.0, %v3561
        %v3563 = vpop.f32.mrf.mxu0
        %v3564 = vadd.f32 0.0, %v3563
        %3565 = vdwg.mxu0
        %v3566 = vadd.f32 %v3393, %v3487
        %v3567 = vadd.f32 %v3394, %v3489
        %v3568 = vadd.f32 %v3395, %v3492
        %v3569 = vadd.f32 %v3396, %v3494
        %v3570 = vadd.f32 %v3397, %v3497
        %v3571 = vadd.f32 %v3398, %v3499
        %v3572 = vadd.f32 %v3399, %v3502
        %v3573 = vadd.f32 %v3400, %v3504
        %v3574 = vadd.f32 %v3401, %v3507
        %v3575 = vadd.f32 %v3402, %v3509
        %v3576 = vadd.f32 %v3403, %v3512
        %v3577 = vadd.f32 %v3404, %v3514
        %v3578 = vadd.f32 %v3405, %v3517
        %v3579 = vadd.f32 %v3406, %v3519
        %v3580 = vadd.f32 %v3407, %v3522
        %v3581 = vadd.f32 %v3408, %v3524
        %v3582 = vadd.f32 %v3409, %v3527
        %v3583 = vadd.f32 %v3410, %v3529
        %v3584 = vadd.f32 %v3411, %v3532
        %v3585 = vadd.f32 %v3412, %v3534
        %v3586 = vadd.f32 %v3413, %v3537
        %v3587 = vadd.f32 %v3414, %v3539
        %v3588 = vadd.f32 %v3415, %v3542
        %v3589 = vadd.f32 %v3416, %v3544
        %v3590 = vadd.f32 %v3417, %v3547
        %v3591 = vadd.f32 %v3418, %v3549
        %v3592 = vadd.f32 %v3419, %v3552
        %v3593 = vadd.f32 %v3420, %v3554
        %v3594 = vadd.f32 %v3421, %v3557
        %v3595 = vadd.f32 %v3422, %v3559
        %v3596 = vadd.f32 %v3423, %v3562
        %v3597 = vadd.f32 %v3424, %v3564
        %v3598 = vmax.f32 %v3566, 0.0
        %v3599 = vmax.f32 %v3567, 0.0
        %v3600 = vmax.f32 %v3568, 0.0
        %v3601 = vmax.f32 %v3569, 0.0
        %v3602 = vmax.f32 %v3570, 0.0
        %v3603 = vmax.f32 %v3571, 0.0
        %v3604 = vmax.f32 %v3572, 0.0
        %v3605 = vmax.f32 %v3573, 0.0
        %v3606 = vmax.f32 %v3574, 0.0
        %v3607 = vmax.f32 %v3575, 0.0
        %v3608 = vmax.f32 %v3576, 0.0
        %v3609 = vmax.f32 %v3577, 0.0
        %v3610 = vmax.f32 %v3578, 0.0
        %v3611 = vmax.f32 %v3579, 0.0
        %v3612 = vmax.f32 %v3580, 0.0
        %v3613 = vmax.f32 %v3581, 0.0
        %v3614 = vmax.f32 %v3582, 0.0
        %v3615 = vmax.f32 %v3583, 0.0
        %v3616 = vmax.f32 %v3584, 0.0
        %v3617 = vmax.f32 %v3585, 0.0
        %v3618 = vmax.f32 %v3586, 0.0
        %v3619 = vmax.f32 %v3587, 0.0
        %v3620 = vmax.f32 %v3588, 0.0
        %v3621 = vmax.f32 %v3589, 0.0
        %v3622 = vmax.f32 %v3590, 0.0
        %v3623 = vmax.f32 %v3591, 0.0
        %v3624 = vmax.f32 %v3592, 0.0
        %v3625 = vmax.f32 %v3593, 0.0
        %v3626 = vmax.f32 %v3594, 0.0
        %v3627 = vmax.f32 %v3595, 0.0
        %v3628 = vmax.f32 %v3596, 0.0
        %v3629 = vmax.f32 %v3597, 0.0
        %v3630 = vpack.c.bf16 %v3598, %v3598
        %v3631 = vpack.c.bf16 %v3599, %v3599
        %v3632 = vpack.c.bf16 %v3600, %v3600
        %v3633 = vpack.c.bf16 %v3601, %v3601
        %v3634 = vpack.c.bf16 %v3602, %v3602
        %v3635 = vpack.c.bf16 %v3603, %v3603
        %v3636 = vpack.c.bf16 %v3604, %v3604
        %v3637 = vpack.c.bf16 %v3605, %v3605
        %v3638 = vpack.c.bf16 %v3606, %v3606
        %v3639 = vpack.c.bf16 %v3607, %v3607
        %v3640 = vpack.c.bf16 %v3608, %v3608
        %v3641 = vpack.c.bf16 %v3609, %v3609
        %v3642 = vpack.c.bf16 %v3610, %v3610
        %v3643 = vpack.c.bf16 %v3611, %v3611
        %v3644 = vpack.c.bf16 %v3612, %v3612
        %v3645 = vpack.c.bf16 %v3613, %v3613
        %v3646 = vpack.c.bf16 %v3614, %v3614
        %v3647 = vpack.c.bf16 %v3615, %v3615
        %v3648 = vpack.c.bf16 %v3616, %v3616
        %v3649 = vpack.c.bf16 %v3617, %v3617
        %v3650 = vpack.c.bf16 %v3618, %v3618
        %v3651 = vpack.c.bf16 %v3619, %v3619
        %v3652 = vpack.c.bf16 %v3620, %v3620
        %v3653 = vpack.c.bf16 %v3621, %v3621
        %v3654 = vpack.c.bf16 %v3622, %v3622
        %v3655 = vpack.c.bf16 %v3623, %v3623
        %v3656 = vpack.c.bf16 %v3624, %v3624
        %v3657 = vpack.c.bf16 %v3625, %v3625
        %v3658 = vpack.c.bf16 %v3626, %v3626
        %v3659 = vpack.c.bf16 %v3627, %v3627
        %v3660 = vpack.c.bf16 %v3628, %v3628
        %v3661 = vpack.c.bf16 %v3629, %v3629
        %vm3662 = vcmask 257024
        %3663 = vst.msk [vmem:[%s298] sm:$0xf] %vm3662, %v3630
        %3664 = vst.msk [vmem:[%s298 + $0x4] sm:$0xf] %vm3662, %v3631
        %3665 = vst.msk [vmem:[%s298 + $0x8] sm:$0xf] %vm3662, %v3632
        %3666 = vst.msk [vmem:[%s298 + $0xc] sm:$0xf] %vm3662, %v3633
        %3667 = vst.msk [vmem:[%s298 + $0x10] sm:$0xf] %vm3662, %v3634
        %3668 = vst.msk [vmem:[%s298 + $0x14] sm:$0xf] %vm3662, %v3635
        %3669 = vst.msk [vmem:[%s298 + $0x18] sm:$0xf] %vm3662, %v3636
        %3670 = vst.msk [vmem:[%s298 + $0x1c] sm:$0xf] %vm3662, %v3637
        %3671 = vst.msk [vmem:[%s298 + $0x20] sm:$0xf] %vm3662, %v3638
        %3672 = vst.msk [vmem:[%s298 + $0x24] sm:$0xf] %vm3662, %v3639
        %3673 = vst.msk [vmem:[%s298 + $0x28] sm:$0xf] %vm3662, %v3640
        %3674 = vst.msk [vmem:[%s298 + $0x2c] sm:$0xf] %vm3662, %v3641
        %3675 = vst.msk [vmem:[%s298 + $0x30] sm:$0xf] %vm3662, %v3642
        %3676 = vst.msk [vmem:[%s298 + $0x34] sm:$0xf] %vm3662, %v3643
        %3677 = vst.msk [vmem:[%s298 + $0x38] sm:$0xf] %vm3662, %v3644
        %3678 = vst.msk [vmem:[%s298 + $0x3c] sm:$0xf] %vm3662, %v3645
        %3679 = vst.msk [vmem:[%s298 + $0x40] sm:$0xf] %vm3662, %v3646
        %3680 = vst.msk [vmem:[%s298 + $0x44] sm:$0xf] %vm3662, %v3647
        %3681 = vst.msk [vmem:[%s298 + $0x48] sm:$0xf] %vm3662, %v3648
        %3682 = vst.msk [vmem:[%s298 + $0x4c] sm:$0xf] %vm3662, %v3649
        %3683 = vst.msk [vmem:[%s298 + $0x50] sm:$0xf] %vm3662, %v3650
        %3684 = vst.msk [vmem:[%s298 + $0x54] sm:$0xf] %vm3662, %v3651
        %3685 = vst.msk [vmem:[%s298 + $0x58] sm:$0xf] %vm3662, %v3652
        %3686 = vst.msk [vmem:[%s298 + $0x5c] sm:$0xf] %vm3662, %v3653
        %3687 = vst.msk [vmem:[%s298 + $0x60] sm:$0xf] %vm3662, %v3654
        %3688 = vst.msk [vmem:[%s298 + $0x64] sm:$0xf] %vm3662, %v3655
        %3689 = vst.msk [vmem:[%s298 + $0x68] sm:$0xf] %vm3662, %v3656
        %3690 = vst.msk [vmem:[%s298 + $0x6c] sm:$0xf] %vm3662, %v3657
        %3691 = vst.msk [vmem:[%s298 + $0x70] sm:$0xf] %vm3662, %v3658
        %3692 = vst.msk [vmem:[%s298 + $0x74] sm:$0xf] %vm3662, %v3659
        %3693 = vst.msk [vmem:[%s298 + $0x78] sm:$0xf] %vm3662, %v3660
        %3694 = vst.msk [vmem:[%s298 + $0x7c] sm:$0xf] %vm3662, %v3661
        %s3695 = sand.u32 %s184, 1
        %s3696 = scalar_lea.sflag [#allocation5], %s3695
        %s3697 = sand.u32 %s184, 1
        %s3698 = smul.addr %s3697, 128
        %s3699 = scalar_lea.vmem [#allocation6], %s3698
        // Predicated region
        $region53: #{tpu_custom_call.1} parent=47 // pred_check
          %p3700 = pneg %p194
        $region54: #{tpu_custom_call.1} parent=47 // pred_check_branch
          %3702 = sbr.rel (%p3700) target = $region56
        $region55: #{tpu_custom_call.1} parent=47 // pred_region
          %3704 = vsyncadd %s3696, 0
          %s3705 = smul.addr %s24, 32
          %s3706 = smul.addr %s3705, 4
          %s3707 = scalar_lea.hbm %s7, %s3706
          %s3708 = sshll.u32 %s3699, 4
          %s3709 = int_to_ptr.vmem [resolvable:$true] %s3708
          %s3710 = sshll.u32 %s3707, 4
          %s3711 = int_to_ptr.hbm [resolvable:$true] %s3710
          %3716 = dma.vmem_to_hbm [thread:$0]  %s3709, 2048, %s3711, %s3696, 64, 64, 4
        $region56: #{tpu_custom_call.1} parent=47 // pred_fallthru
          _
      $region48: #{tpu_custom_call.1} parent=5 // pred_fallthru
        _
      %p3717 = scmp.le.s32.totalorder 2, %s19
      // Predicated region
      $region57: #{tpu_custom_call.1} parent=5 // pred_check
        %p3718 = pneg %p3717
      $region58: #{tpu_custom_call.1} parent=5 // pred_check_branch
        %3720 = sbr.rel (%p3718) target = $region60
      $region59: #{tpu_custom_call.1} parent=5 // pred_region
        %s3721 = ssub.s32 %s19, 2
        // Predicated region
        $region61: #{tpu_custom_call.1} parent=59 // pred_check
          %p3722 = pneg %p200
        $region62: #{tpu_custom_call.1} parent=59 // pred_check_branch
          %3724 = sbr.rel (%p3722) target = $region64
        $region63: #{tpu_custom_call.1} parent=59 // pred_region
          %s3725 = sand.u32 %s185, 1
          %s3726 = scalar_lea.sflag [#allocation5], %s3725
          %s3727 = sand.u32 %s185, 1
          %s3728 = smul.addr %s3727, 128
          %s3729 = scalar_lea.vmem [#allocation6], %s3728
          %3731 = dma.done %s3726, 2048
        $region64: #{tpu_custom_call.1} parent=59 // pred_fallthru
          _
      $region60: #{tpu_custom_call.1} parent=5 // pred_fallthru
        _
    $region6: #{tpu_custom_call.1} parent=1 // loop_footer
      %s23 = sadd.s32 1, %s19
    $region7: #{tpu_custom_call.1} parent=1 // loop_footer_branch
      %18 = sbr.rel target = $region3
    $region8: #{tpu_custom_call.1} parent=1 // loop_exit
      _
    %3732 = vsyncpa [#allocation4], 1
    %s3733 = scalar_lea.sflag [#allocation4], 1
    %3734 = vsyncpa %s3733, 1
    %3735 = vsyncpa [#allocation5], 1
    %s3736 = scalar_lea.sflag [#allocation5], 1
    %3737 = vsyncpa %s3736, 1

</llo_original>
